<compile_context>
chip_gen: v5e
topology: v5e:2x2
jax: 0.10.0
libtpu: 0.0.40
codegen_flags: <defaults>
</compile_context>

<pallas_src>
import functools

import jax
import jax.numpy as jnp
from jax import lax
from jax.experimental import pallas as pl
from jax.experimental.pallas import tpu as pltpu


HP = dict(timekernel=25, poolkernel=85, poolstride=15, channels=20, D=2)


# --------------------------------------------------------------------------------------
# Kernels
# --------------------------------------------------------------------------------------
def _tconv_kernel(w_ref, b_ref, x_ref, o_ref):
    """1-D temporal conv ('same' padding pre-applied) for one (batch, out-channel) pair.

    w_ref : (C_out, K)       SMEM  per-output-channel taps
    b_ref : (C_out,)         SMEM  per-output-channel bias
    x_ref : (nChan, T+K-1)   VMEM  zero-padded input row block
    o_ref : (nChan, T)       VMEM
    """
    c = pl.program_id(1)
    K = w_ref.shape[1]
    T = o_ref.shape[-1]
    acc = jnp.zeros(o_ref.shape, jnp.float32)
    for k in range(K):  # K = 25, fully unrolled scalar * vector MACs on the VPU
        acc = acc + w_ref[c, k] * x_ref[:, k:k + T].astype(jnp.float32)
    o_ref[...] = (acc + b_ref[c]).astype(o_ref.dtype)


def _sp_kernel(w_ref, shift_ref, z_ref, p_ref, o_ref, *, eps):
    """Fused SP block for one batch element.

    w_ref     : (C_sp, Ct*nChan)  grouped (nChan,1) conv as a block-sparse matmul,
                                  BatchNorm scale folded into the weights.
    shift_ref : (C_sp, 1)         conv bias + BatchNorm shift, folded.
    z_ref     : (Ct*nChan, T)     DMS_Conv output for this batch element.
    p_ref     : (T, T_out)        average-pool matrix (window 85, stride 15, value 1/85).
    o_ref     : (C_sp, T_out)     log(max(avgpool(square(bn(conv))), eps))   (ActLog)
    """
    y = jnp.dot(w_ref[...], z_ref[...], preferred_element_type=jnp.float32)
    y = y + shift_ref[...]
    pooled = jnp.dot(y * y, p_ref[...], preferred_element_type=jnp.float32)
    o_ref[...] = jnp.log(jnp.maximum(pooled, eps)).astype(o_ref.dtype)


def _lag_kernel(x_ref, o_ref):
    """lag_layer: x * sigmoid(mean over (h,w)) per channel, for one batch element."""
    x = x_ref[...].astype(jnp.float32)
    g = jnp.mean(x, axis=-1, keepdims=True)
    g = 1.0 / (1.0 + jnp.exp(-g))
    o_ref[...] = (x * g).astype(o_ref.dtype)


def _fc_kernel(x_ref, wt_ref, b_ref, o_ref):
    """LinearWithConstraint (weight pre-renormed, passed transposed) + LogSoftmax(dim=1)."""
    logits = jnp.dot(x_ref[...].astype(jnp.float32), wt_ref[...].astype(jnp.float32),
                     preferred_element_type=jnp.float32) + b_ref[...]
    m = jnp.max(logits, axis=-1, keepdims=True)
    z = logits - m
    lse = jnp.log(jnp.sum(jnp.exp(z), axis=-1, keepdims=True))
    o_ref[...] = (z - lse).astype(o_ref.dtype)


# --------------------------------------------------------------------------------------
# Wrappers
# --------------------------------------------------------------------------------------
def _renorm(w, max_norm):
    """torch.renorm(w, p=2, dim=0, maxnorm=max_norm)."""
    flat = w.reshape(w.shape[0], -1)
    norms = jnp.sqrt(jnp.sum(flat * flat, axis=1))
    scale = jnp.where(norms > max_norm, max_norm / (norms + 1e-7), 1.0)
    return w * scale.reshape((-1,) + (1,) * (w.ndim - 1))


def _temporal_conv_same(x, w, b, *, depthwise):
    """'same' temporal conv with kernel (1, K).

    x: (N, nChan, T) for the 1->C conv, (N, C, nChan, T) for the depthwise conv.
    w: (C, K), b: (C,)
    """
    C, K = w.shape
    pad = (K - 1) // 2
    if depthwise:
        N, _, nchan, T = x.shape
        xp = jnp.pad(x, ((0, 0), (0, 0), (0, 0), (pad, pad)))
        x_spec = pl.BlockSpec((None, None, nchan, T + 2 * pad), lambda n, c: (n, c, 0, 0))
    else:
        N, nchan, T = x.shape
        xp = jnp.pad(x, ((0, 0), (0, 0), (pad, pad)))
        x_spec = pl.BlockSpec((None, nchan, T + 2 * pad), lambda n, c: (n, 0, 0))
    return pl.pallas_call(
        _tconv_kernel,
        grid=(N, C),
        in_specs=[
            pl.BlockSpec(memory_space=pltpu.MemorySpace.SMEM),   # per-channel taps
            pl.BlockSpec(memory_space=pltpu.MemorySpace.SMEM),   # per-channel bias
            x_spec,
        ],
        out_specs=pl.BlockSpec((None, None, nchan, T), lambda n, c: (n, c, 0, 0)),
        out_shape=jax.ShapeDtypeStruct((N, C, nchan, T), x.dtype),
        compiler_params=pltpu.CompilerParams(
            dimension_semantics=("parallel", "parallel")),
    )(w, b, xp)


def dmsanet_forward(x, params, *, eps=1e-6):
    """x: (N, 1, nChan, nTime) float32.  Returns (log_softmax_output, flattened_features)."""
    hp = HP
    N, _, nchan, T = x.shape
    ch = hp["channels"]
    ct = ch * 3                       # totalChannels
    cd = ct * hp["D"]                 # totalChannels * D
    pk, ps = hp["poolkernel"], hp["poolstride"]
    t_out = (T - pk) // ps + 1

    # ---- forward-time weight renorm (Conv2dWithConstraint / LinearWithConstraint) --------
    rn2 = lambda w: _renorm(w, 2.0)
    w1, w2a, w2b = rn2(params["w1"]), rn2(params["w2a"]), rn2(params["w2b"])
    w3a, w3b, w3c = rn2(params["w3a"]), rn2(params["w3b"]), rn2(params["w3c"])
    wsp = rn2(params["wsp"])
    wfc = _renorm(params["wfc"], 0.5)

    x0 = x[:, 0]                                        # (N, nChan, T)
    sq = lambda w: w[:, 0, 0, :]                        # (C,1,1,K) -> (C,K)

    # ---- DMS_Conv: three temporal branches -------------------------------------------------
    x1 = _temporal_conv_same(x0, sq(w1), params["b1"], depthwise=False)
    x2 = _temporal_conv_same(x0, sq(w2a), params["b2a"], depthwise=False)
    x2 = _temporal_conv_same(x2, sq(w2b), params["b2b"], depthwise=True)
    x3 = _temporal_conv_same(x0, sq(w3a), params["b3a"], depthwise=False)
    x3 = _temporal_conv_same(x3, sq(w3b), params["b3b"], depthwise=True)
    x3 = _temporal_conv_same(x3, sq(w3c), params["b3c"], depthwise=True)
    z = jnp.concatenate([x1, x2, x3], axis=1)           # (N, 60, nChan, T)

    # ---- SP: grouped (nChan,1) conv + BN(eval) + square + avgpool + ActLog (fused) --------
    bn_scale = params["bn_gamma"] / jnp.sqrt(params["bn_var"] + 1e-5)
    w_sp = wsp[:, 0, :, 0] * bn_scale[:, None]                                   # (120, nChan)
    shift = ((params["bsp"] - params["bn_mean"]) * bn_scale
             + params["bn_beta"]).reshape(cd, 1)
    # grouped conv as block-sparse matmul: output channel co reads input channel co // D
    rows = jnp.arange(cd)
    w_exp = jnp.zeros((cd, ct, nchan), x.dtype).at[rows, rows // hp["D"], :].set(w_sp)
    w_exp = w_exp.reshape(cd, ct * nchan)
    z_flat = z.reshape(N, ct * nchan, T)
    # average pool as a (T, T_out) matmul
    t_i = jnp.arange(T)[:, None]
    j_i = jnp.arange(t_out)[None, :]
    pool_mat = ((t_i >= j_i * ps) & (t_i < j_i * ps + pk)).astype(x.dtype) / pk

    sp_out = pl.pallas_call(
        functools.partial(_sp_kernel, eps=eps),
        grid=(N,),
        in_specs=[
            pl.BlockSpec((cd, ct * nchan), lambda n: (0, 0)),
            pl.BlockSpec((cd, 1), lambda n: (0, 0)),
            pl.BlockSpec((None, ct * nchan, T), lambda n: (n, 0, 0)),
            pl.BlockSpec((T, t_out), lambda n: (0, 0)),
        ],
        out_specs=pl.BlockSpec((None, cd, t_out), lambda n: (n, 0, 0)),
        out_shape=jax.ShapeDtypeStruct((N, cd, t_out), x.dtype),
        compiler_params=pltpu.CompilerParams(dimension_semantics=("parallel",)),
    )(w_exp, shift, z_flat, pool_mat)

    # ---- LAG: sigmoid gate -----------------------------------------------------------------
    # TODO(synk): nn.Dropout(p=0.25) is the identity in eval mode; training-mode RNG dropout not implemented.
    lag_out = pl.pallas_call(
        _lag_kernel,
        grid=(N,),
        in_specs=[pl.BlockSpec((None, cd, t_out), lambda n: (n, 0, 0))],
        out_specs=pl.BlockSpec((None, cd, t_out), lambda n: (n, 0, 0)),
        out_shape=jax.ShapeDtypeStruct((N, cd, t_out), x.dtype),
        compiler_params=pltpu.CompilerParams(dimension_semantics=("parallel",)),
    )(sp_out)

    y_flat = lag_out.reshape(N, cd * t_out)              # == torch.flatten(x, start_dim=1)

    # ---- FC: LinearWithConstraint(max_norm=0.5) + LogSoftmax -------------------------------
    n_class = wfc.shape[0]
    feat = y_flat.shape[1]
    log_probs = pl.pallas_call(
        _fc_kernel,
        in_specs=[
            pl.BlockSpec((N, feat), lambda: (0, 0)),
            pl.BlockSpec((feat, n_class), lambda: (0, 0)),
            pl.BlockSpec((1, n_class), lambda: (0, 0)),
        ],
        out_specs=pl.BlockSpec((N, n_class), lambda: (0, 0)),
        out_shape=jax.ShapeDtypeStruct((N, n_class), x.dtype),
    )(y_flat, wfc.T, params["bfc"].reshape(1, n_class))

    return log_probs, y_flat


# --------------------------------------------------------------------------------------
# Pure-JAX reference (mirrors the PyTorch forward in eval mode)
# --------------------------------------------------------------------------------------
def _ref_forward(x, params, *, eps=1e-6):
    hp = HP
    N, _, nchan, T = x.shape
    ch = hp["channels"]
    ct = ch * 3
    pk, ps = hp["poolkernel"], hp["poolstride"]
    t_out = (T - pk) // ps + 1
    hi = lax.Precision.HIGHEST
    dn = ("NCHW", "OIHW", "NCHW")

    def conv(xx, w, b, groups, padding):
        y = lax.conv_general_dilated(xx, w, window_strides=(1, 1), padding=padding,
                                     dimension_numbers=dn, feature_group_count=groups,
                                     precision=hi)
        return y + b.reshape(1, -1, 1, 1)

    rn2 = lambda w: _renorm(w, 2.0)
    pad = (hp["timekernel"] - 1) // 2
    tpad = [(0, 0), (pad, pad)]
    x1 = conv(x, rn2(params["w1"]), params["b1"], 1, tpad)
    x2 = conv(x, rn2(params["w2a"]), params["b2a"], 1, tpad)
    x2 = conv(x2, rn2(params["w2b"]), params["b2b"], ch, tpad)
    x3 = conv(x, rn2(params["w3a"]), params["b3a"], 1, tpad)
    x3 = conv(x3, rn2(params["w3b"]), params["b3b"], ch, tpad)
    x3 = conv(x3, rn2(params["w3c"]), params["b3c"], ch, tpad)
    z = jnp.concatenate([x1, x2, x3], axis=1)

    y = conv(z, rn2(params["wsp"]), params["bsp"], ct, [(0, 0), (0, 0)])
    scale = (params["bn_gamma"] / jnp.sqrt(params["bn_var"] + 1e-5)).reshape(1, -1, 1, 1)
    y = (y - params["bn_mean"].reshape(1, -1, 1, 1)) * scale + params["bn_beta"].reshape(1, -1, 1, 1)
    y = y * y                                                          # ActSquare
    pooled = jnp.stack([y[..., j * ps:j * ps + pk].mean(axis=-1) for j in range(t_out)],
                       axis=-1)                                        # AvgPool2d
    y = jnp.log(jnp.maximum(pooled, eps))                              # ActLog
    gate = jax.nn.sigmoid(jnp.mean(y, axis=(2, 3), keepdims=True))     # lag_layer
    y = y * gate
    y_flat = y.reshape(N, -1)
    wfc = _renorm(params["wfc"], 0.5)
    logits = jnp.matmul(y_flat, wfc.T, precision=hi) + params["bfc"]
    return jax.nn.log_softmax(logits, axis=1), y_flat


# --------------------------------------------------------------------------------------
# Demo / self-check
# --------------------------------------------------------------------------------------
if __name__ == "__main__":
    key = jax.random.PRNGKey(0)
    # Small stand-in for the real (nChan=22, nTime=1000) EEG input.
    N, nchan, T, n_class = 2, 8, 128, 4
    ch = HP["channels"]
    ct = 3 * ch
    cd = ct * HP["D"]
    K = HP["timekernel"]
    t_out = (T - HP["poolkernel"]) // HP["poolstride"] + 1
    feat = cd * t_out

    keys = jax.random.split(key, 24)
    nrm = lambda k, s, std: std * jax.random.normal(k, s, dtype=jnp.float32)
    params = {
        "w1":  nrm(keys[0], (ch, 1, 1, K), 0.1),  "b1":  nrm(keys[1], (ch,), 0.05),
        "w2a": nrm(keys[2], (ch, 1, 1, K), 0.1),  "b2a": nrm(keys[3], (ch,), 0.05),
        "w2b": nrm(keys[4], (ch, 1, 1, K), 0.1),  "b2b": nrm(keys[5], (ch,), 0.05),
        "w3a": nrm(keys[6], (ch, 1, 1, K), 0.1),  "b3a": nrm(keys[7], (ch,), 0.05),
        "w3b": nrm(keys[8], (ch, 1, 1, K), 0.1),  "b3b": nrm(keys[9], (ch,), 0.05),
        "w3c": nrm(keys[10], (ch, 1, 1, K), 0.1), "b3c": nrm(keys[11], (ch,), 0.05),
        "wsp": nrm(keys[12], (cd, 1, nchan, 1), 0.1), "bsp": nrm(keys[13], (cd,), 0.05),
        "bn_gamma": 1.0 + nrm(keys[14], (cd,), 0.1),
        "bn_beta":  nrm(keys[15], (cd,), 0.1),
        "bn_mean":  nrm(keys[16], (cd,), 0.1),
        "bn_var":   0.5 + jax.random.uniform(keys[17], (cd,), dtype=jnp.float32),
        "wfc": nrm(keys[18], (n_class, feat), 0.2), "bfc": nrm(keys[19], (n_class,), 0.1),
    }
    x = jax.random.normal(keys[20], (N, 1, nchan, T), dtype=jnp.float32)

    fwd = jax.jit(dmsanet_forward)
    log_probs, feats = fwd(x, params)
    log_probs, feats = jax.block_until_ready((log_probs, feats))

    ref_lp, ref_feats = _ref_forward(x, params)
    assert log_probs.shape == (N, n_class) and feats.shape == (N, feat)
    assert jnp.allclose(feats, ref_feats, rtol=2e-3, atol=2e-3), \
        float(jnp.max(jnp.abs(feats - ref_feats)))
    assert jnp.allclose(log_probs, ref_lp, rtol=2e-3, atol=2e-3), \
        float(jnp.max(jnp.abs(log_probs - ref_lp)))

    print("KERNEL_OK")
</pallas_src>

<mosaic_0001>
module attributes {stable_mosaic.version = 11 : i64} {
  func.func @_tconv_kernel(%arg0: i32, %arg1: i32, %arg2: memref<20x25xf32, #tpu.memory_space<smem>>, %arg3: memref<20xf32, #tpu.memory_space<smem>>, %arg4: memref<1x8x152xf32, #tpu.memory_space<vmem>>, %arg5: memref<1x1x8x128xf32, #tpu.memory_space<vmem>>) attributes {dimension_semantics = [#tpu.dimension_semantics<parallel>, #tpu.dimension_semantics<parallel>], iteration_bounds = array<i64: 2, 20>, scalar_prefetch = 0 : i64, scratch_operands = 0 : i64, tpu.core_type = #tpu.core_type<tc>, window_params = [{transform_indices = @transform_0, window_bounds = array<i64: 20, 25>}, {transform_indices = @transform_1, window_bounds = array<i64: 20>}, {transform_indices = @transform_2, window_bounds = array<i64: 1, 8, 152>}, {transform_indices = @transform_3, window_bounds = array<i64: 1, 1, 8, 128>}]} {
    %cst = arith.constant 0.000000e+00 : f32
    %0 = vector.broadcast %cst : f32 to vector<8x128xf32>
    %1 = arith.index_cast %arg1 : i32 to index
    %c0 = arith.constant 0 : index
    %2 = memref.load %arg2[%1, %c0] : memref<20x25xf32, #tpu.memory_space<smem>>
    %c0_0 = arith.constant 0 : index
    %c0_1 = arith.constant 0 : index
    %c0_2 = arith.constant 0 : index
    %3 = vector.load %arg4[%c0_0, %c0_1, %c0_2] : memref<1x8x152xf32, #tpu.memory_space<vmem>>, vector<1x8x128xf32>
    %4 = vector.shape_cast %3 : vector<1x8x128xf32> to vector<8x128xf32>
    %5 = vector.broadcast %2 : f32 to vector<8x128xf32>
    %6 = arith.mulf %5, %4 : vector<8x128xf32>
    %7 = arith.addf %0, %6 : vector<8x128xf32>
    %8 = arith.index_cast %arg1 : i32 to index
    %c1 = arith.constant 1 : index
    %9 = memref.load %arg2[%8, %c1] : memref<20x25xf32, #tpu.memory_space<smem>>
    %c0_3 = arith.constant 0 : index
    %c0_4 = arith.constant 0 : index
    %c1_5 = arith.constant 1 : index
    %10 = vector.load %arg4[%c0_3, %c0_4, %c1_5] : memref<1x8x152xf32, #tpu.memory_space<vmem>>, vector<1x8x128xf32>
    %11 = vector.shape_cast %10 : vector<1x8x128xf32> to vector<8x128xf32>
    %12 = vector.broadcast %9 : f32 to vector<8x128xf32>
    %13 = arith.mulf %12, %11 : vector<8x128xf32>
    %14 = arith.addf %7, %13 : vector<8x128xf32>
    %15 = arith.index_cast %arg1 : i32 to index
    %c2 = arith.constant 2 : index
    %16 = memref.load %arg2[%15, %c2] : memref<20x25xf32, #tpu.memory_space<smem>>
    %c0_6 = arith.constant 0 : index
    %c0_7 = arith.constant 0 : index
    %c2_8 = arith.constant 2 : index
    %17 = vector.load %arg4[%c0_6, %c0_7, %c2_8] : memref<1x8x152xf32, #tpu.memory_space<vmem>>, vector<1x8x128xf32>
    %18 = vector.shape_cast %17 : vector<1x8x128xf32> to vector<8x128xf32>
    %19 = vector.broadcast %16 : f32 to vector<8x128xf32>
    %20 = arith.mulf %19, %18 : vector<8x128xf32>
    %21 = arith.addf %14, %20 : vector<8x128xf32>
    %22 = arith.index_cast %arg1 : i32 to index
    %c3 = arith.constant 3 : index
    %23 = memref.load %arg2[%22, %c3] : memref<20x25xf32, #tpu.memory_space<smem>>
    %c0_9 = arith.constant 0 : index
    %c0_10 = arith.constant 0 : index
    %c3_11 = arith.constant 3 : index
    %24 = vector.load %arg4[%c0_9, %c0_10, %c3_11] : memref<1x8x152xf32, #tpu.memory_space<vmem>>, vector<1x8x128xf32>
    %25 = vector.shape_cast %24 : vector<1x8x128xf32> to vector<8x128xf32>
    %26 = vector.broadcast %23 : f32 to vector<8x128xf32>
    %27 = arith.mulf %26, %25 : vector<8x128xf32>
    %28 = arith.addf %21, %27 : vector<8x128xf32>
    %29 = arith.index_cast %arg1 : i32 to index
    %c4 = arith.constant 4 : index
    %30 = memref.load %arg2[%29, %c4] : memref<20x25xf32, #tpu.memory_space<smem>>
    %c0_12 = arith.constant 0 : index
    %c0_13 = arith.constant 0 : index
    %c4_14 = arith.constant 4 : index
    %31 = vector.load %arg4[%c0_12, %c0_13, %c4_14] : memref<1x8x152xf32, #tpu.memory_space<vmem>>, vector<1x8x128xf32>
    %32 = vector.shape_cast %31 : vector<1x8x128xf32> to vector<8x128xf32>
    %33 = vector.broadcast %30 : f32 to vector<8x128xf32>
    %34 = arith.mulf %33, %32 : vector<8x128xf32>
    %35 = arith.addf %28, %34 : vector<8x128xf32>
    %36 = arith.index_cast %arg1 : i32 to index
    %c5 = arith.constant 5 : index
    %37 = memref.load %arg2[%36, %c5] : memref<20x25xf32, #tpu.memory_space<smem>>
    %c0_15 = arith.constant 0 : index
    %c0_16 = arith.constant 0 : index
    %c5_17 = arith.constant 5 : index
    %38 = vector.load %arg4[%c0_15, %c0_16, %c5_17] : memref<1x8x152xf32, #tpu.memory_space<vmem>>, vector<1x8x128xf32>
    %39 = vector.shape_cast %38 : vector<1x8x128xf32> to vector<8x128xf32>
    %40 = vector.broadcast %37 : f32 to vector<8x128xf32>
    %41 = arith.mulf %40, %39 : vector<8x128xf32>
    %42 = arith.addf %35, %41 : vector<8x128xf32>
    %43 = arith.index_cast %arg1 : i32 to index
    %c6 = arith.constant 6 : index
    %44 = memref.load %arg2[%43, %c6] : memref<20x25xf32, #tpu.memory_space<smem>>
    %c0_18 = arith.constant 0 : index
    %c0_19 = arith.constant 0 : index
    %c6_20 = arith.constant 6 : index
    %45 = vector.load %arg4[%c0_18, %c0_19, %c6_20] : memref<1x8x152xf32, #tpu.memory_space<vmem>>, vector<1x8x128xf32>
    %46 = vector.shape_cast %45 : vector<1x8x128xf32> to vector<8x128xf32>
    %47 = vector.broadcast %44 : f32 to vector<8x128xf32>
    %48 = arith.mulf %47, %46 : vector<8x128xf32>
    %49 = arith.addf %42, %48 : vector<8x128xf32>
    %50 = arith.index_cast %arg1 : i32 to index
    %c7 = arith.constant 7 : index
    %51 = memref.load %arg2[%50, %c7] : memref<20x25xf32, #tpu.memory_space<smem>>
    %c0_21 = arith.constant 0 : index
    %c0_22 = arith.constant 0 : index
    %c7_23 = arith.constant 7 : index
    %52 = vector.load %arg4[%c0_21, %c0_22, %c7_23] : memref<1x8x152xf32, #tpu.memory_space<vmem>>, vector<1x8x128xf32>
    %53 = vector.shape_cast %52 : vector<1x8x128xf32> to vector<8x128xf32>
    %54 = vector.broadcast %51 : f32 to vector<8x128xf32>
    %55 = arith.mulf %54, %53 : vector<8x128xf32>
    %56 = arith.addf %49, %55 : vector<8x128xf32>
    %57 = arith.index_cast %arg1 : i32 to index
    %c8 = arith.constant 8 : index
    %58 = memref.load %arg2[%57, %c8] : memref<20x25xf32, #tpu.memory_space<smem>>
    %c0_24 = arith.constant 0 : index
    %c0_25 = arith.constant 0 : index
    %c8_26 = arith.constant 8 : index
    %59 = vector.load %arg4[%c0_24, %c0_25, %c8_26] : memref<1x8x152xf32, #tpu.memory_space<vmem>>, vector<1x8x128xf32>
    %60 = vector.shape_cast %59 : vector<1x8x128xf32> to vector<8x128xf32>
    %61 = vector.broadcast %58 : f32 to vector<8x128xf32>
    %62 = arith.mulf %61, %60 : vector<8x128xf32>
    %63 = arith.addf %56, %62 : vector<8x128xf32>
    %64 = arith.index_cast %arg1 : i32 to index
    %c9 = arith.constant 9 : index
    %65 = memref.load %arg2[%64, %c9] : memref<20x25xf32, #tpu.memory_space<smem>>
    %c0_27 = arith.constant 0 : index
    %c0_28 = arith.constant 0 : index
    %c9_29 = arith.constant 9 : index
    %66 = vector.load %arg4[%c0_27, %c0_28, %c9_29] : memref<1x8x152xf32, #tpu.memory_space<vmem>>, vector<1x8x128xf32>
    %67 = vector.shape_cast %66 : vector<1x8x128xf32> to vector<8x128xf32>
    %68 = vector.broadcast %65 : f32 to vector<8x128xf32>
    %69 = arith.mulf %68, %67 : vector<8x128xf32>
    %70 = arith.addf %63, %69 : vector<8x128xf32>
    %71 = arith.index_cast %arg1 : i32 to index
    %c10 = arith.constant 10 : index
    %72 = memref.load %arg2[%71, %c10] : memref<20x25xf32, #tpu.memory_space<smem>>
    %c0_30 = arith.constant 0 : index
    %c0_31 = arith.constant 0 : index
    %c10_32 = arith.constant 10 : index
    %73 = vector.load %arg4[%c0_30, %c0_31, %c10_32] : memref<1x8x152xf32, #tpu.memory_space<vmem>>, vector<1x8x128xf32>
    %74 = vector.shape_cast %73 : vector<1x8x128xf32> to vector<8x128xf32>
    %75 = vector.broadcast %72 : f32 to vector<8x128xf32>
    %76 = arith.mulf %75, %74 : vector<8x128xf32>
    %77 = arith.addf %70, %76 : vector<8x128xf32>
    %78 = arith.index_cast %arg1 : i32 to index
    %c11 = arith.constant 11 : index
    %79 = memref.load %arg2[%78, %c11] : memref<20x25xf32, #tpu.memory_space<smem>>
    %c0_33 = arith.constant 0 : index
    %c0_34 = arith.constant 0 : index
    %c11_35 = arith.constant 11 : index
    %80 = vector.load %arg4[%c0_33, %c0_34, %c11_35] : memref<1x8x152xf32, #tpu.memory_space<vmem>>, vector<1x8x128xf32>
    %81 = vector.shape_cast %80 : vector<1x8x128xf32> to vector<8x128xf32>
    %82 = vector.broadcast %79 : f32 to vector<8x128xf32>
    %83 = arith.mulf %82, %81 : vector<8x128xf32>
    %84 = arith.addf %77, %83 : vector<8x128xf32>
    %85 = arith.index_cast %arg1 : i32 to index
    %c12 = arith.constant 12 : index
    %86 = memref.load %arg2[%85, %c12] : memref<20x25xf32, #tpu.memory_space<smem>>
    %c0_36 = arith.constant 0 : index
    %c0_37 = arith.constant 0 : index
    %c12_38 = arith.constant 12 : index
    %87 = vector.load %arg4[%c0_36, %c0_37, %c12_38] : memref<1x8x152xf32, #tpu.memory_space<vmem>>, vector<1x8x128xf32>
    %88 = vector.shape_cast %87 : vector<1x8x128xf32> to vector<8x128xf32>
    %89 = vector.broadcast %86 : f32 to vector<8x128xf32>
    %90 = arith.mulf %89, %88 : vector<8x128xf32>
    %91 = arith.addf %84, %90 : vector<8x128xf32>
    %92 = arith.index_cast %arg1 : i32 to index
    %c13 = arith.constant 13 : index
    %93 = memref.load %arg2[%92, %c13] : memref<20x25xf32, #tpu.memory_space<smem>>
    %c0_39 = arith.constant 0 : index
    %c0_40 = arith.constant 0 : index
    %c13_41 = arith.constant 13 : index
    %94 = vector.load %arg4[%c0_39, %c0_40, %c13_41] : memref<1x8x152xf32, #tpu.memory_space<vmem>>, vector<1x8x128xf32>
    %95 = vector.shape_cast %94 : vector<1x8x128xf32> to vector<8x128xf32>
    %96 = vector.broadcast %93 : f32 to vector<8x128xf32>
    %97 = arith.mulf %96, %95 : vector<8x128xf32>
    %98 = arith.addf %91, %97 : vector<8x128xf32>
    %99 = arith.index_cast %arg1 : i32 to index
    %c14 = arith.constant 14 : index
    %100 = memref.load %arg2[%99, %c14] : memref<20x25xf32, #tpu.memory_space<smem>>
    %c0_42 = arith.constant 0 : index
    %c0_43 = arith.constant 0 : index
    %c14_44 = arith.constant 14 : index
    %101 = vector.load %arg4[%c0_42, %c0_43, %c14_44] : memref<1x8x152xf32, #tpu.memory_space<vmem>>, vector<1x8x128xf32>
    %102 = vector.shape_cast %101 : vector<1x8x128xf32> to vector<8x128xf32>
    %103 = vector.broadcast %100 : f32 to vector<8x128xf32>
    %104 = arith.mulf %103, %102 : vector<8x128xf32>
    %105 = arith.addf %98, %104 : vector<8x128xf32>
    %106 = arith.index_cast %arg1 : i32 to index
    %c15 = arith.constant 15 : index
    %107 = memref.load %arg2[%106, %c15] : memref<20x25xf32, #tpu.memory_space<smem>>
    %c0_45 = arith.constant 0 : index
    %c0_46 = arith.constant 0 : index
    %c15_47 = arith.constant 15 : index
    %108 = vector.load %arg4[%c0_45, %c0_46, %c15_47] : memref<1x8x152xf32, #tpu.memory_space<vmem>>, vector<1x8x128xf32>
    %109 = vector.shape_cast %108 : vector<1x8x128xf32> to vector<8x128xf32>
    %110 = vector.broadcast %107 : f32 to vector<8x128xf32>
    %111 = arith.mulf %110, %109 : vector<8x128xf32>
    %112 = arith.addf %105, %111 : vector<8x128xf32>
    %113 = arith.index_cast %arg1 : i32 to index
    %c16 = arith.constant 16 : index
    %114 = memref.load %arg2[%113, %c16] : memref<20x25xf32, #tpu.memory_space<smem>>
    %c0_48 = arith.constant 0 : index
    %c0_49 = arith.constant 0 : index
    %c16_50 = arith.constant 16 : index
    %115 = vector.load %arg4[%c0_48, %c0_49, %c16_50] : memref<1x8x152xf32, #tpu.memory_space<vmem>>, vector<1x8x128xf32>
    %116 = vector.shape_cast %115 : vector<1x8x128xf32> to vector<8x128xf32>
    %117 = vector.broadcast %114 : f32 to vector<8x128xf32>
    %118 = arith.mulf %117, %116 : vector<8x128xf32>
    %119 = arith.addf %112, %118 : vector<8x128xf32>
    %120 = arith.index_cast %arg1 : i32 to index
    %c17 = arith.constant 17 : index
    %121 = memref.load %arg2[%120, %c17] : memref<20x25xf32, #tpu.memory_space<smem>>
    %c0_51 = arith.constant 0 : index
    %c0_52 = arith.constant 0 : index
    %c17_53 = arith.constant 17 : index
    %122 = vector.load %arg4[%c0_51, %c0_52, %c17_53] : memref<1x8x152xf32, #tpu.memory_space<vmem>>, vector<1x8x128xf32>
    %123 = vector.shape_cast %122 : vector<1x8x128xf32> to vector<8x128xf32>
    %124 = vector.broadcast %121 : f32 to vector<8x128xf32>
    %125 = arith.mulf %124, %123 : vector<8x128xf32>
    %126 = arith.addf %119, %125 : vector<8x128xf32>
    %127 = arith.index_cast %arg1 : i32 to index
    %c18 = arith.constant 18 : index
    %128 = memref.load %arg2[%127, %c18] : memref<20x25xf32, #tpu.memory_space<smem>>
    %c0_54 = arith.constant 0 : index
    %c0_55 = arith.constant 0 : index
    %c18_56 = arith.constant 18 : index
    %129 = vector.load %arg4[%c0_54, %c0_55, %c18_56] : memref<1x8x152xf32, #tpu.memory_space<vmem>>, vector<1x8x128xf32>
    %130 = vector.shape_cast %129 : vector<1x8x128xf32> to vector<8x128xf32>
    %131 = vector.broadcast %128 : f32 to vector<8x128xf32>
    %132 = arith.mulf %131, %130 : vector<8x128xf32>
    %133 = arith.addf %126, %132 : vector<8x128xf32>
    %134 = arith.index_cast %arg1 : i32 to index
    %c19 = arith.constant 19 : index
    %135 = memref.load %arg2[%134, %c19] : memref<20x25xf32, #tpu.memory_space<smem>>
    %c0_57 = arith.constant 0 : index
    %c0_58 = arith.constant 0 : index
    %c19_59 = arith.constant 19 : index
    %136 = vector.load %arg4[%c0_57, %c0_58, %c19_59] : memref<1x8x152xf32, #tpu.memory_space<vmem>>, vector<1x8x128xf32>
    %137 = vector.shape_cast %136 : vector<1x8x128xf32> to vector<8x128xf32>
    %138 = vector.broadcast %135 : f32 to vector<8x128xf32>
    %139 = arith.mulf %138, %137 : vector<8x128xf32>
    %140 = arith.addf %133, %139 : vector<8x128xf32>
    %141 = arith.index_cast %arg1 : i32 to index
    %c20 = arith.constant 20 : index
    %142 = memref.load %arg2[%141, %c20] : memref<20x25xf32, #tpu.memory_space<smem>>
    %c0_60 = arith.constant 0 : index
    %c0_61 = arith.constant 0 : index
    %c20_62 = arith.constant 20 : index
    %143 = vector.load %arg4[%c0_60, %c0_61, %c20_62] : memref<1x8x152xf32, #tpu.memory_space<vmem>>, vector<1x8x128xf32>
    %144 = vector.shape_cast %143 : vector<1x8x128xf32> to vector<8x128xf32>
    %145 = vector.broadcast %142 : f32 to vector<8x128xf32>
    %146 = arith.mulf %145, %144 : vector<8x128xf32>
    %147 = arith.addf %140, %146 : vector<8x128xf32>
    %148 = arith.index_cast %arg1 : i32 to index
    %c21 = arith.constant 21 : index
    %149 = memref.load %arg2[%148, %c21] : memref<20x25xf32, #tpu.memory_space<smem>>
    %c0_63 = arith.constant 0 : index
    %c0_64 = arith.constant 0 : index
    %c21_65 = arith.constant 21 : index
    %150 = vector.load %arg4[%c0_63, %c0_64, %c21_65] : memref<1x8x152xf32, #tpu.memory_space<vmem>>, vector<1x8x128xf32>
    %151 = vector.shape_cast %150 : vector<1x8x128xf32> to vector<8x128xf32>
    %152 = vector.broadcast %149 : f32 to vector<8x128xf32>
    %153 = arith.mulf %152, %151 : vector<8x128xf32>
    %154 = arith.addf %147, %153 : vector<8x128xf32>
    %155 = arith.index_cast %arg1 : i32 to index
    %c22 = arith.constant 22 : index
    %156 = memref.load %arg2[%155, %c22] : memref<20x25xf32, #tpu.memory_space<smem>>
    %c0_66 = arith.constant 0 : index
    %c0_67 = arith.constant 0 : index
    %c22_68 = arith.constant 22 : index
    %157 = vector.load %arg4[%c0_66, %c0_67, %c22_68] : memref<1x8x152xf32, #tpu.memory_space<vmem>>, vector<1x8x128xf32>
    %158 = vector.shape_cast %157 : vector<1x8x128xf32> to vector<8x128xf32>
    %159 = vector.broadcast %156 : f32 to vector<8x128xf32>
    %160 = arith.mulf %159, %158 : vector<8x128xf32>
    %161 = arith.addf %154, %160 : vector<8x128xf32>
    %162 = arith.index_cast %arg1 : i32 to index
    %c23 = arith.constant 23 : index
    %163 = memref.load %arg2[%162, %c23] : memref<20x25xf32, #tpu.memory_space<smem>>
    %c0_69 = arith.constant 0 : index
    %c0_70 = arith.constant 0 : index
    %c23_71 = arith.constant 23 : index
    %164 = vector.load %arg4[%c0_69, %c0_70, %c23_71] : memref<1x8x152xf32, #tpu.memory_space<vmem>>, vector<1x8x128xf32>
    %165 = vector.shape_cast %164 : vector<1x8x128xf32> to vector<8x128xf32>
    %166 = vector.broadcast %163 : f32 to vector<8x128xf32>
    %167 = arith.mulf %166, %165 : vector<8x128xf32>
    %168 = arith.addf %161, %167 : vector<8x128xf32>
    %169 = arith.index_cast %arg1 : i32 to index
    %c24 = arith.constant 24 : index
    %170 = memref.load %arg2[%169, %c24] : memref<20x25xf32, #tpu.memory_space<smem>>
    %c0_72 = arith.constant 0 : index
    %c0_73 = arith.constant 0 : index
    %c24_74 = arith.constant 24 : index
    %171 = vector.load %arg4[%c0_72, %c0_73, %c24_74] : memref<1x8x152xf32, #tpu.memory_space<vmem>>, vector<1x8x128xf32>
    %172 = vector.shape_cast %171 : vector<1x8x128xf32> to vector<8x128xf32>
    %173 = vector.broadcast %170 : f32 to vector<8x128xf32>
    %174 = arith.mulf %173, %172 : vector<8x128xf32>
    %175 = arith.addf %168, %174 : vector<8x128xf32>
    %176 = arith.index_cast %arg1 : i32 to index
    %177 = memref.load %arg3[%176] : memref<20xf32, #tpu.memory_space<smem>>
    %178 = vector.broadcast %177 : f32 to vector<8x128xf32>
    %179 = arith.addf %175, %178 : vector<8x128xf32>
    %c0_75 = arith.constant 0 : index
    %c0_76 = arith.constant 0 : index
    %c0_77 = arith.constant 0 : index
    %c0_78 = arith.constant 0 : index
    %180 = vector.load %arg5[%c0_75, %c0_76, %c0_77, %c0_78] : memref<1x1x8x128xf32, #tpu.memory_space<vmem>>, vector<1x1x8x128xf32>
    %181 = vector.shape_cast %180 : vector<1x1x8x128xf32> to vector<8x128xf32>
    %182 = vector.shape_cast %179 : vector<8x128xf32> to vector<1x1x8x128xf32>
    tpu.vector_store %arg5[%c0_75, %c0_76, %c0_77, %c0_78], %182 {strides = array<i32>} : memref<1x1x8x128xf32, #tpu.memory_space<vmem>>, vector<1x1x8x128xf32>,
    return
  }
  func.func @transform_0(%arg0: i32, %arg1: i32) -> (i32, i32) {
    %c0_i32 = arith.constant 0 : i32
    %c0_i32_0 = arith.constant 0 : i32
    %c0_i32_1 = arith.constant 0 : i32
    return %c0_i32, %c0_i32_0 : i32, i32
  }
  func.func @transform_1(%arg0: i32, %arg1: i32) -> i32 {
    %c0_i32 = arith.constant 0 : i32
    %c0_i32_0 = arith.constant 0 : i32
    return %c0_i32 : i32
  }
  func.func @transform_2(%arg0: i32, %arg1: i32) -> (i32, i32, i32) {
    %c0_i32 = arith.constant 0 : i32
    %c0_i32_0 = arith.constant 0 : i32
    %c0_i32_1 = arith.constant 0 : i32
    return %arg0, %c0_i32, %c0_i32_0 : i32, i32, i32
  }
  func.func @transform_3(%arg0: i32, %arg1: i32) -> (i32, i32, i32, i32) {
    %c0_i32 = arith.constant 0 : i32
    %c0_i32_0 = arith.constant 0 : i32
    %c0_i32_1 = arith.constant 0 : i32
    return %arg0, %arg1, %c0_i32, %c0_i32_0 : i32, i32, i32, i32
  }
}

module attributes {stable_mosaic.version = 11 : i64} {
  func.func @_tconv_kernel(%arg0: i32, %arg1: i32, %arg2: memref<20x25xf32, #tpu.memory_space<smem>>, %arg3: memref<20xf32, #tpu.memory_space<smem>>, %arg4: memref<1x1x8x152xf32, #tpu.memory_space<vmem>>, %arg5: memref<1x1x8x128xf32, #tpu.memory_space<vmem>>) attributes {dimension_semantics = [#tpu.dimension_semantics<parallel>, #tpu.dimension_semantics<parallel>], iteration_bounds = array<i64: 2, 20>, scalar_prefetch = 0 : i64, scratch_operands = 0 : i64, tpu.core_type = #tpu.core_type<tc>, window_params = [{transform_indices = @transform_0, window_bounds = array<i64: 20, 25>}, {transform_indices = @transform_1, window_bounds = array<i64: 20>}, {transform_indices = @transform_2, window_bounds = array<i64: 1, 1, 8, 152>}, {transform_indices = @transform_3, window_bounds = array<i64: 1, 1, 8, 128>}]} {
    %cst = arith.constant 0.000000e+00 : f32
    %0 = vector.broadcast %cst : f32 to vector<8x128xf32>
    %1 = arith.index_cast %arg1 : i32 to index
    %c0 = arith.constant 0 : index
    %2 = memref.load %arg2[%1, %c0] : memref<20x25xf32, #tpu.memory_space<smem>>
    %c0_0 = arith.constant 0 : index
    %c0_1 = arith.constant 0 : index
    %c0_2 = arith.constant 0 : index
    %c0_3 = arith.constant 0 : index
    %3 = vector.load %arg4[%c0_0, %c0_1, %c0_2, %c0_3] : memref<1x1x8x152xf32, #tpu.memory_space<vmem>>, vector<1x1x8x128xf32>
    %4 = vector.shape_cast %3 : vector<1x1x8x128xf32> to vector<8x128xf32>
    %5 = vector.broadcast %2 : f32 to vector<8x128xf32>
    %6 = arith.mulf %5, %4 : vector<8x128xf32>
    %7 = arith.addf %0, %6 : vector<8x128xf32>
    %8 = arith.index_cast %arg1 : i32 to index
    %c1 = arith.constant 1 : index
    %9 = memref.load %arg2[%8, %c1] : memref<20x25xf32, #tpu.memory_space<smem>>
    %c0_4 = arith.constant 0 : index
    %c0_5 = arith.constant 0 : index
    %c0_6 = arith.constant 0 : index
    %c1_7 = arith.constant 1 : index
    %10 = vector.load %arg4[%c0_4, %c0_5, %c0_6, %c1_7] : memref<1x1x8x152xf32, #tpu.memory_space<vmem>>, vector<1x1x8x128xf32>
    %11 = vector.shape_cast %10 : vector<1x1x8x128xf32> to vector<8x128xf32>
    %12 = vector.broadcast %9 : f32 to vector<8x128xf32>
    %13 = arith.mulf %12, %11 : vector<8x128xf32>
    %14 = arith.addf %7, %13 : vector<8x128xf32>
    %15 = arith.index_cast %arg1 : i32 to index
    %c2 = arith.constant 2 : index
    %16 = memref.load %arg2[%15, %c2] : memref<20x25xf32, #tpu.memory_space<smem>>
    %c0_8 = arith.constant 0 : index
    %c0_9 = arith.constant 0 : index
    %c0_10 = arith.constant 0 : index
    %c2_11 = arith.constant 2 : index
    %17 = vector.load %arg4[%c0_8, %c0_9, %c0_10, %c2_11] : memref<1x1x8x152xf32, #tpu.memory_space<vmem>>, vector<1x1x8x128xf32>
    %18 = vector.shape_cast %17 : vector<1x1x8x128xf32> to vector<8x128xf32>
    %19 = vector.broadcast %16 : f32 to vector<8x128xf32>
    %20 = arith.mulf %19, %18 : vector<8x128xf32>
    %21 = arith.addf %14, %20 : vector<8x128xf32>
    %22 = arith.index_cast %arg1 : i32 to index
    %c3 = arith.constant 3 : index
    %23 = memref.load %arg2[%22, %c3] : memref<20x25xf32, #tpu.memory_space<smem>>
    %c0_12 = arith.constant 0 : index
    %c0_13 = arith.constant 0 : index
    %c0_14 = arith.constant 0 : index
    %c3_15 = arith.constant 3 : index
    %24 = vector.load %arg4[%c0_12, %c0_13, %c0_14, %c3_15] : memref<1x1x8x152xf32, #tpu.memory_space<vmem>>, vector<1x1x8x128xf32>
    %25 = vector.shape_cast %24 : vector<1x1x8x128xf32> to vector<8x128xf32>
    %26 = vector.broadcast %23 : f32 to vector<8x128xf32>
    %27 = arith.mulf %26, %25 : vector<8x128xf32>
    %28 = arith.addf %21, %27 : vector<8x128xf32>
    %29 = arith.index_cast %arg1 : i32 to index
    %c4 = arith.constant 4 : index
    %30 = memref.load %arg2[%29, %c4] : memref<20x25xf32, #tpu.memory_space<smem>>
    %c0_16 = arith.constant 0 : index
    %c0_17 = arith.constant 0 : index
    %c0_18 = arith.constant 0 : index
    %c4_19 = arith.constant 4 : index
    %31 = vector.load %arg4[%c0_16, %c0_17, %c0_18, %c4_19] : memref<1x1x8x152xf32, #tpu.memory_space<vmem>>, vector<1x1x8x128xf32>
    %32 = vector.shape_cast %31 : vector<1x1x8x128xf32> to vector<8x128xf32>
    %33 = vector.broadcast %30 : f32 to vector<8x128xf32>
    %34 = arith.mulf %33, %32 : vector<8x128xf32>
    %35 = arith.addf %28, %34 : vector<8x128xf32>
    %36 = arith.index_cast %arg1 : i32 to index
    %c5 = arith.constant 5 : index
    %37 = memref.load %arg2[%36, %c5] : memref<20x25xf32, #tpu.memory_space<smem>>
    %c0_20 = arith.constant 0 : index
    %c0_21 = arith.constant 0 : index
    %c0_22 = arith.constant 0 : index
    %c5_23 = arith.constant 5 : index
    %38 = vector.load %arg4[%c0_20, %c0_21, %c0_22, %c5_23] : memref<1x1x8x152xf32, #tpu.memory_space<vmem>>, vector<1x1x8x128xf32>
    %39 = vector.shape_cast %38 : vector<1x1x8x128xf32> to vector<8x128xf32>
    %40 = vector.broadcast %37 : f32 to vector<8x128xf32>
    %41 = arith.mulf %40, %39 : vector<8x128xf32>
    %42 = arith.addf %35, %41 : vector<8x128xf32>
    %43 = arith.index_cast %arg1 : i32 to index
    %c6 = arith.constant 6 : index
    %44 = memref.load %arg2[%43, %c6] : memref<20x25xf32, #tpu.memory_space<smem>>
    %c0_24 = arith.constant 0 : index
    %c0_25 = arith.constant 0 : index
    %c0_26 = arith.constant 0 : index
    %c6_27 = arith.constant 6 : index
    %45 = vector.load %arg4[%c0_24, %c0_25, %c0_26, %c6_27] : memref<1x1x8x152xf32, #tpu.memory_space<vmem>>, vector<1x1x8x128xf32>
    %46 = vector.shape_cast %45 : vector<1x1x8x128xf32> to vector<8x128xf32>
    %47 = vector.broadcast %44 : f32 to vector<8x128xf32>
    %48 = arith.mulf %47, %46 : vector<8x128xf32>
    %49 = arith.addf %42, %48 : vector<8x128xf32>
    %50 = arith.index_cast %arg1 : i32 to index
    %c7 = arith.constant 7 : index
    %51 = memref.load %arg2[%50, %c7] : memref<20x25xf32, #tpu.memory_space<smem>>
    %c0_28 = arith.constant 0 : index
    %c0_29 = arith.constant 0 : index
    %c0_30 = arith.constant 0 : index
    %c7_31 = arith.constant 7 : index
    %52 = vector.load %arg4[%c0_28, %c0_29, %c0_30, %c7_31] : memref<1x1x8x152xf32, #tpu.memory_space<vmem>>, vector<1x1x8x128xf32>
    %53 = vector.shape_cast %52 : vector<1x1x8x128xf32> to vector<8x128xf32>
    %54 = vector.broadcast %51 : f32 to vector<8x128xf32>
    %55 = arith.mulf %54, %53 : vector<8x128xf32>
    %56 = arith.addf %49, %55 : vector<8x128xf32>
    %57 = arith.index_cast %arg1 : i32 to index
    %c8 = arith.constant 8 : index
    %58 = memref.load %arg2[%57, %c8] : memref<20x25xf32, #tpu.memory_space<smem>>
    %c0_32 = arith.constant 0 : index
    %c0_33 = arith.constant 0 : index
    %c0_34 = arith.constant 0 : index
    %c8_35 = arith.constant 8 : index
    %59 = vector.load %arg4[%c0_32, %c0_33, %c0_34, %c8_35] : memref<1x1x8x152xf32, #tpu.memory_space<vmem>>, vector<1x1x8x128xf32>
    %60 = vector.shape_cast %59 : vector<1x1x8x128xf32> to vector<8x128xf32>
    %61 = vector.broadcast %58 : f32 to vector<8x128xf32>
    %62 = arith.mulf %61, %60 : vector<8x128xf32>
    %63 = arith.addf %56, %62 : vector<8x128xf32>
    %64 = arith.index_cast %arg1 : i32 to index
    %c9 = arith.constant 9 : index
    %65 = memref.load %arg2[%64, %c9] : memref<20x25xf32, #tpu.memory_space<smem>>
    %c0_36 = arith.constant 0 : index
    %c0_37 = arith.constant 0 : index
    %c0_38 = arith.constant 0 : index
    %c9_39 = arith.constant 9 : index
    %66 = vector.load %arg4[%c0_36, %c0_37, %c0_38, %c9_39] : memref<1x1x8x152xf32, #tpu.memory_space<vmem>>, vector<1x1x8x128xf32>
    %67 = vector.shape_cast %66 : vector<1x1x8x128xf32> to vector<8x128xf32>
    %68 = vector.broadcast %65 : f32 to vector<8x128xf32>
    %69 = arith.mulf %68, %67 : vector<8x128xf32>
    %70 = arith.addf %63, %69 : vector<8x128xf32>
    %71 = arith.index_cast %arg1 : i32 to index
    %c10 = arith.constant 10 : index
    %72 = memref.load %arg2[%71, %c10] : memref<20x25xf32, #tpu.memory_space<smem>>
    %c0_40 = arith.constant 0 : index
    %c0_41 = arith.constant 0 : index
    %c0_42 = arith.constant 0 : index
    %c10_43 = arith.constant 10 : index
    %73 = vector.load %arg4[%c0_40, %c0_41, %c0_42, %c10_43] : memref<1x1x8x152xf32, #tpu.memory_space<vmem>>, vector<1x1x8x128xf32>
    %74 = vector.shape_cast %73 : vector<1x1x8x128xf32> to vector<8x128xf32>
    %75 = vector.broadcast %72 : f32 to vector<8x128xf32>
    %76 = arith.mulf %75, %74 : vector<8x128xf32>
    %77 = arith.addf %70, %76 : vector<8x128xf32>
    %78 = arith.index_cast %arg1 : i32 to index
    %c11 = arith.constant 11 : index
    %79 = memref.load %arg2[%78, %c11] : memref<20x25xf32, #tpu.memory_space<smem>>
    %c0_44 = arith.constant 0 : index
    %c0_45 = arith.constant 0 : index
    %c0_46 = arith.constant 0 : index
    %c11_47 = arith.constant 11 : index
    %80 = vector.load %arg4[%c0_44, %c0_45, %c0_46, %c11_47] : memref<1x1x8x152xf32, #tpu.memory_space<vmem>>, vector<1x1x8x128xf32>
    %81 = vector.shape_cast %80 : vector<1x1x8x128xf32> to vector<8x128xf32>
    %82 = vector.broadcast %79 : f32 to vector<8x128xf32>
    %83 = arith.mulf %82, %81 : vector<8x128xf32>
    %84 = arith.addf %77, %83 : vector<8x128xf32>
    %85 = arith.index_cast %arg1 : i32 to index
    %c12 = arith.constant 12 : index
    %86 = memref.load %arg2[%85, %c12] : memref<20x25xf32, #tpu.memory_space<smem>>
    %c0_48 = arith.constant 0 : index
    %c0_49 = arith.constant 0 : index
    %c0_50 = arith.constant 0 : index
    %c12_51 = arith.constant 12 : index
    %87 = vector.load %arg4[%c0_48, %c0_49, %c0_50, %c12_51] : memref<1x1x8x152xf32, #tpu.memory_space<vmem>>, vector<1x1x8x128xf32>
    %88 = vector.shape_cast %87 : vector<1x1x8x128xf32> to vector<8x128xf32>
    %89 = vector.broadcast %86 : f32 to vector<8x128xf32>
    %90 = arith.mulf %89, %88 : vector<8x128xf32>
    %91 = arith.addf %84, %90 : vector<8x128xf32>
    %92 = arith.index_cast %arg1 : i32 to index
    %c13 = arith.constant 13 : index
    %93 = memref.load %arg2[%92, %c13] : memref<20x25xf32, #tpu.memory_space<smem>>
    %c0_52 = arith.constant 0 : index
    %c0_53 = arith.constant 0 : index
    %c0_54 = arith.constant 0 : index
    %c13_55 = arith.constant 13 : index
    %94 = vector.load %arg4[%c0_52, %c0_53, %c0_54, %c13_55] : memref<1x1x8x152xf32, #tpu.memory_space<vmem>>, vector<1x1x8x128xf32>
    %95 = vector.shape_cast %94 : vector<1x1x8x128xf32> to vector<8x128xf32>
    %96 = vector.broadcast %93 : f32 to vector<8x128xf32>
    %97 = arith.mulf %96, %95 : vector<8x128xf32>
    %98 = arith.addf %91, %97 : vector<8x128xf32>
    %99 = arith.index_cast %arg1 : i32 to index
    %c14 = arith.constant 14 : index
    %100 = memref.load %arg2[%99, %c14] : memref<20x25xf32, #tpu.memory_space<smem>>
    %c0_56 = arith.constant 0 : index
    %c0_57 = arith.constant 0 : index
    %c0_58 = arith.constant 0 : index
    %c14_59 = arith.constant 14 : index
    %101 = vector.load %arg4[%c0_56, %c0_57, %c0_58, %c14_59] : memref<1x1x8x152xf32, #tpu.memory_space<vmem>>, vector<1x1x8x128xf32>
    %102 = vector.shape_cast %101 : vector<1x1x8x128xf32> to vector<8x128xf32>
    %103 = vector.broadcast %100 : f32 to vector<8x128xf32>
    %104 = arith.mulf %103, %102 : vector<8x128xf32>
    %105 = arith.addf %98, %104 : vector<8x128xf32>
    %106 = arith.index_cast %arg1 : i32 to index
    %c15 = arith.constant 15 : index
    %107 = memref.load %arg2[%106, %c15] : memref<20x25xf32, #tpu.memory_space<smem>>
    %c0_60 = arith.constant 0 : index
    %c0_61 = arith.constant 0 : index
    %c0_62 = arith.constant 0 : index
    %c15_63 = arith.constant 15 : index
    %108 = vector.load %arg4[%c0_60, %c0_61, %c0_62, %c15_63] : memref<1x1x8x152xf32, #tpu.memory_space<vmem>>, vector<1x1x8x128xf32>
    %109 = vector.shape_cast %108 : vector<1x1x8x128xf32> to vector<8x128xf32>
    %110 = vector.broadcast %107 : f32 to vector<8x128xf32>
    %111 = arith.mulf %110, %109 : vector<8x128xf32>
    %112 = arith.addf %105, %111 : vector<8x128xf32>
    %113 = arith.index_cast %arg1 : i32 to index
    %c16 = arith.constant 16 : index
    %114 = memref.load %arg2[%113, %c16] : memref<20x25xf32, #tpu.memory_space<smem>>
    %c0_64 = arith.constant 0 : index
    %c0_65 = arith.constant 0 : index
    %c0_66 = arith.constant 0 : index
    %c16_67 = arith.constant 16 : index
    %115 = vector.load %arg4[%c0_64, %c0_65, %c0_66, %c16_67] : memref<1x1x8x152xf32, #tpu.memory_space<vmem>>, vector<1x1x8x128xf32>
    %116 = vector.shape_cast %115 : vector<1x1x8x128xf32> to vector<8x128xf32>
    %117 = vector.broadcast %114 : f32 to vector<8x128xf32>
    %118 = arith.mulf %117, %116 : vector<8x128xf32>
    %119 = arith.addf %112, %118 : vector<8x128xf32>
    %120 = arith.index_cast %arg1 : i32 to index
    %c17 = arith.constant 17 : index
    %121 = memref.load %arg2[%120, %c17] : memref<20x25xf32, #tpu.memory_space<smem>>
    %c0_68 = arith.constant 0 : index
    %c0_69 = arith.constant 0 : index
    %c0_70 = arith.constant 0 : index
    %c17_71 = arith.constant 17 : index
    %122 = vector.load %arg4[%c0_68, %c0_69, %c0_70, %c17_71] : memref<1x1x8x152xf32, #tpu.memory_space<vmem>>, vector<1x1x8x128xf32>
    %123 = vector.shape_cast %122 : vector<1x1x8x128xf32> to vector<8x128xf32>
    %124 = vector.broadcast %121 : f32 to vector<8x128xf32>
    %125 = arith.mulf %124, %123 : vector<8x128xf32>
    %126 = arith.addf %119, %125 : vector<8x128xf32>
    %127 = arith.index_cast %arg1 : i32 to index
    %c18 = arith.constant 18 : index
    %128 = memref.load %arg2[%127, %c18] : memref<20x25xf32, #tpu.memory_space<smem>>
    %c0_72 = arith.constant 0 : index
    %c0_73 = arith.constant 0 : index
    %c0_74 = arith.constant 0 : index
    %c18_75 = arith.constant 18 : index
    %129 = vector.load %arg4[%c0_72, %c0_73, %c0_74, %c18_75] : memref<1x1x8x152xf32, #tpu.memory_space<vmem>>, vector<1x1x8x128xf32>
    %130 = vector.shape_cast %129 : vector<1x1x8x128xf32> to vector<8x128xf32>
    %131 = vector.broadcast %128 : f32 to vector<8x128xf32>
    %132 = arith.mulf %131, %130 : vector<8x128xf32>
    %133 = arith.addf %126, %132 : vector<8x128xf32>
    %134 = arith.index_cast %arg1 : i32 to index
    %c19 = arith.constant 19 : index
    %135 = memref.load %arg2[%134, %c19] : memref<20x25xf32, #tpu.memory_space<smem>>
    %c0_76 = arith.constant 0 : index
    %c0_77 = arith.constant 0 : index
    %c0_78 = arith.constant 0 : index
    %c19_79 = arith.constant 19 : index
    %136 = vector.load %arg4[%c0_76, %c0_77, %c0_78, %c19_79] : memref<1x1x8x152xf32, #tpu.memory_space<vmem>>, vector<1x1x8x128xf32>
    %137 = vector.shape_cast %136 : vector<1x1x8x128xf32> to vector<8x128xf32>
    %138 = vector.broadcast %135 : f32 to vector<8x128xf32>
    %139 = arith.mulf %138, %137 : vector<8x128xf32>
    %140 = arith.addf %133, %139 : vector<8x128xf32>
    %141 = arith.index_cast %arg1 : i32 to index
    %c20 = arith.constant 20 : index
    %142 = memref.load %arg2[%141, %c20] : memref<20x25xf32, #tpu.memory_space<smem>>
    %c0_80 = arith.constant 0 : index
    %c0_81 = arith.constant 0 : index
    %c0_82 = arith.constant 0 : index
    %c20_83 = arith.constant 20 : index
    %143 = vector.load %arg4[%c0_80, %c0_81, %c0_82, %c20_83] : memref<1x1x8x152xf32, #tpu.memory_space<vmem>>, vector<1x1x8x128xf32>
    %144 = vector.shape_cast %143 : vector<1x1x8x128xf32> to vector<8x128xf32>
    %145 = vector.broadcast %142 : f32 to vector<8x128xf32>
    %146 = arith.mulf %145, %144 : vector<8x128xf32>
    %147 = arith.addf %140, %146 : vector<8x128xf32>
    %148 = arith.index_cast %arg1 : i32 to index
    %c21 = arith.constant 21 : index
    %149 = memref.load %arg2[%148, %c21] : memref<20x25xf32, #tpu.memory_space<smem>>
    %c0_84 = arith.constant 0 : index
    %c0_85 = arith.constant 0 : index
    %c0_86 = arith.constant 0 : index
    %c21_87 = arith.constant 21 : index
    %150 = vector.load %arg4[%c0_84, %c0_85, %c0_86, %c21_87] : memref<1x1x8x152xf32, #tpu.memory_space<vmem>>, vector<1x1x8x128xf32>
    %151 = vector.shape_cast %150 : vector<1x1x8x128xf32> to vector<8x128xf32>
    %152 = vector.broadcast %149 : f32 to vector<8x128xf32>
    %153 = arith.mulf %152, %151 : vector<8x128xf32>
    %154 = arith.addf %147, %153 : vector<8x128xf32>
    %155 = arith.index_cast %arg1 : i32 to index
    %c22 = arith.constant 22 : index
    %156 = memref.load %arg2[%155, %c22] : memref<20x25xf32, #tpu.memory_space<smem>>
    %c0_88 = arith.constant 0 : index
    %c0_89 = arith.constant 0 : index
    %c0_90 = arith.constant 0 : index
    %c22_91 = arith.constant 22 : index
    %157 = vector.load %arg4[%c0_88, %c0_89, %c0_90, %c22_91] : memref<1x1x8x152xf32, #tpu.memory_space<vmem>>, vector<1x1x8x128xf32>
    %158 = vector.shape_cast %157 : vector<1x1x8x128xf32> to vector<8x128xf32>
    %159 = vector.broadcast %156 : f32 to vector<8x128xf32>
    %160 = arith.mulf %159, %158 : vector<8x128xf32>
    %161 = arith.addf %154, %160 : vector<8x128xf32>
    %162 = arith.index_cast %arg1 : i32 to index
    %c23 = arith.constant 23 : index
    %163 = memref.load %arg2[%162, %c23] : memref<20x25xf32, #tpu.memory_space<smem>>
    %c0_92 = arith.constant 0 : index
    %c0_93 = arith.constant 0 : index
    %c0_94 = arith.constant 0 : index
    %c23_95 = arith.constant 23 : index
    %164 = vector.load %arg4[%c0_92, %c0_93, %c0_94, %c23_95] : memref<1x1x8x152xf32, #tpu.memory_space<vmem>>, vector<1x1x8x128xf32>
    %165 = vector.shape_cast %164 : vector<1x1x8x128xf32> to vector<8x128xf32>
    %166 = vector.broadcast %163 : f32 to vector<8x128xf32>
    %167 = arith.mulf %166, %165 : vector<8x128xf32>
    %168 = arith.addf %161, %167 : vector<8x128xf32>
    %169 = arith.index_cast %arg1 : i32 to index
    %c24 = arith.constant 24 : index
    %170 = memref.load %arg2[%169, %c24] : memref<20x25xf32, #tpu.memory_space<smem>>
    %c0_96 = arith.constant 0 : index
    %c0_97 = arith.constant 0 : index
    %c0_98 = arith.constant 0 : index
    %c24_99 = arith.constant 24 : index
    %171 = vector.load %arg4[%c0_96, %c0_97, %c0_98, %c24_99] : memref<1x1x8x152xf32, #tpu.memory_space<vmem>>, vector<1x1x8x128xf32>
    %172 = vector.shape_cast %171 : vector<1x1x8x128xf32> to vector<8x128xf32>
    %173 = vector.broadcast %170 : f32 to vector<8x128xf32>
    %174 = arith.mulf %173, %172 : vector<8x128xf32>
    %175 = arith.addf %168, %174 : vector<8x128xf32>
    %176 = arith.index_cast %arg1 : i32 to index
    %177 = memref.load %arg3[%176] : memref<20xf32, #tpu.memory_space<smem>>
    %178 = vector.broadcast %177 : f32 to vector<8x128xf32>
    %179 = arith.addf %175, %178 : vector<8x128xf32>
    %c0_100 = arith.constant 0 : index
    %c0_101 = arith.constant 0 : index
    %c0_102 = arith.constant 0 : index
    %c0_103 = arith.constant 0 : index
    %180 = vector.load %arg5[%c0_100, %c0_101, %c0_102, %c0_103] : memref<1x1x8x128xf32, #tpu.memory_space<vmem>>, vector<1x1x8x128xf32>
    %181 = vector.shape_cast %180 : vector<1x1x8x128xf32> to vector<8x128xf32>
    %182 = vector.shape_cast %179 : vector<8x128xf32> to vector<1x1x8x128xf32>
    tpu.vector_store %arg5[%c0_100, %c0_101, %c0_102, %c0_103], %182 {strides = array<i32>} : memref<1x1x8x128xf32, #tpu.memory_space<vmem>>, vector<1x1x8x128xf32>,
    return
  }
  func.func @transform_0(%arg0: i32, %arg1: i32) -> (i32, i32) {
    %c0_i32 = arith.constant 0 : i32
    %c0_i32_0 = arith.constant 0 : i32
    %c0_i32_1 = arith.constant 0 : i32
    return %c0_i32, %c0_i32_0 : i32, i32
  }
  func.func @transform_1(%arg0: i32, %arg1: i32) -> i32 {
    %c0_i32 = arith.constant 0 : i32
    %c0_i32_0 = arith.constant 0 : i32
    return %c0_i32 : i32
  }
  func.func @transform_2(%arg0: i32, %arg1: i32) -> (i32, i32, i32, i32) {
    %c0_i32 = arith.constant 0 : i32
    %c0_i32_0 = arith.constant 0 : i32
    %c0_i32_1 = arith.constant 0 : i32
    return %arg0, %arg1, %c0_i32, %c0_i32_0 : i32, i32, i32, i32
  }
  func.func @transform_3(%arg0: i32, %arg1: i32) -> (i32, i32, i32, i32) {
    %c0_i32 = arith.constant 0 : i32
    %c0_i32_0 = arith.constant 0 : i32
    %c0_i32_1 = arith.constant 0 : i32
    return %arg0, %arg1, %c0_i32, %c0_i32_0 : i32, i32, i32, i32
  }
}

module attributes {stable_mosaic.version = 11 : i64} {
  func.func @_sp_kernel(%arg0: i32, %arg1: memref<120x480xf32, #tpu.memory_space<vmem>>, %arg2: memref<120x1xf32, #tpu.memory_space<vmem>>, %arg3: memref<1x480x128xf32, #tpu.memory_space<vmem>>, %arg4: memref<128x3xf32, #tpu.memory_space<vmem>>, %arg5: memref<1x120x3xf32, #tpu.memory_space<vmem>>) attributes {dimension_semantics = [#tpu.dimension_semantics<parallel>], iteration_bounds = array<i64: 2>, scalar_prefetch = 0 : i64, scratch_operands = 0 : i64, tpu.core_type = #tpu.core_type<tc>, window_params = [{pipeline_mode = #tpu.pipeline_mode<synchronous>, transform_indices = @transform_0, window_bounds = array<i64: 120, 480>}, {pipeline_mode = #tpu.pipeline_mode<synchronous>, transform_indices = @transform_1, window_bounds = array<i64: 120, 1>}, {transform_indices = @transform_2, window_bounds = array<i64: 1, 480, 128>}, {pipeline_mode = #tpu.pipeline_mode<synchronous>, transform_indices = @transform_3, window_bounds = array<i64: 128, 3>}, {transform_indices = @transform_4, window_bounds = array<i64: 1, 120, 3>}]} {
    %c0 = arith.constant 0 : index
    %c0_0 = arith.constant 0 : index
    %0 = vector.load %arg1[%c0, %c0_0] : memref<120x480xf32, #tpu.memory_space<vmem>>, vector<120x480xf32>
    %c0_1 = arith.constant 0 : index
    %c0_2 = arith.constant 0 : index
    %c0_3 = arith.constant 0 : index
    %1 = vector.load %arg3[%c0_1, %c0_2, %c0_3] : memref<1x480x128xf32, #tpu.memory_space<vmem>>, vector<1x480x128xf32>
    %2 = vector.shape_cast %1 : vector<1x480x128xf32> to vector<480x128xf32>
    %cst = arith.constant dense<0.000000e+00> : vector<120x128xf32>
    %3 = tpu.matmul %0, %2, %cst {dimension_numbers = #tpu.dot_dimension_numbers<[1], [0], [0], [1], [0, 0, 1, 1], [], []>} : vector<120x480xf32>, vector<480x128xf32>, vector<120x128xf32> -> vector<120x128xf32>
    %c0_4 = arith.constant 0 : index
    %c0_5 = arith.constant 0 : index
    %4 = vector.load %arg2[%c0_4, %c0_5] : memref<120x1xf32, #tpu.memory_space<vmem>>, vector<120x1xf32>
    %5 = vector.broadcast %4 : vector<120x1xf32> to vector<120x128xf32>
    %6 = arith.addf %3, %5 : vector<120x128xf32>
    %7 = arith.mulf %6, %6 : vector<120x128xf32>
    %c0_6 = arith.constant 0 : index
    %c0_7 = arith.constant 0 : index
    %8 = vector.load %arg4[%c0_6, %c0_7] : memref<128x3xf32, #tpu.memory_space<vmem>>, vector<128x3xf32>
    %cst_8 = arith.constant dense<0.000000e+00> : vector<120x3xf32>
    %9 = tpu.matmul %7, %8, %cst_8 {dimension_numbers = #tpu.dot_dimension_numbers<[1], [0], [0], [1], [0, 0, 1, 1], [], []>} : vector<120x128xf32>, vector<128x3xf32>, vector<120x3xf32> -> vector<120x3xf32>
    %cst_9 = arith.constant 9.99999997E-7 : f32
    %10 = vector.broadcast %cst_9 : f32 to vector<120x3xf32>
    %11 = arith.maximumf %9, %10 : vector<120x3xf32>
    %12 = math.log %11 : vector<120x3xf32>
    %c0_10 = arith.constant 0 : index
    %c0_11 = arith.constant 0 : index
    %c0_12 = arith.constant 0 : index
    %13 = vector.load %arg5[%c0_10, %c0_11, %c0_12] : memref<1x120x3xf32, #tpu.memory_space<vmem>>, vector<1x120x3xf32>
    %14 = vector.shape_cast %13 : vector<1x120x3xf32> to vector<120x3xf32>
    %15 = vector.shape_cast %12 : vector<120x3xf32> to vector<1x120x3xf32>
    tpu.vector_store %arg5[%c0_10, %c0_11, %c0_12], %15 {strides = array<i32>} : memref<1x120x3xf32, #tpu.memory_space<vmem>>, vector<1x120x3xf32>,
    return
  }
  func.func @transform_0(%arg0: i32) -> (i32, i32) {
    %c0_i32 = arith.constant 0 : i32
    %c0_i32_0 = arith.constant 0 : i32
    %c0_i32_1 = arith.constant 0 : i32
    return %c0_i32, %c0_i32_0 : i32, i32
  }
  func.func @transform_1(%arg0: i32) -> (i32, i32) {
    %c0_i32 = arith.constant 0 : i32
    %c0_i32_0 = arith.constant 0 : i32
    %c0_i32_1 = arith.constant 0 : i32
    return %c0_i32, %c0_i32_0 : i32, i32
  }
  func.func @transform_2(%arg0: i32) -> (i32, i32, i32) {
    %c0_i32 = arith.constant 0 : i32
    %c0_i32_0 = arith.constant 0 : i32
    %c0_i32_1 = arith.constant 0 : i32
    return %arg0, %c0_i32, %c0_i32_0 : i32, i32, i32
  }
  func.func @transform_3(%arg0: i32) -> (i32, i32) {
    %c0_i32 = arith.constant 0 : i32
    %c0_i32_0 = arith.constant 0 : i32
    %c0_i32_1 = arith.constant 0 : i32
    return %c0_i32, %c0_i32_0 : i32, i32
  }
  func.func @transform_4(%arg0: i32) -> (i32, i32, i32) {
    %c0_i32 = arith.constant 0 : i32
    %c0_i32_0 = arith.constant 0 : i32
    %c0_i32_1 = arith.constant 0 : i32
    return %arg0, %c0_i32, %c0_i32_0 : i32, i32, i32
  }
}

module attributes {stable_mosaic.version = 11 : i64} {
  func.func @_lag_kernel(%arg0: i32, %arg1: memref<1x120x3xf32, #tpu.memory_space<vmem>>, %arg2: memref<1x120x3xf32, #tpu.memory_space<vmem>>) attributes {dimension_semantics = [#tpu.dimension_semantics<parallel>], iteration_bounds = array<i64: 2>, scalar_prefetch = 0 : i64, scratch_operands = 0 : i64, tpu.core_type = #tpu.core_type<tc>, window_params = [{transform_indices = @transform_0, window_bounds = array<i64: 1, 120, 3>}, {transform_indices = @transform_1, window_bounds = array<i64: 1, 120, 3>}]} {
    %c0 = arith.constant 0 : index
    %c0_0 = arith.constant 0 : index
    %c0_1 = arith.constant 0 : index
    %0 = vector.load %arg1[%c0, %c0_0, %c0_1] : memref<1x120x3xf32, #tpu.memory_space<vmem>>, vector<1x120x3xf32>
    %1 = vector.shape_cast %0 : vector<1x120x3xf32> to vector<120x3xf32>
    %cst = arith.constant dense<0.000000e+00> : vector<120xf32>
    %2 = vector.multi_reduction <add>, %1, %cst [1] : vector<120x3xf32> to vector<120xf32>
    %3 = vector.shape_cast %2 : vector<120xf32> to vector<120x1xf32>
    %cst_2 = arith.constant 3.000000e+00 : f32
    %4 = vector.broadcast %cst_2 : f32 to vector<120x1xf32>
    %5 = arith.divf %3, %4 : vector<120x1xf32>
    %cst_3 = arith.constant 0.000000e+00 : f32
    %6 = vector.broadcast %cst_3 : f32 to vector<120x1xf32>
    %7 = arith.subf %6, %5 : vector<120x1xf32>
    %8 = math.exp %7 : vector<120x1xf32>
    %cst_4 = arith.constant 1.000000e+00 : f32
    %9 = vector.broadcast %cst_4 : f32 to vector<120x1xf32>
    %10 = arith.addf %9, %8 : vector<120x1xf32>
    %cst_5 = arith.constant 1.000000e+00 : f32
    %11 = vector.broadcast %cst_5 : f32 to vector<120x1xf32>
    %12 = arith.divf %11, %10 : vector<120x1xf32>
    %13 = vector.broadcast %12 : vector<120x1xf32> to vector<120x3xf32>
    %14 = arith.mulf %1, %13 : vector<120x3xf32>
    %c0_6 = arith.constant 0 : index
    %c0_7 = arith.constant 0 : index
    %c0_8 = arith.constant 0 : index
    %15 = vector.load %arg2[%c0_6, %c0_7, %c0_8] : memref<1x120x3xf32, #tpu.memory_space<vmem>>, vector<1x120x3xf32>
    %16 = vector.shape_cast %15 : vector<1x120x3xf32> to vector<120x3xf32>
    %17 = vector.shape_cast %14 : vector<120x3xf32> to vector<1x120x3xf32>
    tpu.vector_store %arg2[%c0_6, %c0_7, %c0_8], %17 {strides = array<i32>} : memref<1x120x3xf32, #tpu.memory_space<vmem>>, vector<1x120x3xf32>,
    return
  }
  func.func @transform_0(%arg0: i32) -> (i32, i32, i32) {
    %c0_i32 = arith.constant 0 : i32
    %c0_i32_0 = arith.constant 0 : i32
    %c0_i32_1 = arith.constant 0 : i32
    return %arg0, %c0_i32, %c0_i32_0 : i32, i32, i32
  }
  func.func @transform_1(%arg0: i32) -> (i32, i32, i32) {
    %c0_i32 = arith.constant 0 : i32
    %c0_i32_0 = arith.constant 0 : i32
    %c0_i32_1 = arith.constant 0 : i32
    return %arg0, %c0_i32, %c0_i32_0 : i32, i32, i32
  }
}

module attributes {stable_mosaic.version = 11 : i64} {
  func.func @_fc_kernel(%arg0: memref<2x360xf32, #tpu.memory_space<vmem>>, %arg1: memref<360x4xf32, #tpu.memory_space<vmem>>, %arg2: memref<1x4xf32, #tpu.memory_space<vmem>>, %arg3: memref<2x4xf32, #tpu.memory_space<vmem>>) attributes {dimension_semantics = [], scalar_prefetch = 0 : i64, scratch_operands = 0 : i64, tpu.core_type = #tpu.core_type<tc>} {
    %c0 = arith.constant 0 : index
    %c0_0 = arith.constant 0 : index
    %0 = vector.load %arg0[%c0, %c0_0] : memref<2x360xf32, #tpu.memory_space<vmem>>, vector<2x360xf32>
    %c0_1 = arith.constant 0 : index
    %c0_2 = arith.constant 0 : index
    %1 = vector.load %arg1[%c0_1, %c0_2] : memref<360x4xf32, #tpu.memory_space<vmem>>, vector<360x4xf32>
    %cst = arith.constant dense<0.000000e+00> : vector<2x4xf32>
    %2 = tpu.matmul %0, %1, %cst {dimension_numbers = #tpu.dot_dimension_numbers<[1], [0], [0], [1], [0, 0, 1, 1], [], []>} : vector<2x360xf32>, vector<360x4xf32>, vector<2x4xf32> -> vector<2x4xf32>
    %c0_3 = arith.constant 0 : index
    %c0_4 = arith.constant 0 : index
    %3 = vector.load %arg2[%c0_3, %c0_4] : memref<1x4xf32, #tpu.memory_space<vmem>>, vector<1x4xf32>
    %4 = vector.broadcast %3 : vector<1x4xf32> to vector<2x4xf32>
    %5 = arith.addf %2, %4 : vector<2x4xf32>
    %cst_5 = arith.constant dense<0xFF800000> : vector<2xf32>
    %6 = vector.multi_reduction <maximumf>, %5, %cst_5 [1] : vector<2x4xf32> to vector<2xf32>
    %7 = vector.shape_cast %6 : vector<2xf32> to vector<2x1xf32>
    %8 = vector.broadcast %7 : vector<2x1xf32> to vector<2x4xf32>
    %9 = arith.subf %5, %8 : vector<2x4xf32>
    %10 = math.exp %9 : vector<2x4xf32>
    %cst_6 = arith.constant dense<0.000000e+00> : vector<2xf32>
    %11 = vector.multi_reduction <add>, %10, %cst_6 [1] : vector<2x4xf32> to vector<2xf32>
    %12 = vector.shape_cast %11 : vector<2xf32> to vector<2x1xf32>
    %13 = math.log %12 : vector<2x1xf32>
    %14 = vector.broadcast %13 : vector<2x1xf32> to vector<2x4xf32>
    %15 = arith.subf %9, %14 : vector<2x4xf32>
    %c0_7 = arith.constant 0 : index
    %c0_8 = arith.constant 0 : index
    %16 = vector.load %arg3[%c0_7, %c0_8] : memref<2x4xf32, #tpu.memory_space<vmem>>, vector<2x4xf32>
    tpu.vector_store %arg3[%c0_7, %c0_8], %15 {strides = array<i32>} : memref<2x4xf32, #tpu.memory_space<vmem>>, vector<2x4xf32>,
    return
  }
}

</mosaic_0001>

<llo_original>
// kernel: dmsanet_forward.12
$region0: #{dmsanet_forward.12}
  #allocation0 [shape = 'u32[]', space=smem, size = 0x4, offset = 0x4, fixed_abs, tag = 'smem constant byte address 0x4 - core index']
  #allocation1 [shape = 'u32[72,128]{1,0:T(1,128)}', space=vmem, size = 0x9000, scoped, tag = 'internal scratch']
  %s0 = inlined_call_operand.vmem [shape: f32[20,25], index: 0, kind: input, shape index: {}]
  %s1 = inlined_call_operand.vmem [shape: f32[20], index: 1, kind: input, shape index: {}]
  %s2 = inlined_call_operand.vmem [shape: f32[2,8,152], index: 2, kind: input, shape index: {}]
  %s3 = inlined_call_operand.vmem [shape: f32[2,20,8,128], index: 3, kind: output, shape index: {}]
  %s4 = sld [smem:[#allocation0]]
  $region53: #{dmsanet_forward.12} parent=0
    _
  %s6 = ssub.s32 1, %s4
  %s7 = scalar_select 0, %s6, %s4
  $region1: #{dmsanet_forward.12} parent=0
    #allocation2 [shape = 'u8[12288]{0}', space=smem, size = 0x3000, scoped, tag = 'input window, operand 0, single buffered']
    #allocation3 [shape = 's32[2]{0}', space=sflag, size = 0x8, scoped, tag = 'scoped memory for dmsanet_forward.12']
    #allocation4 [shape = 'u8[512]{0}', space=smem, size = 0x200, scoped, tag = 'input window, operand 1, single buffered']
    #allocation5 [shape = 's32[1]{0}', space=sflag, size = 0x4, scoped, tag = 'scoped memory for dmsanet_forward.12']
    %8 = vsyncpa [#allocation3], 0
    %9 = vsyncpa [#allocation5], 0
    loop: start=0, step=1, limit=42
    $region2: #{dmsanet_forward.12} parent=1 // loop_pre_header
      _
    $region3: #{dmsanet_forward.12} parent=1 // loop_header
      %s11 = sphi 0, %s15
      %p12 = scmp.ge.s32.totalorder %s11, 42
      %s18 = sphi 0, %s30
      %s19 = sphi 0, %s26
      %s20 = sphi 0, %s18
      %s21 = sphi 0, %s19
      %s22 = sphi 0, %s20
      %s23 = sphi 0, %s21
      %s31 = sphi 0, %s31
      %s33 = sphi 0, %s31
      %s34 = sphi 0, %s33
      %s48 = sphi 0, %s34
      %s52 = sphi 0, %s52
      %s54 = sphi 0, %s52
      %s55 = sphi 0, %s54
      %s69 = sphi 0, %s55
      %s75 = sphi 0, %s77
      %s78 = sphi 0, %s75
      %s79 = sphi 0, %s78
      %s95 = sphi 0, %s79
      %s103 = sphi 0, %s105
      %s106 = sphi 0, %s103
      %s107 = sphi 0, %s106
      %s123 = sphi 0, %s107
    $region4: #{dmsanet_forward.12} parent=1 // loop_header_branch
      %14 = sbr.rel (%p12) target = $region8
    $region5: #{dmsanet_forward.12} parent=1 // loop_body
      %s16 = ssub.s32 %s11, 1
      %s17 = ssub.s32 %s11, 2
      %s24 = sadd.s32 1, %s19
      %p25 = scmp.ge.s32.totalorder %s24, 20
      %s26 = scalar_select %p25, 0, %s24
      %s27 = sadd.s32 1, %s18
      %s28 = scalar_select %p25, %s27, %s18
      %p29 = scmp.ge.s32.totalorder %s28, 2
      %s30 = scalar_select %p29, 0, %s28
      %s32 = sadd.s32 %s31, 1
      %p35 = scmp.eq.s32.totalorder %s11, 39
      %p36 = scmp.ne.s32.totalorder %s31, %s33
      %p37 = scmp.eq.s32.totalorder %s11, 0
      %p38 = por %p36, %p37
      %p39 = scmp.ne.s32.totalorder %s31, %s33
      %p40 = scmp.eq.s32.totalorder %s16, 39
      %p41 = por %p39, %p40
      %p42 = scmp.ne.s32.totalorder %s33, %s34
      %p43 = scmp.eq.s32.totalorder %s16, 0
      %p44 = por %p42, %p43
      %p45 = scmp.ne.s32.totalorder %s33, %s34
      %p46 = scmp.eq.s32.totalorder %s17, 39
      %p47 = por %p45, %p46
      %p49 = scmp.ne.s32.totalorder %s34, %s48
      %p50 = scmp.eq.s32.totalorder %s17, 0
      %p51 = por %p49, %p50
      %s53 = sadd.s32 %s52, 1
      %p56 = scmp.eq.s32.totalorder %s11, 39
      %p57 = scmp.ne.s32.totalorder %s52, %s54
      %p58 = scmp.eq.s32.totalorder %s11, 0
      %p59 = por %p57, %p58
      %p60 = scmp.ne.s32.totalorder %s52, %s54
      %p61 = scmp.eq.s32.totalorder %s16, 39
      %p62 = por %p60, %p61
      %p63 = scmp.ne.s32.totalorder %s54, %s55
      %p64 = scmp.eq.s32.totalorder %s16, 0
      %p65 = por %p63, %p64
      %p66 = scmp.ne.s32.totalorder %s54, %s55
      %p67 = scmp.eq.s32.totalorder %s17, 39
      %p68 = por %p66, %p67
      %p70 = scmp.ne.s32.totalorder %s55, %s69
      %p71 = scmp.eq.s32.totalorder %s17, 0
      %p72 = por %p70, %p71
      %s73 = ssub.s32 %s18, %s30
      %p74 = scmp.eq.s32.totalorder %s73, 0
      %s76 = sadd.s32 %s75, 1
      %s77 = scalar_select %p74, %s75, %s76
      %p80 = pneg %p74
      %p81 = scmp.eq.s32.totalorder %s11, 39
      %p82 = por %p80, %p81
      %p83 = scmp.ne.s32.totalorder %s75, %s78
      %p84 = scmp.eq.s32.totalorder %s11, 0
      %p85 = por %p83, %p84
      %p86 = scmp.ne.s32.totalorder %s75, %s78
      %p87 = scmp.eq.s32.totalorder %s16, 39
      %p88 = por %p86, %p87
      %p89 = scmp.ne.s32.totalorder %s78, %s79
      %p90 = scmp.eq.s32.totalorder %s16, 0
      %p91 = por %p89, %p90
      %p92 = scmp.ne.s32.totalorder %s78, %s79
      %p93 = scmp.eq.s32.totalorder %s17, 39
      %p94 = por %p92, %p93
      %p96 = scmp.ne.s32.totalorder %s79, %s95
      %p97 = scmp.eq.s32.totalorder %s17, 0
      %p98 = por %p96, %p97
      %s99 = ssub.s32 %s18, %s30
      %s100 = ssub.s32 %s19, %s26
      %s101 = sor.u32 %s99, %s100
      %p102 = scmp.eq.s32.totalorder %s101, 0
      %s104 = sadd.s32 %s103, 1
      %s105 = scalar_select %p102, %s103, %s104
      %p108 = pneg %p102
      %p109 = scmp.eq.s32.totalorder %s11, 39
      %p110 = por %p108, %p109
      %p111 = scmp.ne.s32.totalorder %s103, %s106
      %p112 = scmp.eq.s32.totalorder %s11, 0
      %p113 = por %p111, %p112
      %p114 = scmp.ne.s32.totalorder %s103, %s106
      %p115 = scmp.eq.s32.totalorder %s16, 39
      %p116 = por %p114, %p115
      %p117 = scmp.ne.s32.totalorder %s106, %s107
      %p118 = scmp.eq.s32.totalorder %s16, 0
      %p119 = por %p117, %p118
      %p120 = scmp.ne.s32.totalorder %s106, %s107
      %p121 = scmp.eq.s32.totalorder %s17, 39
      %p122 = por %p120, %p121
      %p124 = scmp.ne.s32.totalorder %s107, %s123
      %p125 = scmp.eq.s32.totalorder %s17, 0
      %p126 = por %p124, %p125
      %p127 = scmp.le.s32.totalorder 1, %s11
      %p128 = scmp.lt.s32.totalorder %s11, 41
      %p129 = pnand %p127, %p128
      %p130 = pneg %p129
      // Predicated region
      $region9: #{dmsanet_forward.12} parent=5 // pred_check
        _
      $region10: #{dmsanet_forward.12} parent=5 // pred_check_branch
        %132 = sbr.rel (%p129) target = $region12
      $region11: #{dmsanet_forward.12} parent=5 // pred_region
        %s133 = ssub.s32 %s11, 1
        // Predicated region
        $region13: #{dmsanet_forward.12} parent=11 // pred_check
          %p134 = pneg %p44
        $region14: #{dmsanet_forward.12} parent=11 // pred_check_branch
          %136 = sbr.rel (%p134) target = $region16
        $region15: #{dmsanet_forward.12} parent=11 // pred_region
          %138 = vsyncadd [#allocation3], 0
          %s139 = sshll.u32 %s0, 4
          %s140 = int_to_ptr.vmem [resolvable:$true] %s139
          %145 = dma.vmem_to_smem %s140, 384, [#allocation2], [#allocation3], 128, 128, 8
        $region16: #{dmsanet_forward.12} parent=11 // pred_fallthru
          _
        // Predicated region
        $region17: #{dmsanet_forward.12} parent=11 // pred_check
          %p146 = pneg %p65
        $region18: #{dmsanet_forward.12} parent=11 // pred_check_branch
          %148 = sbr.rel (%p146) target = $region20
        $region19: #{dmsanet_forward.12} parent=11 // pred_region
          %150 = vsyncadd [#allocation5], 0
          %s152 = sshll.u32 %s1, 4
          %s153 = int_to_ptr.vmem [resolvable:$true] %s152
          %155 = dma.vmem_to_smem %s153, 16, [#allocation4], [#allocation5]
        $region20: #{dmsanet_forward.12} parent=11 // pred_fallthru
          _
      $region12: #{dmsanet_forward.12} parent=5 // pred_fallthru
        _
      %p156 = scmp.lt.s32.totalorder %s11, 40
      // Predicated region
      $region21: #{dmsanet_forward.12} parent=5 // pred_check
        %p157 = pneg %p156
      $region22: #{dmsanet_forward.12} parent=5 // pred_check_branch
        %159 = sbr.rel (%p157) target = $region24
      $region23: #{dmsanet_forward.12} parent=5 // pred_region
        // Predicated region
        $region25: #{dmsanet_forward.12} parent=23 // pred_check
          %p160 = pneg %p85
        $region26: #{dmsanet_forward.12} parent=23 // pred_check_branch
          %162 = sbr.rel (%p160) target = $region28
        $region27: #{dmsanet_forward.12} parent=23 // pred_region
          %p163 = scmp.lt.s32.totalorder %s18, 1
          %s164 = scalar_select %p163, %s18, 1
          %s165 = smul.addr %s164, 2
          %s166 = smul.addr %s165, 8
          %s167 = scalar_lea.vmem %s2, %s166
        $region28: #{dmsanet_forward.12} parent=23 // pred_fallthru
          _
      $region24: #{dmsanet_forward.12} parent=5 // pred_fallthru
        _
      %p168 = scmp.le.s32.totalorder 1, %s11
      %p169 = scmp.lt.s32.totalorder %s11, 41
      %p170 = pnand %p168, %p169
      %p171 = pneg %p170
      // Predicated region
      $region29: #{dmsanet_forward.12} parent=5 // pred_check
        _
      $region30: #{dmsanet_forward.12} parent=5 // pred_check_branch
        %173 = sbr.rel (%p170) target = $region32
      $region31: #{dmsanet_forward.12} parent=5 // pred_region
        %s174 = ssub.s32 %s11, 1
        // Predicated region
        $region33: #{dmsanet_forward.12} parent=31 // pred_check
          %p175 = pneg %p44
        $region34: #{dmsanet_forward.12} parent=31 // pred_check_branch
          %177 = sbr.rel (%p175) target = $region36
        $region35: #{dmsanet_forward.12} parent=31 // pred_region
          %179 = dma.done [#allocation3], 384
        $region36: #{dmsanet_forward.12} parent=31 // pred_fallthru
          _
        // Predicated region
        $region37: #{dmsanet_forward.12} parent=31 // pred_check
          %p180 = pneg %p65
        $region38: #{dmsanet_forward.12} parent=31 // pred_check_branch
          %182 = sbr.rel (%p180) target = $region40
        $region39: #{dmsanet_forward.12} parent=31 // pred_region
          %184 = dma.done [#allocation5], 16
        $region40: #{dmsanet_forward.12} parent=31 // pred_fallthru
          _
        %185 = sfence
        %p186 = pneg %p44
        %p187 = pneg %p41
        %p188 = pneg %p65
        %p189 = pneg %p62
        %p190 = scmp.lt.s32.totalorder %s20, 1
        %s191 = scalar_select %p190, %s20, 1
        %s192 = smul.addr %s191, 2
        %s193 = smul.addr %s192, 8
        %s194 = scalar_lea.vmem %s2, %s193
        %p195 = pneg %p91
        %p196 = pneg %p88
        %p197 = pneg %p119
        %p198 = pneg %p116
        %p199 = scmp.lt.s32.totalorder %s20, 1
        %s200 = scalar_select %p199, %s20, 1
        %p201 = scmp.lt.s32.totalorder %s21, 19
        %s202 = scalar_select %p201, %s21, 19
        %s203 = smul.addr %s200, 20
        %s204 = sadd.s32 %s202, %s203
        %s205 = smul.addr %s204, 8
        %s206 = scalar_lea.vmem %s3, %s205
        %p207 = scmp.lt.s32.totalorder %s20, 1
        %s208 = scalar_select %p207, %s20, 1
        %s209 = smul.addr %s208, 2
        %s210 = smul.addr %s209, 8
        %s211 = scalar_lea.vmem %s2, %s210
        %p212 = scmp.lt.s32.totalorder %s20, 1
        %s213 = scalar_select %p212, %s20, 1
        %p214 = scmp.lt.s32.totalorder %s21, 19
        %s215 = scalar_select %p214, %s21, 19
        %s216 = smul.addr %s213, 20
        %s217 = sadd.s32 %s215, %s216
        %s218 = smul.addr %s217, 8
        %s219 = scalar_lea.vmem %s3, %s218
        %s220 = smul.u32 %s21, 128
        %s221 = sld [smem:[#allocation2 + %s220]]
        %v222 = vld [vmem:[%s211] sm:$0xff]
        %v223 = vstv %s221
        %v224 = vmul.f32 %v223, %v222
        %v225 = vadd.f32 %v224, 0.0
        %s226 = sadd.s32 %s220, 1
        %s227 = sld [smem:[#allocation2 + %s226]]
        %v228 = vld [vmem:[%s211] sm:$0xff]
        %v229 = vld [vmem:[%s211 + $0x8] sm:$0xff]
        %v230 = vstv %s227
        %v231 = vmul.f32 %v230, %v228
        %v232 = vmul.f32 %v230, %v229
        %235 = vrot.lane.b32.xlu0 %v231, 127
        %v236 = vpop.permute.xlu0 %235
        %237 = vrot.lane.b32.xlu0 %v232, 127
        %v238 = vpop.permute.xlu0 %237
        %vm239 = vcmask 1039360
        %v240 = vsel %vm239, %v236, %v238
        %v242 = vadd.f32 %v225, %v240
        %s243 = sadd.s32 %s220, 2
        %s244 = sld [smem:[#allocation2 + %s243]]
        %v245 = vstv %s244
        %v246 = vmul.f32 %v245, %v228
        %v247 = vmul.f32 %v245, %v229
        %250 = vrot.lane.b32.xlu0 %v246, 126
        %v251 = vpop.permute.xlu0 %250
        %252 = vrot.lane.b32.xlu0 %v247, 126
        %v253 = vpop.permute.xlu0 %252
        %vm254 = vcmask 1031168
        %v255 = vsel %vm254, %v251, %v253
        %v257 = vadd.f32 %v242, %v255
        %s258 = sadd.s32 %s220, 3
        %s259 = sld [smem:[#allocation2 + %s258]]
        %v260 = vstv %s259
        %v261 = vmul.f32 %v260, %v228
        %v262 = vmul.f32 %v260, %v229
        %265 = vrot.lane.b32.xlu0 %v261, 125
        %v266 = vpop.permute.xlu0 %265
        %267 = vrot.lane.b32.xlu0 %v262, 125
        %v268 = vpop.permute.xlu0 %267
        %vm269 = vcmask 1022976
        %v270 = vsel %vm269, %v266, %v268
        %v272 = vadd.f32 %v257, %v270
        %s273 = sadd.s32 %s220, 4
        %s274 = sld [smem:[#allocation2 + %s273]]
        %v275 = vstv %s274
        %v276 = vmul.f32 %v275, %v228
        %v277 = vmul.f32 %v275, %v229
        %280 = vrot.lane.b32.xlu0 %v276, 124
        %v281 = vpop.permute.xlu0 %280
        %282 = vrot.lane.b32.xlu0 %v277, 124
        %v283 = vpop.permute.xlu0 %282
        %vm284 = vcmask 1014784
        %v285 = vsel %vm284, %v281, %v283
        %v287 = vadd.f32 %v272, %v285
        %s288 = sadd.s32 %s220, 5
        %s289 = sld [smem:[#allocation2 + %s288]]
        %v290 = vstv %s289
        %v291 = vmul.f32 %v290, %v228
        %v292 = vmul.f32 %v290, %v229
        %295 = vrot.lane.b32.xlu0 %v291, 123
        %v296 = vpop.permute.xlu0 %295
        %297 = vrot.lane.b32.xlu0 %v292, 123
        %v298 = vpop.permute.xlu0 %297
        %vm299 = vcmask 1006592
        %v300 = vsel %vm299, %v296, %v298
        %v302 = vadd.f32 %v287, %v300
        %s303 = sadd.s32 %s220, 6
        %s304 = sld [smem:[#allocation2 + %s303]]
        %v305 = vstv %s304
        %v306 = vmul.f32 %v305, %v228
        %v307 = vmul.f32 %v305, %v229
        %310 = vrot.lane.b32.xlu0 %v306, 122
        %v311 = vpop.permute.xlu0 %310
        %312 = vrot.lane.b32.xlu0 %v307, 122
        %v313 = vpop.permute.xlu0 %312
        %vm314 = vcmask 998400
        %v315 = vsel %vm314, %v311, %v313
        %v317 = vadd.f32 %v302, %v315
        %s318 = sadd.s32 %s220, 7
        %s319 = sld [smem:[#allocation2 + %s318]]
        %v320 = vstv %s319
        %v321 = vmul.f32 %v320, %v228
        %v322 = vmul.f32 %v320, %v229
        %325 = vrot.lane.b32.xlu0 %v321, 121
        %v326 = vpop.permute.xlu0 %325
        %327 = vrot.lane.b32.xlu0 %v322, 121
        %v328 = vpop.permute.xlu0 %327
        %vm329 = vcmask 990208
        %v330 = vsel %vm329, %v326, %v328
        %v332 = vadd.f32 %v317, %v330
        %s333 = sadd.s32 %s220, 8
        %s334 = sld [smem:[#allocation2 + %s333]]
        %v335 = vstv %s334
        %v336 = vmul.f32 %v335, %v228
        %v337 = vmul.f32 %v335, %v229
        %340 = vrot.lane.b32.xlu0 %v336, 120
        %v341 = vpop.permute.xlu0 %340
        %342 = vrot.lane.b32.xlu0 %v337, 120
        %v343 = vpop.permute.xlu0 %342
        %vm344 = vcmask 982016
        %v345 = vsel %vm344, %v341, %v343
        %v347 = vadd.f32 %v332, %v345
        %s348 = sadd.s32 %s220, 9
        %s349 = sld [smem:[#allocation2 + %s348]]
        %v350 = vstv %s349
        %v351 = vmul.f32 %v350, %v228
        %v352 = vmul.f32 %v350, %v229
        %355 = vrot.lane.b32.xlu0 %v351, 119
        %v356 = vpop.permute.xlu0 %355
        %357 = vrot.lane.b32.xlu0 %v352, 119
        %v358 = vpop.permute.xlu0 %357
        %vm359 = vcmask 973824
        %v360 = vsel %vm359, %v356, %v358
        %v362 = vadd.f32 %v347, %v360
        %s363 = sadd.s32 %s220, 10
        %s364 = sld [smem:[#allocation2 + %s363]]
        %v365 = vstv %s364
        %v366 = vmul.f32 %v365, %v228
        %v367 = vmul.f32 %v365, %v229
        %370 = vrot.lane.b32.xlu0 %v366, 118
        %v371 = vpop.permute.xlu0 %370
        %372 = vrot.lane.b32.xlu0 %v367, 118
        %v373 = vpop.permute.xlu0 %372
        %vm374 = vcmask 965632
        %v375 = vsel %vm374, %v371, %v373
        %v377 = vadd.f32 %v362, %v375
        %s378 = sadd.s32 %s220, 11
        %s379 = sld [smem:[#allocation2 + %s378]]
        %v380 = vstv %s379
        %v381 = vmul.f32 %v380, %v228
        %v382 = vmul.f32 %v380, %v229
        %385 = vrot.lane.b32.xlu0 %v381, 117
        %v386 = vpop.permute.xlu0 %385
        %387 = vrot.lane.b32.xlu0 %v382, 117
        %v388 = vpop.permute.xlu0 %387
        %vm389 = vcmask 957440
        %v390 = vsel %vm389, %v386, %v388
        %v392 = vadd.f32 %v377, %v390
        %s393 = sadd.s32 %s220, 12
        %s394 = sld [smem:[#allocation2 + %s393]]
        %v395 = vstv %s394
        %v396 = vmul.f32 %v395, %v228
        %v397 = vmul.f32 %v395, %v229
        %400 = vrot.lane.b32.xlu0 %v396, 116
        %v401 = vpop.permute.xlu0 %400
        %402 = vrot.lane.b32.xlu0 %v397, 116
        %v403 = vpop.permute.xlu0 %402
        %vm404 = vcmask 949248
        %v405 = vsel %vm404, %v401, %v403
        %v407 = vadd.f32 %v392, %v405
        %s408 = sadd.s32 %s220, 13
        %s409 = sld [smem:[#allocation2 + %s408]]
        %v410 = vstv %s409
        %v411 = vmul.f32 %v410, %v228
        %v412 = vmul.f32 %v410, %v229
        %415 = vrot.lane.b32.xlu0 %v411, 115
        %v416 = vpop.permute.xlu0 %415
        %417 = vrot.lane.b32.xlu0 %v412, 115
        %v418 = vpop.permute.xlu0 %417
        %vm419 = vcmask 941056
        %v420 = vsel %vm419, %v416, %v418
        %v422 = vadd.f32 %v407, %v420
        %s423 = sadd.s32 %s220, 14
        %s424 = sld [smem:[#allocation2 + %s423]]
        %v425 = vstv %s424
        %v426 = vmul.f32 %v425, %v228
        %v427 = vmul.f32 %v425, %v229
        %430 = vrot.lane.b32.xlu0 %v426, 114
        %v431 = vpop.permute.xlu0 %430
        %432 = vrot.lane.b32.xlu0 %v427, 114
        %v433 = vpop.permute.xlu0 %432
        %vm434 = vcmask 932864
        %v435 = vsel %vm434, %v431, %v433
        %v437 = vadd.f32 %v422, %v435
        %s438 = sadd.s32 %s220, 15
        %s439 = sld [smem:[#allocation2 + %s438]]
        %v440 = vstv %s439
        %v441 = vmul.f32 %v440, %v228
        %v442 = vmul.f32 %v440, %v229
        %445 = vrot.lane.b32.xlu0 %v441, 113
        %v446 = vpop.permute.xlu0 %445
        %447 = vrot.lane.b32.xlu0 %v442, 113
        %v448 = vpop.permute.xlu0 %447
        %vm449 = vcmask 924672
        %v450 = vsel %vm449, %v446, %v448
        %v452 = vadd.f32 %v437, %v450
        %s453 = sadd.s32 %s220, 16
        %s454 = sld [smem:[#allocation2 + %s453]]
        %v455 = vstv %s454
        %v456 = vmul.f32 %v455, %v228
        %v457 = vmul.f32 %v455, %v229
        %460 = vrot.lane.b32.xlu0 %v456, 112
        %v461 = vpop.permute.xlu0 %460
        %462 = vrot.lane.b32.xlu0 %v457, 112
        %v463 = vpop.permute.xlu0 %462
        %vm464 = vcmask 916480
        %v465 = vsel %vm464, %v461, %v463
        %v467 = vadd.f32 %v452, %v465
        %s468 = sadd.s32 %s220, 17
        %s469 = sld [smem:[#allocation2 + %s468]]
        %v470 = vstv %s469
        %v471 = vmul.f32 %v470, %v228
        %v472 = vmul.f32 %v470, %v229
        %475 = vrot.lane.b32.xlu0 %v471, 111
        %v476 = vpop.permute.xlu0 %475
        %477 = vrot.lane.b32.xlu0 %v472, 111
        %v478 = vpop.permute.xlu0 %477
        %vm479 = vcmask 908288
        %v480 = vsel %vm479, %v476, %v478
        %v482 = vadd.f32 %v467, %v480
        %s483 = sadd.s32 %s220, 18
        %s484 = sld [smem:[#allocation2 + %s483]]
        %v485 = vstv %s484
        %v486 = vmul.f32 %v485, %v228
        %v487 = vmul.f32 %v485, %v229
        %490 = vrot.lane.b32.xlu0 %v486, 110
        %v491 = vpop.permute.xlu0 %490
        %492 = vrot.lane.b32.xlu0 %v487, 110
        %v493 = vpop.permute.xlu0 %492
        %vm494 = vcmask 900096
        %v495 = vsel %vm494, %v491, %v493
        %v497 = vadd.f32 %v482, %v495
        %s498 = sadd.s32 %s220, 19
        %s499 = sld [smem:[#allocation2 + %s498]]
        %v500 = vstv %s499
        %v501 = vmul.f32 %v500, %v228
        %v502 = vmul.f32 %v500, %v229
        %505 = vrot.lane.b32.xlu0 %v501, 109
        %v506 = vpop.permute.xlu0 %505
        %507 = vrot.lane.b32.xlu0 %v502, 109
        %v508 = vpop.permute.xlu0 %507
        %vm509 = vcmask 891904
        %v510 = vsel %vm509, %v506, %v508
        %v512 = vadd.f32 %v497, %v510
        %s513 = sadd.s32 %s220, 20
        %s514 = sld [smem:[#allocation2 + %s513]]
        %v515 = vstv %s514
        %v516 = vmul.f32 %v515, %v228
        %v517 = vmul.f32 %v515, %v229
        %520 = vrot.lane.b32.xlu0 %v516, 108
        %v521 = vpop.permute.xlu0 %520
        %522 = vrot.lane.b32.xlu0 %v517, 108
        %v523 = vpop.permute.xlu0 %522
        %vm524 = vcmask 883712
        %v525 = vsel %vm524, %v521, %v523
        %v527 = vadd.f32 %v512, %v525
        %s528 = sadd.s32 %s220, 21
        %s529 = sld [smem:[#allocation2 + %s528]]
        %v530 = vstv %s529
        %v531 = vmul.f32 %v530, %v228
        %v532 = vmul.f32 %v530, %v229
        %535 = vrot.lane.b32.xlu0 %v531, 107
        %v536 = vpop.permute.xlu0 %535
        %537 = vrot.lane.b32.xlu0 %v532, 107
        %v538 = vpop.permute.xlu0 %537
        %vm539 = vcmask 875520
        %v540 = vsel %vm539, %v536, %v538
        %v542 = vadd.f32 %v527, %v540
        %s543 = sadd.s32 %s220, 22
        %s544 = sld [smem:[#allocation2 + %s543]]
        %v545 = vstv %s544
        %v546 = vmul.f32 %v545, %v228
        %v547 = vmul.f32 %v545, %v229
        %550 = vrot.lane.b32.xlu0 %v546, 106
        %v551 = vpop.permute.xlu0 %550
        %552 = vrot.lane.b32.xlu0 %v547, 106
        %v553 = vpop.permute.xlu0 %552
        %vm554 = vcmask 867328
        %v555 = vsel %vm554, %v551, %v553
        %v557 = vadd.f32 %v542, %v555
        %s558 = sadd.s32 %s220, 23
        %s559 = sld [smem:[#allocation2 + %s558]]
        %v560 = vstv %s559
        %v561 = vmul.f32 %v560, %v228
        %v562 = vmul.f32 %v560, %v229
        %565 = vrot.lane.b32.xlu0 %v561, 105
        %v566 = vpop.permute.xlu0 %565
        %567 = vrot.lane.b32.xlu0 %v562, 105
        %v568 = vpop.permute.xlu0 %567
        %vm569 = vcmask 859136
        %v570 = vsel %vm569, %v566, %v568
        %v572 = vadd.f32 %v557, %v570
        %s573 = sadd.s32 %s220, 24
        %s574 = sld [smem:[#allocation2 + %s573]]
        %v575 = vstv %s574
        %v576 = vmul.f32 %v575, %v228
        %v577 = vmul.f32 %v575, %v229
        %580 = vrot.lane.b32.xlu0 %v576, 104
        %v581 = vpop.permute.xlu0 %580
        %582 = vrot.lane.b32.xlu0 %v577, 104
        %v583 = vpop.permute.xlu0 %582
        %vm584 = vcmask 850944
        %v585 = vsel %vm584, %v581, %v583
        %v587 = vadd.f32 %v572, %v585
        %s588 = sld [smem:[#allocation4 + %s21]]
        %v589 = vstv %s588
        %v590 = vadd.f32 %v587, %v589
        %591 = vst [vmem:[%s219] sm:$0xff] %v590
        %p592 = scmp.lt.s32.totalorder %s20, 1
        %s593 = scalar_select %p592, %s20, 1
        %p594 = scmp.lt.s32.totalorder %s21, 19
        %s595 = scalar_select %p594, %s21, 19
        %s596 = smul.addr %s593, 20
        %s597 = sadd.s32 %s595, %s596
        %s598 = smul.addr %s597, 8
        %s599 = scalar_lea.vmem %s3, %s598
        // Predicated region
        $region41: #{dmsanet_forward.12} parent=31 // pred_check
          %p600 = pneg %p116
        $region42: #{dmsanet_forward.12} parent=31 // pred_check_branch
          %602 = sbr.rel (%p600) target = $region44
        $region43: #{dmsanet_forward.12} parent=31 // pred_region
          _
        $region44: #{dmsanet_forward.12} parent=31 // pred_fallthru
          _
      $region32: #{dmsanet_forward.12} parent=5 // pred_fallthru
        _
      %p603 = scmp.le.s32.totalorder 2, %s11
      // Predicated region
      $region45: #{dmsanet_forward.12} parent=5 // pred_check
        %p604 = pneg %p603
      $region46: #{dmsanet_forward.12} parent=5 // pred_check_branch
        %606 = sbr.rel (%p604) target = $region48
      $region47: #{dmsanet_forward.12} parent=5 // pred_region
        %s607 = ssub.s32 %s11, 2
        // Predicated region
        $region49: #{dmsanet_forward.12} parent=47 // pred_check
          %p608 = pneg %p122
        $region50: #{dmsanet_forward.12} parent=47 // pred_check_branch
          %610 = sbr.rel (%p608) target = $region52
        $region51: #{dmsanet_forward.12} parent=47 // pred_region
          %p611 = scmp.lt.s32.totalorder %s22, 1
          %s612 = scalar_select %p611, %s22, 1
          %p613 = scmp.lt.s32.totalorder %s23, 19
          %s614 = scalar_select %p613, %s23, 19
          %s615 = smul.addr %s612, 20
          %s616 = sadd.s32 %s614, %s615
          %s617 = smul.addr %s616, 8
          %s618 = scalar_lea.vmem %s3, %s617
        $region52: #{dmsanet_forward.12} parent=47 // pred_fallthru
          _
      $region48: #{dmsanet_forward.12} parent=5 // pred_fallthru
        _
    $region6: #{dmsanet_forward.12} parent=1 // loop_footer
      %s15 = sadd.s32 1, %s11
    $region7: #{dmsanet_forward.12} parent=1 // loop_footer_branch
      %10 = sbr.rel target = $region3
    $region8: #{dmsanet_forward.12} parent=1 // loop_exit
      _
    %619 = vsyncpa [#allocation3], 1
    %s620 = scalar_lea.sflag [#allocation3], 1
    %621 = vsyncpa %s620, 1
    %622 = vsyncpa [#allocation5], 1

// kernel: dmsanet_forward.13
$region0: #{dmsanet_forward.13}
  #allocation0 [shape = 'u32[]', space=smem, size = 0x4, offset = 0x4, fixed_abs, tag = 'smem constant byte address 0x4 - core index']
  #allocation1 [shape = 'u32[72,128]{1,0:T(1,128)}', space=vmem, size = 0x9000, scoped, tag = 'internal scratch']
  %s0 = inlined_call_operand.vmem [shape: f32[20,25], index: 0, kind: input, shape index: {}]
  %s1 = inlined_call_operand.vmem [shape: f32[20], index: 1, kind: input, shape index: {}]
  %s2 = inlined_call_operand.vmem [shape: f32[2,20,8,152], index: 2, kind: input, shape index: {}]
  %s3 = inlined_call_operand.vmem [shape: f32[2,20,8,128], index: 3, kind: output, shape index: {}]
  %s4 = sld [smem:[#allocation0]]
  $region53: #{dmsanet_forward.13} parent=0
    _
  %s6 = ssub.s32 1, %s4
  %s7 = scalar_select 0, %s6, %s4
  $region1: #{dmsanet_forward.13} parent=0
    #allocation2 [shape = 'u8[12288]{0}', space=smem, size = 0x3000, scoped, tag = 'input window, operand 0, single buffered']
    #allocation3 [shape = 's32[2]{0}', space=sflag, size = 0x8, scoped, tag = 'scoped memory for dmsanet_forward.13']
    #allocation4 [shape = 'u8[512]{0}', space=smem, size = 0x200, scoped, tag = 'input window, operand 1, single buffered']
    #allocation5 [shape = 's32[1]{0}', space=sflag, size = 0x4, scoped, tag = 'scoped memory for dmsanet_forward.13']
    %8 = vsyncpa [#allocation3], 0
    %9 = vsyncpa [#allocation5], 0
    loop: start=0, step=1, limit=42
    $region2: #{dmsanet_forward.13} parent=1 // loop_pre_header
      _
    $region3: #{dmsanet_forward.13} parent=1 // loop_header
      %s11 = sphi 0, %s15
      %p12 = scmp.ge.s32.totalorder %s11, 42
      %s18 = sphi 0, %s30
      %s19 = sphi 0, %s26
      %s20 = sphi 0, %s18
      %s21 = sphi 0, %s19
      %s22 = sphi 0, %s20
      %s23 = sphi 0, %s21
      %s31 = sphi 0, %s31
      %s33 = sphi 0, %s31
      %s34 = sphi 0, %s33
      %s48 = sphi 0, %s34
      %s52 = sphi 0, %s52
      %s54 = sphi 0, %s52
      %s55 = sphi 0, %s54
      %s69 = sphi 0, %s55
      %s77 = sphi 0, %s79
      %s80 = sphi 0, %s77
      %s81 = sphi 0, %s80
      %s97 = sphi 0, %s81
      %s105 = sphi 0, %s107
      %s108 = sphi 0, %s105
      %s109 = sphi 0, %s108
      %s125 = sphi 0, %s109
    $region4: #{dmsanet_forward.13} parent=1 // loop_header_branch
      %14 = sbr.rel (%p12) target = $region8
    $region5: #{dmsanet_forward.13} parent=1 // loop_body
      %s16 = ssub.s32 %s11, 1
      %s17 = ssub.s32 %s11, 2
      %s24 = sadd.s32 1, %s19
      %p25 = scmp.ge.s32.totalorder %s24, 20
      %s26 = scalar_select %p25, 0, %s24
      %s27 = sadd.s32 1, %s18
      %s28 = scalar_select %p25, %s27, %s18
      %p29 = scmp.ge.s32.totalorder %s28, 2
      %s30 = scalar_select %p29, 0, %s28
      %s32 = sadd.s32 %s31, 1
      %p35 = scmp.eq.s32.totalorder %s11, 39
      %p36 = scmp.ne.s32.totalorder %s31, %s33
      %p37 = scmp.eq.s32.totalorder %s11, 0
      %p38 = por %p36, %p37
      %p39 = scmp.ne.s32.totalorder %s31, %s33
      %p40 = scmp.eq.s32.totalorder %s16, 39
      %p41 = por %p39, %p40
      %p42 = scmp.ne.s32.totalorder %s33, %s34
      %p43 = scmp.eq.s32.totalorder %s16, 0
      %p44 = por %p42, %p43
      %p45 = scmp.ne.s32.totalorder %s33, %s34
      %p46 = scmp.eq.s32.totalorder %s17, 39
      %p47 = por %p45, %p46
      %p49 = scmp.ne.s32.totalorder %s34, %s48
      %p50 = scmp.eq.s32.totalorder %s17, 0
      %p51 = por %p49, %p50
      %s53 = sadd.s32 %s52, 1
      %p56 = scmp.eq.s32.totalorder %s11, 39
      %p57 = scmp.ne.s32.totalorder %s52, %s54
      %p58 = scmp.eq.s32.totalorder %s11, 0
      %p59 = por %p57, %p58
      %p60 = scmp.ne.s32.totalorder %s52, %s54
      %p61 = scmp.eq.s32.totalorder %s16, 39
      %p62 = por %p60, %p61
      %p63 = scmp.ne.s32.totalorder %s54, %s55
      %p64 = scmp.eq.s32.totalorder %s16, 0
      %p65 = por %p63, %p64
      %p66 = scmp.ne.s32.totalorder %s54, %s55
      %p67 = scmp.eq.s32.totalorder %s17, 39
      %p68 = por %p66, %p67
      %p70 = scmp.ne.s32.totalorder %s55, %s69
      %p71 = scmp.eq.s32.totalorder %s17, 0
      %p72 = por %p70, %p71
      %s73 = ssub.s32 %s18, %s30
      %s74 = ssub.s32 %s19, %s26
      %s75 = sor.u32 %s73, %s74
      %p76 = scmp.eq.s32.totalorder %s75, 0
      %s78 = sadd.s32 %s77, 1
      %s79 = scalar_select %p76, %s77, %s78
      %p82 = pneg %p76
      %p83 = scmp.eq.s32.totalorder %s11, 39
      %p84 = por %p82, %p83
      %p85 = scmp.ne.s32.totalorder %s77, %s80
      %p86 = scmp.eq.s32.totalorder %s11, 0
      %p87 = por %p85, %p86
      %p88 = scmp.ne.s32.totalorder %s77, %s80
      %p89 = scmp.eq.s32.totalorder %s16, 39
      %p90 = por %p88, %p89
      %p91 = scmp.ne.s32.totalorder %s80, %s81
      %p92 = scmp.eq.s32.totalorder %s16, 0
      %p93 = por %p91, %p92
      %p94 = scmp.ne.s32.totalorder %s80, %s81
      %p95 = scmp.eq.s32.totalorder %s17, 39
      %p96 = por %p94, %p95
      %p98 = scmp.ne.s32.totalorder %s81, %s97
      %p99 = scmp.eq.s32.totalorder %s17, 0
      %p100 = por %p98, %p99
      %s101 = ssub.s32 %s18, %s30
      %s102 = ssub.s32 %s19, %s26
      %s103 = sor.u32 %s101, %s102
      %p104 = scmp.eq.s32.totalorder %s103, 0
      %s106 = sadd.s32 %s105, 1
      %s107 = scalar_select %p104, %s105, %s106
      %p110 = pneg %p104
      %p111 = scmp.eq.s32.totalorder %s11, 39
      %p112 = por %p110, %p111
      %p113 = scmp.ne.s32.totalorder %s105, %s108
      %p114 = scmp.eq.s32.totalorder %s11, 0
      %p115 = por %p113, %p114
      %p116 = scmp.ne.s32.totalorder %s105, %s108
      %p117 = scmp.eq.s32.totalorder %s16, 39
      %p118 = por %p116, %p117
      %p119 = scmp.ne.s32.totalorder %s108, %s109
      %p120 = scmp.eq.s32.totalorder %s16, 0
      %p121 = por %p119, %p120
      %p122 = scmp.ne.s32.totalorder %s108, %s109
      %p123 = scmp.eq.s32.totalorder %s17, 39
      %p124 = por %p122, %p123
      %p126 = scmp.ne.s32.totalorder %s109, %s125
      %p127 = scmp.eq.s32.totalorder %s17, 0
      %p128 = por %p126, %p127
      %p129 = scmp.le.s32.totalorder 1, %s11
      %p130 = scmp.lt.s32.totalorder %s11, 41
      %p131 = pnand %p129, %p130
      %p132 = pneg %p131
      // Predicated region
      $region9: #{dmsanet_forward.13} parent=5 // pred_check
        _
      $region10: #{dmsanet_forward.13} parent=5 // pred_check_branch
        %134 = sbr.rel (%p131) target = $region12
      $region11: #{dmsanet_forward.13} parent=5 // pred_region
        %s135 = ssub.s32 %s11, 1
        // Predicated region
        $region13: #{dmsanet_forward.13} parent=11 // pred_check
          %p136 = pneg %p44
        $region14: #{dmsanet_forward.13} parent=11 // pred_check_branch
          %138 = sbr.rel (%p136) target = $region16
        $region15: #{dmsanet_forward.13} parent=11 // pred_region
          %140 = vsyncadd [#allocation3], 0
          %s141 = sshll.u32 %s0, 4
          %s142 = int_to_ptr.vmem [resolvable:$true] %s141
          %147 = dma.vmem_to_smem %s142, 384, [#allocation2], [#allocation3], 128, 128, 8
        $region16: #{dmsanet_forward.13} parent=11 // pred_fallthru
          _
        // Predicated region
        $region17: #{dmsanet_forward.13} parent=11 // pred_check
          %p148 = pneg %p65
        $region18: #{dmsanet_forward.13} parent=11 // pred_check_branch
          %150 = sbr.rel (%p148) target = $region20
        $region19: #{dmsanet_forward.13} parent=11 // pred_region
          %152 = vsyncadd [#allocation5], 0
          %s154 = sshll.u32 %s1, 4
          %s155 = int_to_ptr.vmem [resolvable:$true] %s154
          %157 = dma.vmem_to_smem %s155, 16, [#allocation4], [#allocation5]
        $region20: #{dmsanet_forward.13} parent=11 // pred_fallthru
          _
      $region12: #{dmsanet_forward.13} parent=5 // pred_fallthru
        _
      %p158 = scmp.lt.s32.totalorder %s11, 40
      // Predicated region
      $region21: #{dmsanet_forward.13} parent=5 // pred_check
        %p159 = pneg %p158
      $region22: #{dmsanet_forward.13} parent=5 // pred_check_branch
        %161 = sbr.rel (%p159) target = $region24
      $region23: #{dmsanet_forward.13} parent=5 // pred_region
        // Predicated region
        $region25: #{dmsanet_forward.13} parent=23 // pred_check
          %p162 = pneg %p87
        $region26: #{dmsanet_forward.13} parent=23 // pred_check_branch
          %164 = sbr.rel (%p162) target = $region28
        $region27: #{dmsanet_forward.13} parent=23 // pred_region
          %p165 = scmp.lt.s32.totalorder %s18, 1
          %s166 = scalar_select %p165, %s18, 1
          %p167 = scmp.lt.s32.totalorder %s19, 19
          %s168 = scalar_select %p167, %s19, 19
          %s169 = smul.addr %s168, 2
          %s170 = smul.addr %s166, 40
          %s171 = sadd.s32 %s169, %s170
          %s172 = smul.addr %s171, 8
          %s173 = scalar_lea.vmem %s2, %s172
        $region28: #{dmsanet_forward.13} parent=23 // pred_fallthru
          _
      $region24: #{dmsanet_forward.13} parent=5 // pred_fallthru
        _
      %p174 = scmp.le.s32.totalorder 1, %s11
      %p175 = scmp.lt.s32.totalorder %s11, 41
      %p176 = pnand %p174, %p175
      %p177 = pneg %p176
      // Predicated region
      $region29: #{dmsanet_forward.13} parent=5 // pred_check
        _
      $region30: #{dmsanet_forward.13} parent=5 // pred_check_branch
        %179 = sbr.rel (%p176) target = $region32
      $region31: #{dmsanet_forward.13} parent=5 // pred_region
        %s180 = ssub.s32 %s11, 1
        // Predicated region
        $region33: #{dmsanet_forward.13} parent=31 // pred_check
          %p181 = pneg %p44
        $region34: #{dmsanet_forward.13} parent=31 // pred_check_branch
          %183 = sbr.rel (%p181) target = $region36
        $region35: #{dmsanet_forward.13} parent=31 // pred_region
          %185 = dma.done [#allocation3], 384
        $region36: #{dmsanet_forward.13} parent=31 // pred_fallthru
          _
        // Predicated region
        $region37: #{dmsanet_forward.13} parent=31 // pred_check
          %p186 = pneg %p65
        $region38: #{dmsanet_forward.13} parent=31 // pred_check_branch
          %188 = sbr.rel (%p186) target = $region40
        $region39: #{dmsanet_forward.13} parent=31 // pred_region
          %190 = dma.done [#allocation5], 16
        $region40: #{dmsanet_forward.13} parent=31 // pred_fallthru
          _
        %191 = sfence
        %p192 = pneg %p44
        %p193 = pneg %p41
        %p194 = pneg %p65
        %p195 = pneg %p62
        %p196 = scmp.lt.s32.totalorder %s20, 1
        %s197 = scalar_select %p196, %s20, 1
        %p198 = scmp.lt.s32.totalorder %s21, 19
        %s199 = scalar_select %p198, %s21, 19
        %s200 = smul.addr %s199, 2
        %s201 = smul.addr %s197, 40
        %s202 = sadd.s32 %s200, %s201
        %s203 = smul.addr %s202, 8
        %s204 = scalar_lea.vmem %s2, %s203
        %p205 = pneg %p93
        %p206 = pneg %p90
        %p207 = pneg %p121
        %p208 = pneg %p118
        %p209 = scmp.lt.s32.totalorder %s20, 1
        %s210 = scalar_select %p209, %s20, 1
        %p211 = scmp.lt.s32.totalorder %s21, 19
        %s212 = scalar_select %p211, %s21, 19
        %s213 = smul.addr %s210, 20
        %s214 = sadd.s32 %s212, %s213
        %s215 = smul.addr %s214, 8
        %s216 = scalar_lea.vmem %s3, %s215
        %p217 = scmp.lt.s32.totalorder %s20, 1
        %s218 = scalar_select %p217, %s20, 1
        %p219 = scmp.lt.s32.totalorder %s21, 19
        %s220 = scalar_select %p219, %s21, 19
        %s221 = smul.addr %s220, 2
        %s222 = smul.addr %s218, 40
        %s223 = sadd.s32 %s221, %s222
        %s224 = smul.addr %s223, 8
        %s225 = scalar_lea.vmem %s2, %s224
        %p226 = scmp.lt.s32.totalorder %s20, 1
        %s227 = scalar_select %p226, %s20, 1
        %p228 = scmp.lt.s32.totalorder %s21, 19
        %s229 = scalar_select %p228, %s21, 19
        %s230 = smul.addr %s227, 20
        %s231 = sadd.s32 %s229, %s230
        %s232 = smul.addr %s231, 8
        %s233 = scalar_lea.vmem %s3, %s232
        %s234 = smul.u32 %s21, 128
        %s235 = sld [smem:[#allocation2 + %s234]]
        %v236 = vld [vmem:[%s225] sm:$0xff]
        %v237 = vstv %s235
        %v238 = vmul.f32 %v237, %v236
        %v239 = vadd.f32 %v238, 0.0
        %s240 = sadd.s32 %s234, 1
        %s241 = sld [smem:[#allocation2 + %s240]]
        %v242 = vld [vmem:[%s225] sm:$0xff]
        %v243 = vld [vmem:[%s225 + $0x8] sm:$0xff]
        %v244 = vstv %s241
        %v245 = vmul.f32 %v244, %v242
        %v246 = vmul.f32 %v244, %v243
        %249 = vrot.lane.b32.xlu0 %v245, 127
        %v250 = vpop.permute.xlu0 %249
        %251 = vrot.lane.b32.xlu0 %v246, 127
        %v252 = vpop.permute.xlu0 %251
        %vm253 = vcmask 1039360
        %v254 = vsel %vm253, %v250, %v252
        %v256 = vadd.f32 %v239, %v254
        %s257 = sadd.s32 %s234, 2
        %s258 = sld [smem:[#allocation2 + %s257]]
        %v259 = vstv %s258
        %v260 = vmul.f32 %v259, %v242
        %v261 = vmul.f32 %v259, %v243
        %264 = vrot.lane.b32.xlu0 %v260, 126
        %v265 = vpop.permute.xlu0 %264
        %266 = vrot.lane.b32.xlu0 %v261, 126
        %v267 = vpop.permute.xlu0 %266
        %vm268 = vcmask 1031168
        %v269 = vsel %vm268, %v265, %v267
        %v271 = vadd.f32 %v256, %v269
        %s272 = sadd.s32 %s234, 3
        %s273 = sld [smem:[#allocation2 + %s272]]
        %v274 = vstv %s273
        %v275 = vmul.f32 %v274, %v242
        %v276 = vmul.f32 %v274, %v243
        %279 = vrot.lane.b32.xlu0 %v275, 125
        %v280 = vpop.permute.xlu0 %279
        %281 = vrot.lane.b32.xlu0 %v276, 125
        %v282 = vpop.permute.xlu0 %281
        %vm283 = vcmask 1022976
        %v284 = vsel %vm283, %v280, %v282
        %v286 = vadd.f32 %v271, %v284
        %s287 = sadd.s32 %s234, 4
        %s288 = sld [smem:[#allocation2 + %s287]]
        %v289 = vstv %s288
        %v290 = vmul.f32 %v289, %v242
        %v291 = vmul.f32 %v289, %v243
        %294 = vrot.lane.b32.xlu0 %v290, 124
        %v295 = vpop.permute.xlu0 %294
        %296 = vrot.lane.b32.xlu0 %v291, 124
        %v297 = vpop.permute.xlu0 %296
        %vm298 = vcmask 1014784
        %v299 = vsel %vm298, %v295, %v297
        %v301 = vadd.f32 %v286, %v299
        %s302 = sadd.s32 %s234, 5
        %s303 = sld [smem:[#allocation2 + %s302]]
        %v304 = vstv %s303
        %v305 = vmul.f32 %v304, %v242
        %v306 = vmul.f32 %v304, %v243
        %309 = vrot.lane.b32.xlu0 %v305, 123
        %v310 = vpop.permute.xlu0 %309
        %311 = vrot.lane.b32.xlu0 %v306, 123
        %v312 = vpop.permute.xlu0 %311
        %vm313 = vcmask 1006592
        %v314 = vsel %vm313, %v310, %v312
        %v316 = vadd.f32 %v301, %v314
        %s317 = sadd.s32 %s234, 6
        %s318 = sld [smem:[#allocation2 + %s317]]
        %v319 = vstv %s318
        %v320 = vmul.f32 %v319, %v242
        %v321 = vmul.f32 %v319, %v243
        %324 = vrot.lane.b32.xlu0 %v320, 122
        %v325 = vpop.permute.xlu0 %324
        %326 = vrot.lane.b32.xlu0 %v321, 122
        %v327 = vpop.permute.xlu0 %326
        %vm328 = vcmask 998400
        %v329 = vsel %vm328, %v325, %v327
        %v331 = vadd.f32 %v316, %v329
        %s332 = sadd.s32 %s234, 7
        %s333 = sld [smem:[#allocation2 + %s332]]
        %v334 = vstv %s333
        %v335 = vmul.f32 %v334, %v242
        %v336 = vmul.f32 %v334, %v243
        %339 = vrot.lane.b32.xlu0 %v335, 121
        %v340 = vpop.permute.xlu0 %339
        %341 = vrot.lane.b32.xlu0 %v336, 121
        %v342 = vpop.permute.xlu0 %341
        %vm343 = vcmask 990208
        %v344 = vsel %vm343, %v340, %v342
        %v346 = vadd.f32 %v331, %v344
        %s347 = sadd.s32 %s234, 8
        %s348 = sld [smem:[#allocation2 + %s347]]
        %v349 = vstv %s348
        %v350 = vmul.f32 %v349, %v242
        %v351 = vmul.f32 %v349, %v243
        %354 = vrot.lane.b32.xlu0 %v350, 120
        %v355 = vpop.permute.xlu0 %354
        %356 = vrot.lane.b32.xlu0 %v351, 120
        %v357 = vpop.permute.xlu0 %356
        %vm358 = vcmask 982016
        %v359 = vsel %vm358, %v355, %v357
        %v361 = vadd.f32 %v346, %v359
        %s362 = sadd.s32 %s234, 9
        %s363 = sld [smem:[#allocation2 + %s362]]
        %v364 = vstv %s363
        %v365 = vmul.f32 %v364, %v242
        %v366 = vmul.f32 %v364, %v243
        %369 = vrot.lane.b32.xlu0 %v365, 119
        %v370 = vpop.permute.xlu0 %369
        %371 = vrot.lane.b32.xlu0 %v366, 119
        %v372 = vpop.permute.xlu0 %371
        %vm373 = vcmask 973824
        %v374 = vsel %vm373, %v370, %v372
        %v376 = vadd.f32 %v361, %v374
        %s377 = sadd.s32 %s234, 10
        %s378 = sld [smem:[#allocation2 + %s377]]
        %v379 = vstv %s378
        %v380 = vmul.f32 %v379, %v242
        %v381 = vmul.f32 %v379, %v243
        %384 = vrot.lane.b32.xlu0 %v380, 118
        %v385 = vpop.permute.xlu0 %384
        %386 = vrot.lane.b32.xlu0 %v381, 118
        %v387 = vpop.permute.xlu0 %386
        %vm388 = vcmask 965632
        %v389 = vsel %vm388, %v385, %v387
        %v391 = vadd.f32 %v376, %v389
        %s392 = sadd.s32 %s234, 11
        %s393 = sld [smem:[#allocation2 + %s392]]
        %v394 = vstv %s393
        %v395 = vmul.f32 %v394, %v242
        %v396 = vmul.f32 %v394, %v243
        %399 = vrot.lane.b32.xlu0 %v395, 117
        %v400 = vpop.permute.xlu0 %399
        %401 = vrot.lane.b32.xlu0 %v396, 117
        %v402 = vpop.permute.xlu0 %401
        %vm403 = vcmask 957440
        %v404 = vsel %vm403, %v400, %v402
        %v406 = vadd.f32 %v391, %v404
        %s407 = sadd.s32 %s234, 12
        %s408 = sld [smem:[#allocation2 + %s407]]
        %v409 = vstv %s408
        %v410 = vmul.f32 %v409, %v242
        %v411 = vmul.f32 %v409, %v243
        %414 = vrot.lane.b32.xlu0 %v410, 116
        %v415 = vpop.permute.xlu0 %414
        %416 = vrot.lane.b32.xlu0 %v411, 116
        %v417 = vpop.permute.xlu0 %416
        %vm418 = vcmask 949248
        %v419 = vsel %vm418, %v415, %v417
        %v421 = vadd.f32 %v406, %v419
        %s422 = sadd.s32 %s234, 13
        %s423 = sld [smem:[#allocation2 + %s422]]
        %v424 = vstv %s423
        %v425 = vmul.f32 %v424, %v242
        %v426 = vmul.f32 %v424, %v243
        %429 = vrot.lane.b32.xlu0 %v425, 115
        %v430 = vpop.permute.xlu0 %429
        %431 = vrot.lane.b32.xlu0 %v426, 115
        %v432 = vpop.permute.xlu0 %431
        %vm433 = vcmask 941056
        %v434 = vsel %vm433, %v430, %v432
        %v436 = vadd.f32 %v421, %v434
        %s437 = sadd.s32 %s234, 14
        %s438 = sld [smem:[#allocation2 + %s437]]
        %v439 = vstv %s438
        %v440 = vmul.f32 %v439, %v242
        %v441 = vmul.f32 %v439, %v243
        %444 = vrot.lane.b32.xlu0 %v440, 114
        %v445 = vpop.permute.xlu0 %444
        %446 = vrot.lane.b32.xlu0 %v441, 114
        %v447 = vpop.permute.xlu0 %446
        %vm448 = vcmask 932864
        %v449 = vsel %vm448, %v445, %v447
        %v451 = vadd.f32 %v436, %v449
        %s452 = sadd.s32 %s234, 15
        %s453 = sld [smem:[#allocation2 + %s452]]
        %v454 = vstv %s453
        %v455 = vmul.f32 %v454, %v242
        %v456 = vmul.f32 %v454, %v243
        %459 = vrot.lane.b32.xlu0 %v455, 113
        %v460 = vpop.permute.xlu0 %459
        %461 = vrot.lane.b32.xlu0 %v456, 113
        %v462 = vpop.permute.xlu0 %461
        %vm463 = vcmask 924672
        %v464 = vsel %vm463, %v460, %v462
        %v466 = vadd.f32 %v451, %v464
        %s467 = sadd.s32 %s234, 16
        %s468 = sld [smem:[#allocation2 + %s467]]
        %v469 = vstv %s468
        %v470 = vmul.f32 %v469, %v242
        %v471 = vmul.f32 %v469, %v243
        %474 = vrot.lane.b32.xlu0 %v470, 112
        %v475 = vpop.permute.xlu0 %474
        %476 = vrot.lane.b32.xlu0 %v471, 112
        %v477 = vpop.permute.xlu0 %476
        %vm478 = vcmask 916480
        %v479 = vsel %vm478, %v475, %v477
        %v481 = vadd.f32 %v466, %v479
        %s482 = sadd.s32 %s234, 17
        %s483 = sld [smem:[#allocation2 + %s482]]
        %v484 = vstv %s483
        %v485 = vmul.f32 %v484, %v242
        %v486 = vmul.f32 %v484, %v243
        %489 = vrot.lane.b32.xlu0 %v485, 111
        %v490 = vpop.permute.xlu0 %489
        %491 = vrot.lane.b32.xlu0 %v486, 111
        %v492 = vpop.permute.xlu0 %491
        %vm493 = vcmask 908288
        %v494 = vsel %vm493, %v490, %v492
        %v496 = vadd.f32 %v481, %v494
        %s497 = sadd.s32 %s234, 18
        %s498 = sld [smem:[#allocation2 + %s497]]
        %v499 = vstv %s498
        %v500 = vmul.f32 %v499, %v242
        %v501 = vmul.f32 %v499, %v243
        %504 = vrot.lane.b32.xlu0 %v500, 110
        %v505 = vpop.permute.xlu0 %504
        %506 = vrot.lane.b32.xlu0 %v501, 110
        %v507 = vpop.permute.xlu0 %506
        %vm508 = vcmask 900096
        %v509 = vsel %vm508, %v505, %v507
        %v511 = vadd.f32 %v496, %v509
        %s512 = sadd.s32 %s234, 19
        %s513 = sld [smem:[#allocation2 + %s512]]
        %v514 = vstv %s513
        %v515 = vmul.f32 %v514, %v242
        %v516 = vmul.f32 %v514, %v243
        %519 = vrot.lane.b32.xlu0 %v515, 109
        %v520 = vpop.permute.xlu0 %519
        %521 = vrot.lane.b32.xlu0 %v516, 109
        %v522 = vpop.permute.xlu0 %521
        %vm523 = vcmask 891904
        %v524 = vsel %vm523, %v520, %v522
        %v526 = vadd.f32 %v511, %v524
        %s527 = sadd.s32 %s234, 20
        %s528 = sld [smem:[#allocation2 + %s527]]
        %v529 = vstv %s528
        %v530 = vmul.f32 %v529, %v242
        %v531 = vmul.f32 %v529, %v243
        %534 = vrot.lane.b32.xlu0 %v530, 108
        %v535 = vpop.permute.xlu0 %534
        %536 = vrot.lane.b32.xlu0 %v531, 108
        %v537 = vpop.permute.xlu0 %536
        %vm538 = vcmask 883712
        %v539 = vsel %vm538, %v535, %v537
        %v541 = vadd.f32 %v526, %v539
        %s542 = sadd.s32 %s234, 21
        %s543 = sld [smem:[#allocation2 + %s542]]
        %v544 = vstv %s543
        %v545 = vmul.f32 %v544, %v242
        %v546 = vmul.f32 %v544, %v243
        %549 = vrot.lane.b32.xlu0 %v545, 107
        %v550 = vpop.permute.xlu0 %549
        %551 = vrot.lane.b32.xlu0 %v546, 107
        %v552 = vpop.permute.xlu0 %551
        %vm553 = vcmask 875520
        %v554 = vsel %vm553, %v550, %v552
        %v556 = vadd.f32 %v541, %v554
        %s557 = sadd.s32 %s234, 22
        %s558 = sld [smem:[#allocation2 + %s557]]
        %v559 = vstv %s558
        %v560 = vmul.f32 %v559, %v242
        %v561 = vmul.f32 %v559, %v243
        %564 = vrot.lane.b32.xlu0 %v560, 106
        %v565 = vpop.permute.xlu0 %564
        %566 = vrot.lane.b32.xlu0 %v561, 106
        %v567 = vpop.permute.xlu0 %566
        %vm568 = vcmask 867328
        %v569 = vsel %vm568, %v565, %v567
        %v571 = vadd.f32 %v556, %v569
        %s572 = sadd.s32 %s234, 23
        %s573 = sld [smem:[#allocation2 + %s572]]
        %v574 = vstv %s573
        %v575 = vmul.f32 %v574, %v242
        %v576 = vmul.f32 %v574, %v243
        %579 = vrot.lane.b32.xlu0 %v575, 105
        %v580 = vpop.permute.xlu0 %579
        %581 = vrot.lane.b32.xlu0 %v576, 105
        %v582 = vpop.permute.xlu0 %581
        %vm583 = vcmask 859136
        %v584 = vsel %vm583, %v580, %v582
        %v586 = vadd.f32 %v571, %v584
        %s587 = sadd.s32 %s234, 24
        %s588 = sld [smem:[#allocation2 + %s587]]
        %v589 = vstv %s588
        %v590 = vmul.f32 %v589, %v242
        %v591 = vmul.f32 %v589, %v243
        %594 = vrot.lane.b32.xlu0 %v590, 104
        %v595 = vpop.permute.xlu0 %594
        %596 = vrot.lane.b32.xlu0 %v591, 104
        %v597 = vpop.permute.xlu0 %596
        %vm598 = vcmask 850944
        %v599 = vsel %vm598, %v595, %v597
        %v601 = vadd.f32 %v586, %v599
        %s602 = sld [smem:[#allocation4 + %s21]]
        %v603 = vstv %s602
        %v604 = vadd.f32 %v601, %v603
        %605 = vst [vmem:[%s233] sm:$0xff] %v604
        %p606 = scmp.lt.s32.totalorder %s20, 1
        %s607 = scalar_select %p606, %s20, 1
        %p608 = scmp.lt.s32.totalorder %s21, 19
        %s609 = scalar_select %p608, %s21, 19
        %s610 = smul.addr %s607, 20
        %s611 = sadd.s32 %s609, %s610
        %s612 = smul.addr %s611, 8
        %s613 = scalar_lea.vmem %s3, %s612
        // Predicated region
        $region41: #{dmsanet_forward.13} parent=31 // pred_check
          %p614 = pneg %p118
        $region42: #{dmsanet_forward.13} parent=31 // pred_check_branch
          %616 = sbr.rel (%p614) target = $region44
        $region43: #{dmsanet_forward.13} parent=31 // pred_region
          _
        $region44: #{dmsanet_forward.13} parent=31 // pred_fallthru
          _
      $region32: #{dmsanet_forward.13} parent=5 // pred_fallthru
        _
      %p617 = scmp.le.s32.totalorder 2, %s11
      // Predicated region
      $region45: #{dmsanet_forward.13} parent=5 // pred_check
        %p618 = pneg %p617
      $region46: #{dmsanet_forward.13} parent=5 // pred_check_branch
        %620 = sbr.rel (%p618) target = $region48
      $region47: #{dmsanet_forward.13} parent=5 // pred_region
        %s621 = ssub.s32 %s11, 2
        // Predicated region
        $region49: #{dmsanet_forward.13} parent=47 // pred_check
          %p622 = pneg %p124
        $region50: #{dmsanet_forward.13} parent=47 // pred_check_branch
          %624 = sbr.rel (%p622) target = $region52
        $region51: #{dmsanet_forward.13} parent=47 // pred_region
          %p625 = scmp.lt.s32.totalorder %s22, 1
          %s626 = scalar_select %p625, %s22, 1
          %p627 = scmp.lt.s32.totalorder %s23, 19
          %s628 = scalar_select %p627, %s23, 19
          %s629 = smul.addr %s626, 20
          %s630 = sadd.s32 %s628, %s629
          %s631 = smul.addr %s630, 8
          %s632 = scalar_lea.vmem %s3, %s631
        $region52: #{dmsanet_forward.13} parent=47 // pred_fallthru
          _
      $region48: #{dmsanet_forward.13} parent=5 // pred_fallthru
        _
    $region6: #{dmsanet_forward.13} parent=1 // loop_footer
      %s15 = sadd.s32 1, %s11
    $region7: #{dmsanet_forward.13} parent=1 // loop_footer_branch
      %10 = sbr.rel target = $region3
    $region8: #{dmsanet_forward.13} parent=1 // loop_exit
      _
    %633 = vsyncpa [#allocation3], 1
    %s634 = scalar_lea.sflag [#allocation3], 1
    %635 = vsyncpa %s634, 1
    %636 = vsyncpa [#allocation5], 1

// kernel: dmsanet_forward.16
$region0: #{dmsanet_forward.16}
  #allocation0 [shape = 'u32[]', space=smem, size = 0x4, offset = 0x4, fixed_abs, tag = 'smem constant byte address 0x4 - core index']
  #allocation1 [shape = 'u32[72,128]{1,0:T(1,128)}', space=vmem, size = 0x9000, scoped, tag = 'internal scratch']
  %s0 = inlined_call_operand.vmem [shape: f32[2,120,3], index: 0, kind: input, shape index: {}]
  %s1 = inlined_call_operand.vmem [shape: f32[2,120,3], index: 1, kind: output, shape index: {}]
  %s2 = sld [smem:[#allocation0]]
  $region37: #{dmsanet_forward.16} parent=0
    _
  %s4 = ssub.s32 1, %s2
  %s5 = scalar_select 0, %s4, %s2
  loop: start=0, step=1, limit=4
  $region2: #{dmsanet_forward.16} parent=0 // loop_pre_header
    _
  $region3: #{dmsanet_forward.16} parent=0 // loop_header
    %s7 = sphi 0, %s11
    %p8 = scmp.ge.s32.totalorder %s7, 4
    %s17 = sphi 0, %s19
    %s20 = sphi 0, %s17
    %s21 = sphi 0, %s20
    %s37 = sphi 0, %s21
    %s43 = sphi 0, %s45
    %s46 = sphi 0, %s43
    %s47 = sphi 0, %s46
    %s63 = sphi 0, %s47
  $region4: #{dmsanet_forward.16} parent=0 // loop_header_branch
    %10 = sbr.rel (%p8) target = $region8
  $region5: #{dmsanet_forward.16} parent=0 // loop_body
    %s12 = ssub.s32 %s7, 1
    %s13 = ssub.s32 %s7, 2
    %s14 = sadd.s32 %s7, 1
    %s15 = ssub.s32 %s7, %s14
    %p16 = scmp.eq.s32.totalorder %s15, 0
    %s18 = sadd.s32 %s17, 1
    %s19 = scalar_select %p16, %s17, %s18
    %p22 = pneg %p16
    %p23 = scmp.eq.s32.totalorder %s7, 1
    %p24 = por %p22, %p23
    %p25 = scmp.ne.s32.totalorder %s17, %s20
    %p26 = scmp.eq.s32.totalorder %s7, 0
    %p27 = por %p25, %p26
    %p28 = scmp.ne.s32.totalorder %s17, %s20
    %p29 = scmp.eq.s32.totalorder %s12, 1
    %p30 = por %p28, %p29
    %p31 = scmp.ne.s32.totalorder %s20, %s21
    %p32 = scmp.eq.s32.totalorder %s12, 0
    %p33 = por %p31, %p32
    %p34 = scmp.ne.s32.totalorder %s20, %s21
    %p35 = scmp.eq.s32.totalorder %s13, 1
    %p36 = por %p34, %p35
    %p38 = scmp.ne.s32.totalorder %s21, %s37
    %p39 = scmp.eq.s32.totalorder %s13, 0
    %p40 = por %p38, %p39
    %s41 = ssub.s32 %s7, %s14
    %p42 = scmp.eq.s32.totalorder %s41, 0
    %s44 = sadd.s32 %s43, 1
    %s45 = scalar_select %p42, %s43, %s44
    %p48 = pneg %p42
    %p49 = scmp.eq.s32.totalorder %s7, 1
    %p50 = por %p48, %p49
    %p51 = scmp.ne.s32.totalorder %s43, %s46
    %p52 = scmp.eq.s32.totalorder %s7, 0
    %p53 = por %p51, %p52
    %p54 = scmp.ne.s32.totalorder %s43, %s46
    %p55 = scmp.eq.s32.totalorder %s12, 1
    %p56 = por %p54, %p55
    %p57 = scmp.ne.s32.totalorder %s46, %s47
    %p58 = scmp.eq.s32.totalorder %s12, 0
    %p59 = por %p57, %p58
    %p60 = scmp.ne.s32.totalorder %s46, %s47
    %p61 = scmp.eq.s32.totalorder %s13, 1
    %p62 = por %p60, %p61
    %p64 = scmp.ne.s32.totalorder %s47, %s63
    %p65 = scmp.eq.s32.totalorder %s13, 0
    %p66 = por %p64, %p65
    %p67 = scmp.le.s32.totalorder 1, %s7
    %p68 = scmp.lt.s32.totalorder %s7, 3
    %p69 = pnand %p67, %p68
    %p70 = pneg %p69
    // Predicated region
    $region9: #{dmsanet_forward.16} parent=5 // pred_check
      _
    $region10: #{dmsanet_forward.16} parent=5 // pred_check_branch
      %72 = sbr.rel (%p69) target = $region12
    $region11: #{dmsanet_forward.16} parent=5 // pred_region
      %s73 = ssub.s32 %s7, 1
    $region12: #{dmsanet_forward.16} parent=5 // pred_fallthru
      _
    %p74 = scmp.lt.s32.totalorder %s7, 2
    // Predicated region
    $region13: #{dmsanet_forward.16} parent=5 // pred_check
      %p75 = pneg %p74
    $region14: #{dmsanet_forward.16} parent=5 // pred_check_branch
      %77 = sbr.rel (%p75) target = $region16
    $region15: #{dmsanet_forward.16} parent=5 // pred_region
      // Predicated region
      $region17: #{dmsanet_forward.16} parent=15 // pred_check
        %p78 = pneg %p27
      $region18: #{dmsanet_forward.16} parent=15 // pred_check_branch
        %80 = sbr.rel (%p78) target = $region20
      $region19: #{dmsanet_forward.16} parent=15 // pred_region
        %p81 = scmp.lt.s32.totalorder %s7, 1
        %s82 = scalar_select %p81, %s7, 1
        %s83 = smul.addr %s82, 15
        %s84 = smul.addr %s83, 8
        %s85 = scalar_lea.vmem %s0, %s84
      $region20: #{dmsanet_forward.16} parent=15 // pred_fallthru
        _
    $region16: #{dmsanet_forward.16} parent=5 // pred_fallthru
      _
    %p86 = scmp.le.s32.totalorder 1, %s7
    %p87 = scmp.lt.s32.totalorder %s7, 3
    %p88 = pnand %p86, %p87
    %p89 = pneg %p88
    // Predicated region
    $region21: #{dmsanet_forward.16} parent=5 // pred_check
      _
    $region22: #{dmsanet_forward.16} parent=5 // pred_check_branch
      %91 = sbr.rel (%p88) target = $region24
    $region23: #{dmsanet_forward.16} parent=5 // pred_region
      %s92 = ssub.s32 %s7, 1
      %p93 = scmp.lt.s32.totalorder %s12, 1
      %s94 = scalar_select %p93, %s12, 1
      %s95 = smul.addr %s94, 15
      %s96 = smul.addr %s95, 8
      %s97 = scalar_lea.vmem %s0, %s96
      %p98 = pneg %p33
      %p99 = pneg %p30
      %p100 = pneg %p59
      %p101 = pneg %p56
      %p102 = scmp.lt.s32.totalorder %s12, 1
      %s103 = scalar_select %p102, %s12, 1
      %s104 = smul.addr %s103, 15
      %s105 = smul.addr %s104, 8
      %s106 = scalar_lea.vmem %s1, %s105
      %p107 = scmp.lt.s32.totalorder %s12, 1
      %s108 = scalar_select %p107, %s12, 1
      %s109 = smul.addr %s108, 15
      %s110 = smul.addr %s109, 8
      %s111 = scalar_lea.vmem %s0, %s110
      %p112 = scmp.lt.s32.totalorder %s12, 1
      %s113 = scalar_select %p112, %s12, 1
      %s114 = smul.addr %s113, 15
      %s115 = smul.addr %s114, 8
      %s116 = scalar_lea.vmem %s1, %s115
      %v117 = vld [vmem:[%s111] sm:$0xff]
      %v118 = vld [vmem:[%s111 + $0x8] sm:$0xff]
      %v119 = vld [vmem:[%s111 + $0x10] sm:$0xff]
      %v120 = vld [vmem:[%s111 + $0x18] sm:$0xff]
      %v121 = vld [vmem:[%s111 + $0x20] sm:$0xff]
      %v122 = vld [vmem:[%s111 + $0x28] sm:$0xff]
      %v123 = vld [vmem:[%s111 + $0x30] sm:$0xff]
      %v124 = vld [vmem:[%s111 + $0x38] sm:$0xff]
      %v125 = vld [vmem:[%s111 + $0x40] sm:$0xff]
      %v126 = vld [vmem:[%s111 + $0x48] sm:$0xff]
      %v127 = vld [vmem:[%s111 + $0x50] sm:$0xff]
      %v128 = vld [vmem:[%s111 + $0x58] sm:$0xff]
      %v129 = vld [vmem:[%s111 + $0x60] sm:$0xff]
      %v130 = vld [vmem:[%s111 + $0x68] sm:$0xff]
      %v131 = vld [vmem:[%s111 + $0x70] sm:$0xff]
      %vm132 = vcmask 23552
      %v133 = vsel %vm132, %v117, 0.0
      %134 = vadd.xlane.f32.xlu0 %v133
      %v135 = vpop.xlane.xlu0 %134
      %v136 = vsel %vm132, %v118, 0.0
      %137 = vadd.xlane.f32.xlu0 %v136
      %v138 = vpop.xlane.xlu0 %137
      %v139 = vsel %vm132, %v119, 0.0
      %140 = vadd.xlane.f32.xlu0 %v139
      %v141 = vpop.xlane.xlu0 %140
      %v142 = vsel %vm132, %v120, 0.0
      %143 = vadd.xlane.f32.xlu0 %v142
      %v144 = vpop.xlane.xlu0 %143
      %v145 = vsel %vm132, %v121, 0.0
      %146 = vadd.xlane.f32.xlu0 %v145
      %v147 = vpop.xlane.xlu0 %146
      %v148 = vsel %vm132, %v122, 0.0
      %149 = vadd.xlane.f32.xlu0 %v148
      %v150 = vpop.xlane.xlu0 %149
      %v151 = vsel %vm132, %v123, 0.0
      %152 = vadd.xlane.f32.xlu0 %v151
      %v153 = vpop.xlane.xlu0 %152
      %v154 = vsel %vm132, %v124, 0.0
      %155 = vadd.xlane.f32.xlu0 %v154
      %v156 = vpop.xlane.xlu0 %155
      %v157 = vsel %vm132, %v125, 0.0
      %158 = vadd.xlane.f32.xlu0 %v157
      %v159 = vpop.xlane.xlu0 %158
      %v160 = vsel %vm132, %v126, 0.0
      %161 = vadd.xlane.f32.xlu0 %v160
      %v162 = vpop.xlane.xlu0 %161
      %v163 = vsel %vm132, %v127, 0.0
      %164 = vadd.xlane.f32.xlu0 %v163
      %v165 = vpop.xlane.xlu0 %164
      %v166 = vsel %vm132, %v128, 0.0
      %167 = vadd.xlane.f32.xlu0 %v166
      %v168 = vpop.xlane.xlu0 %167
      %v169 = vsel %vm132, %v129, 0.0
      %170 = vadd.xlane.f32.xlu0 %v169
      %v171 = vpop.xlane.xlu0 %170
      %v172 = vsel %vm132, %v130, 0.0
      %173 = vadd.xlane.f32.xlu0 %v172
      %v174 = vpop.xlane.xlu0 %173
      %v175 = vsel %vm132, %v131, 0.0
      %176 = vadd.xlane.f32.xlu0 %v175
      %v177 = vpop.xlane.xlu0 %176
      %v178 = vrcp.pop 3.0
      %v179 = vmul.f32 3.0, %v178
      %v180 = vsub.f32 1.0, %v179
      %v181 = vmul.f32 %v178, %v180
      %v182 = vadd.f32 %v178, %v181
      %vm183 = vweird.f32 %v178
      %v184 = vsel %vm183, %v178, %v182
      %v185 = vmul.f32 %v135, %v184
      %v186 = vmul.f32 %v138, %v184
      %v187 = vmul.f32 %v141, %v184
      %v188 = vmul.f32 %v144, %v184
      %v189 = vmul.f32 %v147, %v184
      %v190 = vmul.f32 %v150, %v184
      %v191 = vmul.f32 %v153, %v184
      %v192 = vmul.f32 %v156, %v184
      %v193 = vmul.f32 %v159, %v184
      %v194 = vmul.f32 %v162, %v184
      %v195 = vmul.f32 %v165, %v184
      %v196 = vmul.f32 %v168, %v184
      %v197 = vmul.f32 %v171, %v184
      %v198 = vmul.f32 %v174, %v184
      %v199 = vmul.f32 %v177, %v184
      %v200 = vsub.f32 0.0, %v185
      %v201 = vsub.f32 0.0, %v186
      %v202 = vsub.f32 0.0, %v187
      %v203 = vsub.f32 0.0, %v188
      %v204 = vsub.f32 0.0, %v189
      %v205 = vsub.f32 0.0, %v190
      %v206 = vsub.f32 0.0, %v191
      %v207 = vsub.f32 0.0, %v192
      %v208 = vsub.f32 0.0, %v193
      %v209 = vsub.f32 0.0, %v194
      %v210 = vsub.f32 0.0, %v195
      %v211 = vsub.f32 0.0, %v196
      %v212 = vsub.f32 0.0, %v197
      %v213 = vsub.f32 0.0, %v198
      %v214 = vsub.f32 0.0, %v199
      %v215 = vmul.f32 %v200, 1.442695
      %v216 = vpow.pop %v215
      %v217 = vmul.f32 %v201, 1.442695
      %v218 = vpow.pop %v217
      %v219 = vmul.f32 %v202, 1.442695
      %v220 = vpow.pop %v219
      %v221 = vmul.f32 %v203, 1.442695
      %v222 = vpow.pop %v221
      %v223 = vmul.f32 %v204, 1.442695
      %v224 = vpow.pop %v223
      %v225 = vmul.f32 %v205, 1.442695
      %v226 = vpow.pop %v225
      %v227 = vmul.f32 %v206, 1.442695
      %v228 = vpow.pop %v227
      %v229 = vmul.f32 %v207, 1.442695
      %v230 = vpow.pop %v229
      %v231 = vmul.f32 %v208, 1.442695
      %v232 = vpow.pop %v231
      %v233 = vmul.f32 %v209, 1.442695
      %v234 = vpow.pop %v233
      %v235 = vmul.f32 %v210, 1.442695
      %v236 = vpow.pop %v235
      %v237 = vmul.f32 %v211, 1.442695
      %v238 = vpow.pop %v237
      %v239 = vmul.f32 %v212, 1.442695
      %v240 = vpow.pop %v239
      %v241 = vmul.f32 %v213, 1.442695
      %v242 = vpow.pop %v241
      %v243 = vmul.f32 %v214, 1.442695
      %v244 = vpow.pop %v243
      %v245 = vadd.f32 %v216, 1.0
      %v246 = vadd.f32 %v218, 1.0
      %v247 = vadd.f32 %v220, 1.0
      %v248 = vadd.f32 %v222, 1.0
      %v249 = vadd.f32 %v224, 1.0
      %v250 = vadd.f32 %v226, 1.0
      %v251 = vadd.f32 %v228, 1.0
      %v252 = vadd.f32 %v230, 1.0
      %v253 = vadd.f32 %v232, 1.0
      %v254 = vadd.f32 %v234, 1.0
      %v255 = vadd.f32 %v236, 1.0
      %v256 = vadd.f32 %v238, 1.0
      %v257 = vadd.f32 %v240, 1.0
      %v258 = vadd.f32 %v242, 1.0
      %v259 = vadd.f32 %v244, 1.0
      %v260 = vrcp.pop %v245
      %v261 = vmul.f32 %v245, %v260
      %v262 = vsub.f32 1.0, %v261
      %v263 = vmul.f32 %v260, %v262
      %v264 = vadd.f32 %v260, %v263
      %vm265 = vweird.f32 %v245
      %vm266 = vweird.f32 %v260
      %vm267 = vmor %vm265, %vm266
      %v268 = vsel %vm267, %v260, %v264
      %v269 = vand.u32 2147483647, %v245
      %vm270 = vcmp.eq.f32.partialorder %v269, 8.507059e+37
      %v271 = vand.u32 %v245, 2147483648
      %v272 = vor.u32 1.1754944e-38, %v271
      %v273 = vsel %vm270, %v272, %v268
      %v274 = vmul.f32 1.0, %v273
      %v275 = vrcp.pop %v246
      %v276 = vmul.f32 %v246, %v275
      %v277 = vsub.f32 1.0, %v276
      %v278 = vmul.f32 %v275, %v277
      %v279 = vadd.f32 %v275, %v278
      %vm280 = vweird.f32 %v246
      %vm281 = vweird.f32 %v275
      %vm282 = vmor %vm280, %vm281
      %v283 = vsel %vm282, %v275, %v279
      %v284 = vand.u32 2147483647, %v246
      %vm285 = vcmp.eq.f32.partialorder %v284, 8.507059e+37
      %v286 = vand.u32 %v246, 2147483648
      %v287 = vor.u32 1.1754944e-38, %v286
      %v288 = vsel %vm285, %v287, %v283
      %v289 = vmul.f32 1.0, %v288
      %v290 = vrcp.pop %v247
      %v291 = vmul.f32 %v247, %v290
      %v292 = vsub.f32 1.0, %v291
      %v293 = vmul.f32 %v290, %v292
      %v294 = vadd.f32 %v290, %v293
      %vm295 = vweird.f32 %v247
      %vm296 = vweird.f32 %v290
      %vm297 = vmor %vm295, %vm296
      %v298 = vsel %vm297, %v290, %v294
      %v299 = vand.u32 2147483647, %v247
      %vm300 = vcmp.eq.f32.partialorder %v299, 8.507059e+37
      %v301 = vand.u32 %v247, 2147483648
      %v302 = vor.u32 1.1754944e-38, %v301
      %v303 = vsel %vm300, %v302, %v298
      %v304 = vmul.f32 1.0, %v303
      %v305 = vrcp.pop %v248
      %v306 = vmul.f32 %v248, %v305
      %v307 = vsub.f32 1.0, %v306
      %v308 = vmul.f32 %v305, %v307
      %v309 = vadd.f32 %v305, %v308
      %vm310 = vweird.f32 %v248
      %vm311 = vweird.f32 %v305
      %vm312 = vmor %vm310, %vm311
      %v313 = vsel %vm312, %v305, %v309
      %v314 = vand.u32 2147483647, %v248
      %vm315 = vcmp.eq.f32.partialorder %v314, 8.507059e+37
      %v316 = vand.u32 %v248, 2147483648
      %v317 = vor.u32 1.1754944e-38, %v316
      %v318 = vsel %vm315, %v317, %v313
      %v319 = vmul.f32 1.0, %v318
      %v320 = vrcp.pop %v249
      %v321 = vmul.f32 %v249, %v320
      %v322 = vsub.f32 1.0, %v321
      %v323 = vmul.f32 %v320, %v322
      %v324 = vadd.f32 %v320, %v323
      %vm325 = vweird.f32 %v249
      %vm326 = vweird.f32 %v320
      %vm327 = vmor %vm325, %vm326
      %v328 = vsel %vm327, %v320, %v324
      %v329 = vand.u32 2147483647, %v249
      %vm330 = vcmp.eq.f32.partialorder %v329, 8.507059e+37
      %v331 = vand.u32 %v249, 2147483648
      %v332 = vor.u32 1.1754944e-38, %v331
      %v333 = vsel %vm330, %v332, %v328
      %v334 = vmul.f32 1.0, %v333
      %v335 = vrcp.pop %v250
      %v336 = vmul.f32 %v250, %v335
      %v337 = vsub.f32 1.0, %v336
      %v338 = vmul.f32 %v335, %v337
      %v339 = vadd.f32 %v335, %v338
      %vm340 = vweird.f32 %v250
      %vm341 = vweird.f32 %v335
      %vm342 = vmor %vm340, %vm341
      %v343 = vsel %vm342, %v335, %v339
      %v344 = vand.u32 2147483647, %v250
      %vm345 = vcmp.eq.f32.partialorder %v344, 8.507059e+37
      %v346 = vand.u32 %v250, 2147483648
      %v347 = vor.u32 1.1754944e-38, %v346
      %v348 = vsel %vm345, %v347, %v343
      %v349 = vmul.f32 1.0, %v348
      %v350 = vrcp.pop %v251
      %v351 = vmul.f32 %v251, %v350
      %v352 = vsub.f32 1.0, %v351
      %v353 = vmul.f32 %v350, %v352
      %v354 = vadd.f32 %v350, %v353
      %vm355 = vweird.f32 %v251
      %vm356 = vweird.f32 %v350
      %vm357 = vmor %vm355, %vm356
      %v358 = vsel %vm357, %v350, %v354
      %v359 = vand.u32 2147483647, %v251
      %vm360 = vcmp.eq.f32.partialorder %v359, 8.507059e+37
      %v361 = vand.u32 %v251, 2147483648
      %v362 = vor.u32 1.1754944e-38, %v361
      %v363 = vsel %vm360, %v362, %v358
      %v364 = vmul.f32 1.0, %v363
      %v365 = vrcp.pop %v252
      %v366 = vmul.f32 %v252, %v365
      %v367 = vsub.f32 1.0, %v366
      %v368 = vmul.f32 %v365, %v367
      %v369 = vadd.f32 %v365, %v368
      %vm370 = vweird.f32 %v252
      %vm371 = vweird.f32 %v365
      %vm372 = vmor %vm370, %vm371
      %v373 = vsel %vm372, %v365, %v369
      %v374 = vand.u32 2147483647, %v252
      %vm375 = vcmp.eq.f32.partialorder %v374, 8.507059e+37
      %v376 = vand.u32 %v252, 2147483648
      %v377 = vor.u32 1.1754944e-38, %v376
      %v378 = vsel %vm375, %v377, %v373
      %v379 = vmul.f32 1.0, %v378
      %v380 = vrcp.pop %v253
      %v381 = vmul.f32 %v253, %v380
      %v382 = vsub.f32 1.0, %v381
      %v383 = vmul.f32 %v380, %v382
      %v384 = vadd.f32 %v380, %v383
      %vm385 = vweird.f32 %v253
      %vm386 = vweird.f32 %v380
      %vm387 = vmor %vm385, %vm386
      %v388 = vsel %vm387, %v380, %v384
      %v389 = vand.u32 2147483647, %v253
      %vm390 = vcmp.eq.f32.partialorder %v389, 8.507059e+37
      %v391 = vand.u32 %v253, 2147483648
      %v392 = vor.u32 1.1754944e-38, %v391
      %v393 = vsel %vm390, %v392, %v388
      %v394 = vmul.f32 1.0, %v393
      %v395 = vrcp.pop %v254
      %v396 = vmul.f32 %v254, %v395
      %v397 = vsub.f32 1.0, %v396
      %v398 = vmul.f32 %v395, %v397
      %v399 = vadd.f32 %v395, %v398
      %vm400 = vweird.f32 %v254
      %vm401 = vweird.f32 %v395
      %vm402 = vmor %vm400, %vm401
      %v403 = vsel %vm402, %v395, %v399
      %v404 = vand.u32 2147483647, %v254
      %vm405 = vcmp.eq.f32.partialorder %v404, 8.507059e+37
      %v406 = vand.u32 %v254, 2147483648
      %v407 = vor.u32 1.1754944e-38, %v406
      %v408 = vsel %vm405, %v407, %v403
      %v409 = vmul.f32 1.0, %v408
      %v410 = vrcp.pop %v255
      %v411 = vmul.f32 %v255, %v410
      %v412 = vsub.f32 1.0, %v411
      %v413 = vmul.f32 %v410, %v412
      %v414 = vadd.f32 %v410, %v413
      %vm415 = vweird.f32 %v255
      %vm416 = vweird.f32 %v410
      %vm417 = vmor %vm415, %vm416
      %v418 = vsel %vm417, %v410, %v414
      %v419 = vand.u32 2147483647, %v255
      %vm420 = vcmp.eq.f32.partialorder %v419, 8.507059e+37
      %v421 = vand.u32 %v255, 2147483648
      %v422 = vor.u32 1.1754944e-38, %v421
      %v423 = vsel %vm420, %v422, %v418
      %v424 = vmul.f32 1.0, %v423
      %v425 = vrcp.pop %v256
      %v426 = vmul.f32 %v256, %v425
      %v427 = vsub.f32 1.0, %v426
      %v428 = vmul.f32 %v425, %v427
      %v429 = vadd.f32 %v425, %v428
      %vm430 = vweird.f32 %v256
      %vm431 = vweird.f32 %v425
      %vm432 = vmor %vm430, %vm431
      %v433 = vsel %vm432, %v425, %v429
      %v434 = vand.u32 2147483647, %v256
      %vm435 = vcmp.eq.f32.partialorder %v434, 8.507059e+37
      %v436 = vand.u32 %v256, 2147483648
      %v437 = vor.u32 1.1754944e-38, %v436
      %v438 = vsel %vm435, %v437, %v433
      %v439 = vmul.f32 1.0, %v438
      %v440 = vrcp.pop %v257
      %v441 = vmul.f32 %v257, %v440
      %v442 = vsub.f32 1.0, %v441
      %v443 = vmul.f32 %v440, %v442
      %v444 = vadd.f32 %v440, %v443
      %vm445 = vweird.f32 %v257
      %vm446 = vweird.f32 %v440
      %vm447 = vmor %vm445, %vm446
      %v448 = vsel %vm447, %v440, %v444
      %v449 = vand.u32 2147483647, %v257
      %vm450 = vcmp.eq.f32.partialorder %v449, 8.507059e+37
      %v451 = vand.u32 %v257, 2147483648
      %v452 = vor.u32 1.1754944e-38, %v451
      %v453 = vsel %vm450, %v452, %v448
      %v454 = vmul.f32 1.0, %v453
      %v455 = vrcp.pop %v258
      %v456 = vmul.f32 %v258, %v455
      %v457 = vsub.f32 1.0, %v456
      %v458 = vmul.f32 %v455, %v457
      %v459 = vadd.f32 %v455, %v458
      %vm460 = vweird.f32 %v258
      %vm461 = vweird.f32 %v455
      %vm462 = vmor %vm460, %vm461
      %v463 = vsel %vm462, %v455, %v459
      %v464 = vand.u32 2147483647, %v258
      %vm465 = vcmp.eq.f32.partialorder %v464, 8.507059e+37
      %v466 = vand.u32 %v258, 2147483648
      %v467 = vor.u32 1.1754944e-38, %v466
      %v468 = vsel %vm465, %v467, %v463
      %v469 = vmul.f32 1.0, %v468
      %v470 = vrcp.pop %v259
      %v471 = vmul.f32 %v259, %v470
      %v472 = vsub.f32 1.0, %v471
      %v473 = vmul.f32 %v470, %v472
      %v474 = vadd.f32 %v470, %v473
      %vm475 = vweird.f32 %v259
      %vm476 = vweird.f32 %v470
      %vm477 = vmor %vm475, %vm476
      %v478 = vsel %vm477, %v470, %v474
      %v479 = vand.u32 2147483647, %v259
      %vm480 = vcmp.eq.f32.partialorder %v479, 8.507059e+37
      %v481 = vand.u32 %v259, 2147483648
      %v482 = vor.u32 1.1754944e-38, %v481
      %v483 = vsel %vm480, %v482, %v478
      %v484 = vmul.f32 1.0, %v483
      %v485 = vmul.f32 %v117, %v274
      %v486 = vmul.f32 %v118, %v289
      %v487 = vmul.f32 %v119, %v304
      %v488 = vmul.f32 %v120, %v319
      %v489 = vmul.f32 %v121, %v334
      %v490 = vmul.f32 %v122, %v349
      %v491 = vmul.f32 %v123, %v364
      %v492 = vmul.f32 %v124, %v379
      %v493 = vmul.f32 %v125, %v394
      %v494 = vmul.f32 %v126, %v409
      %v495 = vmul.f32 %v127, %v424
      %v496 = vmul.f32 %v128, %v439
      %v497 = vmul.f32 %v129, %v454
      %v498 = vmul.f32 %v130, %v469
      %v499 = vmul.f32 %v131, %v484
      %500 = vst.msk [vmem:[%s116] sm:$0xff] %vm132, %v485
      %501 = vst.msk [vmem:[%s116 + $0x8] sm:$0xff] %vm132, %v486
      %502 = vst.msk [vmem:[%s116 + $0x10] sm:$0xff] %vm132, %v487
      %503 = vst.msk [vmem:[%s116 + $0x18] sm:$0xff] %vm132, %v488
      %504 = vst.msk [vmem:[%s116 + $0x20] sm:$0xff] %vm132, %v489
      %505 = vst.msk [vmem:[%s116 + $0x28] sm:$0xff] %vm132, %v490
      %506 = vst.msk [vmem:[%s116 + $0x30] sm:$0xff] %vm132, %v491
      %507 = vst.msk [vmem:[%s116 + $0x38] sm:$0xff] %vm132, %v492
      %508 = vst.msk [vmem:[%s116 + $0x40] sm:$0xff] %vm132, %v493
      %509 = vst.msk [vmem:[%s116 + $0x48] sm:$0xff] %vm132, %v494
      %510 = vst.msk [vmem:[%s116 + $0x50] sm:$0xff] %vm132, %v495
      %511 = vst.msk [vmem:[%s116 + $0x58] sm:$0xff] %vm132, %v496
      %512 = vst.msk [vmem:[%s116 + $0x60] sm:$0xff] %vm132, %v497
      %513 = vst.msk [vmem:[%s116 + $0x68] sm:$0xff] %vm132, %v498
      %514 = vst.msk [vmem:[%s116 + $0x70] sm:$0xff] %vm132, %v499
      %p515 = scmp.lt.s32.totalorder %s12, 1
      %s516 = scalar_select %p515, %s12, 1
      %s517 = smul.addr %s516, 15
      %s518 = smul.addr %s517, 8
      %s519 = scalar_lea.vmem %s1, %s518
      // Predicated region
      $region25: #{dmsanet_forward.16} parent=23 // pred_check
        %p520 = pneg %p56
      $region26: #{dmsanet_forward.16} parent=23 // pred_check_branch
        %522 = sbr.rel (%p520) target = $region28
      $region27: #{dmsanet_forward.16} parent=23 // pred_region
        _
      $region28: #{dmsanet_forward.16} parent=23 // pred_fallthru
        _
    $region24: #{dmsanet_forward.16} parent=5 // pred_fallthru
      _
    %p523 = scmp.le.s32.totalorder 2, %s7
    // Predicated region
    $region29: #{dmsanet_forward.16} parent=5 // pred_check
      %p524 = pneg %p523
    $region30: #{dmsanet_forward.16} parent=5 // pred_check_branch
      %526 = sbr.rel (%p524) target = $region32
    $region31: #{dmsanet_forward.16} parent=5 // pred_region
      %s527 = ssub.s32 %s7, 2
      // Predicated region
      $region33: #{dmsanet_forward.16} parent=31 // pred_check
        %p528 = pneg %p62
      $region34: #{dmsanet_forward.16} parent=31 // pred_check_branch
        %530 = sbr.rel (%p528) target = $region36
      $region35: #{dmsanet_forward.16} parent=31 // pred_region
        %p531 = scmp.lt.s32.totalorder %s13, 1
        %s532 = scalar_select %p531, %s13, 1
        %s533 = smul.addr %s532, 15
        %s534 = smul.addr %s533, 8
        %s535 = scalar_lea.vmem %s1, %s534
      $region36: #{dmsanet_forward.16} parent=31 // pred_fallthru
        _
    $region32: #{dmsanet_forward.16} parent=5 // pred_fallthru
      _
  $region6: #{dmsanet_forward.16} parent=0 // loop_footer
    %s11 = sadd.s32 1, %s7
  $region7: #{dmsanet_forward.16} parent=0 // loop_footer_branch
    %6 = sbr.rel target = $region3
  $region8: #{dmsanet_forward.16} parent=0 // loop_exit
    _

// kernel: dmsanet_forward.15
$region0: #{dmsanet_forward.15}
  #allocation0 [shape = 'u32[]', space=smem, size = 0x4, offset = 0x4, fixed_abs, tag = 'smem constant byte address 0x4 - core index']
  #allocation1 [shape = 'u32[72,128]{1,0:T(1,128)}', space=vmem, size = 0x9000, scoped, tag = 'internal scratch']
  %s0 = inlined_call_operand.vmem [shape: f32[120,480], index: 0, kind: input, shape index: {}]
  %s1 = inlined_call_operand.vmem [shape: f32[120,1], index: 1, kind: input, shape index: {}]
  %s2 = inlined_call_operand.vmem [shape: f32[2,480,128], index: 2, kind: input, shape index: {}]
  %s3 = inlined_call_operand.vmem [shape: f32[128,3], index: 3, kind: input, shape index: {}]
  %s4 = inlined_call_operand.vmem [shape: f32[2,120,3], index: 4, kind: output, shape index: {}]
  %s5 = sld [smem:[#allocation0]]
  $region49: #{dmsanet_forward.15} parent=0
    _
  %s7 = ssub.s32 1, %s5
  %s8 = scalar_select 0, %s7, %s5
  loop: start=0, step=1, limit=4
  $region2: #{dmsanet_forward.15} parent=0 // loop_pre_header
    _
  $region3: #{dmsanet_forward.15} parent=0 // loop_header
    %s10 = sphi 0, %s14
    %p11 = scmp.ge.s32.totalorder %s10, 4
    %s18 = sphi 0, %s18
    %s20 = sphi 0, %s18
    %s21 = sphi 0, %s20
    %s35 = sphi 0, %s21
    %s39 = sphi 0, %s39
    %s41 = sphi 0, %s39
    %s42 = sphi 0, %s41
    %s56 = sphi 0, %s42
    %s62 = sphi 0, %s64
    %s65 = sphi 0, %s62
    %s66 = sphi 0, %s65
    %s82 = sphi 0, %s66
    %s86 = sphi 0, %s86
    %s88 = sphi 0, %s86
    %s89 = sphi 0, %s88
    %s103 = sphi 0, %s89
    %s109 = sphi 0, %s111
    %s112 = sphi 0, %s109
    %s113 = sphi 0, %s112
    %s129 = sphi 0, %s113
  $region4: #{dmsanet_forward.15} parent=0 // loop_header_branch
    %13 = sbr.rel (%p11) target = $region8
  $region5: #{dmsanet_forward.15} parent=0 // loop_body
    %s15 = ssub.s32 %s10, 1
    %s16 = ssub.s32 %s10, 2
    %s17 = sadd.s32 %s10, 1
    %s19 = sadd.s32 %s18, 1
    %p22 = scmp.eq.s32.totalorder %s10, 1
    %p23 = scmp.ne.s32.totalorder %s18, %s20
    %p24 = scmp.eq.s32.totalorder %s10, 0
    %p25 = por %p23, %p24
    %p26 = scmp.ne.s32.totalorder %s18, %s20
    %p27 = scmp.eq.s32.totalorder %s15, 1
    %p28 = por %p26, %p27
    %p29 = scmp.ne.s32.totalorder %s20, %s21
    %p30 = scmp.eq.s32.totalorder %s15, 0
    %p31 = por %p29, %p30
    %p32 = scmp.ne.s32.totalorder %s20, %s21
    %p33 = scmp.eq.s32.totalorder %s16, 1
    %p34 = por %p32, %p33
    %p36 = scmp.ne.s32.totalorder %s21, %s35
    %p37 = scmp.eq.s32.totalorder %s16, 0
    %p38 = por %p36, %p37
    %s40 = sadd.s32 %s39, 1
    %p43 = scmp.eq.s32.totalorder %s10, 1
    %p44 = scmp.ne.s32.totalorder %s39, %s41
    %p45 = scmp.eq.s32.totalorder %s10, 0
    %p46 = por %p44, %p45
    %p47 = scmp.ne.s32.totalorder %s39, %s41
    %p48 = scmp.eq.s32.totalorder %s15, 1
    %p49 = por %p47, %p48
    %p50 = scmp.ne.s32.totalorder %s41, %s42
    %p51 = scmp.eq.s32.totalorder %s15, 0
    %p52 = por %p50, %p51
    %p53 = scmp.ne.s32.totalorder %s41, %s42
    %p54 = scmp.eq.s32.totalorder %s16, 1
    %p55 = por %p53, %p54
    %p57 = scmp.ne.s32.totalorder %s42, %s56
    %p58 = scmp.eq.s32.totalorder %s16, 0
    %p59 = por %p57, %p58
    %s60 = ssub.s32 %s10, %s17
    %p61 = scmp.eq.s32.totalorder %s60, 0
    %s63 = sadd.s32 %s62, 1
    %s64 = scalar_select %p61, %s62, %s63
    %p67 = pneg %p61
    %p68 = scmp.eq.s32.totalorder %s10, 1
    %p69 = por %p67, %p68
    %p70 = scmp.ne.s32.totalorder %s62, %s65
    %p71 = scmp.eq.s32.totalorder %s10, 0
    %p72 = por %p70, %p71
    %p73 = scmp.ne.s32.totalorder %s62, %s65
    %p74 = scmp.eq.s32.totalorder %s15, 1
    %p75 = por %p73, %p74
    %p76 = scmp.ne.s32.totalorder %s65, %s66
    %p77 = scmp.eq.s32.totalorder %s15, 0
    %p78 = por %p76, %p77
    %p79 = scmp.ne.s32.totalorder %s65, %s66
    %p80 = scmp.eq.s32.totalorder %s16, 1
    %p81 = por %p79, %p80
    %p83 = scmp.ne.s32.totalorder %s66, %s82
    %p84 = scmp.eq.s32.totalorder %s16, 0
    %p85 = por %p83, %p84
    %s87 = sadd.s32 %s86, 1
    %p90 = scmp.eq.s32.totalorder %s10, 1
    %p91 = scmp.ne.s32.totalorder %s86, %s88
    %p92 = scmp.eq.s32.totalorder %s10, 0
    %p93 = por %p91, %p92
    %p94 = scmp.ne.s32.totalorder %s86, %s88
    %p95 = scmp.eq.s32.totalorder %s15, 1
    %p96 = por %p94, %p95
    %p97 = scmp.ne.s32.totalorder %s88, %s89
    %p98 = scmp.eq.s32.totalorder %s15, 0
    %p99 = por %p97, %p98
    %p100 = scmp.ne.s32.totalorder %s88, %s89
    %p101 = scmp.eq.s32.totalorder %s16, 1
    %p102 = por %p100, %p101
    %p104 = scmp.ne.s32.totalorder %s89, %s103
    %p105 = scmp.eq.s32.totalorder %s16, 0
    %p106 = por %p104, %p105
    %s107 = ssub.s32 %s10, %s17
    %p108 = scmp.eq.s32.totalorder %s107, 0
    %s110 = sadd.s32 %s109, 1
    %s111 = scalar_select %p108, %s109, %s110
    %p114 = pneg %p108
    %p115 = scmp.eq.s32.totalorder %s10, 1
    %p116 = por %p114, %p115
    %p117 = scmp.ne.s32.totalorder %s109, %s112
    %p118 = scmp.eq.s32.totalorder %s10, 0
    %p119 = por %p117, %p118
    %p120 = scmp.ne.s32.totalorder %s109, %s112
    %p121 = scmp.eq.s32.totalorder %s15, 1
    %p122 = por %p120, %p121
    %p123 = scmp.ne.s32.totalorder %s112, %s113
    %p124 = scmp.eq.s32.totalorder %s15, 0
    %p125 = por %p123, %p124
    %p126 = scmp.ne.s32.totalorder %s112, %s113
    %p127 = scmp.eq.s32.totalorder %s16, 1
    %p128 = por %p126, %p127
    %p130 = scmp.ne.s32.totalorder %s113, %s129
    %p131 = scmp.eq.s32.totalorder %s16, 0
    %p132 = por %p130, %p131
    %p133 = scmp.le.s32.totalorder 1, %s10
    %p134 = scmp.lt.s32.totalorder %s10, 3
    %p135 = pnand %p133, %p134
    %p136 = pneg %p135
    // Predicated region
    $region9: #{dmsanet_forward.15} parent=5 // pred_check
      _
    $region10: #{dmsanet_forward.15} parent=5 // pred_check_branch
      %138 = sbr.rel (%p135) target = $region12
    $region11: #{dmsanet_forward.15} parent=5 // pred_region
      %s139 = ssub.s32 %s10, 1
      // Predicated region
      $region13: #{dmsanet_forward.15} parent=11 // pred_check
        %p140 = pneg %p31
      $region14: #{dmsanet_forward.15} parent=11 // pred_check_branch
        %142 = sbr.rel (%p140) target = $region16
      $region15: #{dmsanet_forward.15} parent=11 // pred_region
        _
      $region16: #{dmsanet_forward.15} parent=11 // pred_fallthru
        _
      // Predicated region
      $region17: #{dmsanet_forward.15} parent=11 // pred_check
        %p143 = pneg %p52
      $region18: #{dmsanet_forward.15} parent=11 // pred_check_branch
        %145 = sbr.rel (%p143) target = $region20
      $region19: #{dmsanet_forward.15} parent=11 // pred_region
        _
      $region20: #{dmsanet_forward.15} parent=11 // pred_fallthru
        _
      // Predicated region
      $region21: #{dmsanet_forward.15} parent=11 // pred_check
        %p146 = pneg %p99
      $region22: #{dmsanet_forward.15} parent=11 // pred_check_branch
        %148 = sbr.rel (%p146) target = $region24
      $region23: #{dmsanet_forward.15} parent=11 // pred_region
        _
      $region24: #{dmsanet_forward.15} parent=11 // pred_fallthru
        _
    $region12: #{dmsanet_forward.15} parent=5 // pred_fallthru
      _
    %p149 = scmp.lt.s32.totalorder %s10, 2
    // Predicated region
    $region25: #{dmsanet_forward.15} parent=5 // pred_check
      %p150 = pneg %p149
    $region26: #{dmsanet_forward.15} parent=5 // pred_check_branch
      %152 = sbr.rel (%p150) target = $region28
    $region27: #{dmsanet_forward.15} parent=5 // pred_region
      // Predicated region
      $region29: #{dmsanet_forward.15} parent=27 // pred_check
        %p153 = pneg %p72
      $region30: #{dmsanet_forward.15} parent=27 // pred_check_branch
        %155 = sbr.rel (%p153) target = $region32
      $region31: #{dmsanet_forward.15} parent=27 // pred_region
        %p156 = scmp.lt.s32.totalorder %s10, 1
        %s157 = scalar_select %p156, %s10, 1
        %s158 = smul.addr %s157, 60
        %s159 = smul.addr %s158, 8
        %s160 = scalar_lea.vmem %s2, %s159
      $region32: #{dmsanet_forward.15} parent=27 // pred_fallthru
        _
    $region28: #{dmsanet_forward.15} parent=5 // pred_fallthru
      _
    %p161 = scmp.le.s32.totalorder 1, %s10
    %p162 = scmp.lt.s32.totalorder %s10, 3
    %p163 = pnand %p161, %p162
    %p164 = pneg %p163
    // Predicated region
    $region33: #{dmsanet_forward.15} parent=5 // pred_check
      _
    $region34: #{dmsanet_forward.15} parent=5 // pred_check_branch
      %166 = sbr.rel (%p163) target = $region36
    $region35: #{dmsanet_forward.15} parent=5 // pred_region
      %s167 = ssub.s32 %s10, 1
      %p168 = pneg %p31
      %p169 = pneg %p28
      %p170 = pneg %p52
      %p171 = pneg %p49
      %p172 = scmp.lt.s32.totalorder %s15, 1
      %s173 = scalar_select %p172, %s15, 1
      %s174 = smul.addr %s173, 60
      %s175 = smul.addr %s174, 8
      %s176 = scalar_lea.vmem %s2, %s175
      %p177 = pneg %p78
      %p178 = pneg %p75
      %p179 = pneg %p99
      %p180 = pneg %p96
      %p181 = pneg %p125
      %p182 = pneg %p122
      %p183 = scmp.lt.s32.totalorder %s15, 1
      %s184 = scalar_select %p183, %s15, 1
      %s185 = smul.addr %s184, 15
      %s186 = smul.addr %s185, 8
      %s187 = scalar_lea.vmem %s4, %s186
      %p188 = scmp.lt.s32.totalorder %s15, 1
      %s189 = scalar_select %p188, %s15, 1
      %s190 = smul.addr %s189, 60
      %s191 = smul.addr %s190, 8
      %s192 = scalar_lea.vmem %s2, %s191
      %p193 = scmp.lt.s32.totalorder %s15, 1
      %s194 = scalar_select %p193, %s15, 1
      %s195 = smul.addr %s194, 15
      %s196 = smul.addr %s195, 8
      %s197 = scalar_lea.vmem %s4, %s196
      %v198 = vld [vmem:[%s0] sm:$0xff]
      %v199 = vld [vmem:[%s0 + $0x8] sm:$0xff]
      %v200 = vld [vmem:[%s0 + $0x10] sm:$0xff]
      %v201 = vld [vmem:[%s0 + $0x18] sm:$0xff]
      %v202 = vld [vmem:[%s0 + $0x20] sm:$0xff]
      %v203 = vld [vmem:[%s0 + $0x28] sm:$0xff]
      %v204 = vld [vmem:[%s0 + $0x30] sm:$0xff]
      %v205 = vld [vmem:[%s0 + $0x38] sm:$0xff]
      %v206 = vld [vmem:[%s0 + $0x40] sm:$0xff]
      %v207 = vld [vmem:[%s0 + $0x48] sm:$0xff]
      %v208 = vld [vmem:[%s0 + $0x50] sm:$0xff]
      %v209 = vld [vmem:[%s0 + $0x58] sm:$0xff]
      %v210 = vld [vmem:[%s0 + $0x60] sm:$0xff]
      %v211 = vld [vmem:[%s0 + $0x68] sm:$0xff]
      %v212 = vld [vmem:[%s0 + $0x70] sm:$0xff]
      %v213 = vld [vmem:[%s0 + $0x78] sm:$0xff]
      %v214 = vld [vmem:[%s0 + $0x80] sm:$0xff]
      %v215 = vld [vmem:[%s0 + $0x88] sm:$0xff]
      %v216 = vld [vmem:[%s0 + $0x90] sm:$0xff]
      %v217 = vld [vmem:[%s0 + $0x98] sm:$0xff]
      %v218 = vld [vmem:[%s0 + $0xa0] sm:$0xff]
      %v219 = vld [vmem:[%s0 + $0xa8] sm:$0xff]
      %v220 = vld [vmem:[%s0 + $0xb0] sm:$0xff]
      %v221 = vld [vmem:[%s0 + $0xb8] sm:$0xff]
      %v222 = vld [vmem:[%s0 + $0xc0] sm:$0xff]
      %v223 = vld [vmem:[%s0 + $0xc8] sm:$0xff]
      %v224 = vld [vmem:[%s0 + $0xd0] sm:$0xff]
      %v225 = vld [vmem:[%s0 + $0xd8] sm:$0xff]
      %v226 = vld [vmem:[%s0 + $0xe0] sm:$0xff]
      %v227 = vld [vmem:[%s0 + $0xe8] sm:$0xff]
      %v228 = vld [vmem:[%s0 + $0xf0] sm:$0xff]
      %v229 = vld [vmem:[%s0 + $0xf8] sm:$0xff]
      %v230 = vld [vmem:[%s0 + $0x100] sm:$0xff]
      %v231 = vld [vmem:[%s0 + $0x108] sm:$0xff]
      %v232 = vld [vmem:[%s0 + $0x110] sm:$0xff]
      %v233 = vld [vmem:[%s0 + $0x118] sm:$0xff]
      %v234 = vld [vmem:[%s0 + $0x120] sm:$0xff]
      %v235 = vld [vmem:[%s0 + $0x128] sm:$0xff]
      %v236 = vld [vmem:[%s0 + $0x130] sm:$0xff]
      %v237 = vld [vmem:[%s0 + $0x138] sm:$0xff]
      %v238 = vld [vmem:[%s0 + $0x140] sm:$0xff]
      %v239 = vld [vmem:[%s0 + $0x148] sm:$0xff]
      %v240 = vld [vmem:[%s0 + $0x150] sm:$0xff]
      %v241 = vld [vmem:[%s0 + $0x158] sm:$0xff]
      %v242 = vld [vmem:[%s0 + $0x160] sm:$0xff]
      %v243 = vld [vmem:[%s0 + $0x168] sm:$0xff]
      %v244 = vld [vmem:[%s0 + $0x170] sm:$0xff]
      %v245 = vld [vmem:[%s0 + $0x178] sm:$0xff]
      %v246 = vld [vmem:[%s0 + $0x180] sm:$0xff]
      %v247 = vld [vmem:[%s0 + $0x188] sm:$0xff]
      %v248 = vld [vmem:[%s0 + $0x190] sm:$0xff]
      %v249 = vld [vmem:[%s0 + $0x198] sm:$0xff]
      %v250 = vld [vmem:[%s0 + $0x1a0] sm:$0xff]
      %v251 = vld [vmem:[%s0 + $0x1a8] sm:$0xff]
      %v252 = vld [vmem:[%s0 + $0x1b0] sm:$0xff]
      %v253 = vld [vmem:[%s0 + $0x1b8] sm:$0xff]
      %v254 = vld [vmem:[%s0 + $0x1c0] sm:$0xff]
      %v255 = vld [vmem:[%s0 + $0x1c8] sm:$0xff]
      %v256 = vld [vmem:[%s0 + $0x1d0] sm:$0xff]
      %v257 = vld [vmem:[%s0 + $0x1d8] sm:$0xff]
      %v258 = vld [vmem:[%s192] sm:$0xff]
      %v259 = vld [vmem:[%s192 + $0x8] sm:$0xff]
      %v260 = vld [vmem:[%s192 + $0x10] sm:$0xff]
      %v261 = vld [vmem:[%s192 + $0x18] sm:$0xff]
      %v262 = vld [vmem:[%s192 + $0x20] sm:$0xff]
      %v263 = vld [vmem:[%s192 + $0x28] sm:$0xff]
      %v264 = vld [vmem:[%s192 + $0x30] sm:$0xff]
      %v265 = vld [vmem:[%s192 + $0x38] sm:$0xff]
      %v266 = vld [vmem:[%s192 + $0x40] sm:$0xff]
      %v267 = vld [vmem:[%s192 + $0x48] sm:$0xff]
      %v268 = vld [vmem:[%s192 + $0x50] sm:$0xff]
      %v269 = vld [vmem:[%s192 + $0x58] sm:$0xff]
      %v270 = vld [vmem:[%s192 + $0x60] sm:$0xff]
      %v271 = vld [vmem:[%s192 + $0x68] sm:$0xff]
      %v272 = vld [vmem:[%s192 + $0x70] sm:$0xff]
      %v273 = vld [vmem:[%s192 + $0x78] sm:$0xff]
      %v274 = vld [vmem:[%s192 + $0x80] sm:$0xff]
      %v275 = vld [vmem:[%s192 + $0x88] sm:$0xff]
      %v276 = vld [vmem:[%s192 + $0x90] sm:$0xff]
      %v277 = vld [vmem:[%s192 + $0x98] sm:$0xff]
      %v278 = vld [vmem:[%s192 + $0xa0] sm:$0xff]
      %v279 = vld [vmem:[%s192 + $0xa8] sm:$0xff]
      %v280 = vld [vmem:[%s192 + $0xb0] sm:$0xff]
      %v281 = vld [vmem:[%s192 + $0xb8] sm:$0xff]
      %v282 = vld [vmem:[%s192 + $0xc0] sm:$0xff]
      %v283 = vld [vmem:[%s192 + $0xc8] sm:$0xff]
      %v284 = vld [vmem:[%s192 + $0xd0] sm:$0xff]
      %v285 = vld [vmem:[%s192 + $0xd8] sm:$0xff]
      %v286 = vld [vmem:[%s192 + $0xe0] sm:$0xff]
      %v287 = vld [vmem:[%s192 + $0xe8] sm:$0xff]
      %v288 = vld [vmem:[%s192 + $0xf0] sm:$0xff]
      %v289 = vld [vmem:[%s192 + $0xf8] sm:$0xff]
      %v290 = vld [vmem:[%s192 + $0x100] sm:$0xff]
      %v291 = vld [vmem:[%s192 + $0x108] sm:$0xff]
      %v292 = vld [vmem:[%s192 + $0x110] sm:$0xff]
      %v293 = vld [vmem:[%s192 + $0x118] sm:$0xff]
      %v294 = vld [vmem:[%s192 + $0x120] sm:$0xff]
      %v295 = vld [vmem:[%s192 + $0x128] sm:$0xff]
      %v296 = vld [vmem:[%s192 + $0x130] sm:$0xff]
      %v297 = vld [vmem:[%s192 + $0x138] sm:$0xff]
      %v298 = vld [vmem:[%s192 + $0x140] sm:$0xff]
      %v299 = vld [vmem:[%s192 + $0x148] sm:$0xff]
      %v300 = vld [vmem:[%s192 + $0x150] sm:$0xff]
      %v301 = vld [vmem:[%s192 + $0x158] sm:$0xff]
      %v302 = vld [vmem:[%s192 + $0x160] sm:$0xff]
      %v303 = vld [vmem:[%s192 + $0x168] sm:$0xff]
      %v304 = vld [vmem:[%s192 + $0x170] sm:$0xff]
      %v305 = vld [vmem:[%s192 + $0x178] sm:$0xff]
      %v306 = vld [vmem:[%s192 + $0x180] sm:$0xff]
      %v307 = vld [vmem:[%s192 + $0x188] sm:$0xff]
      %v308 = vld [vmem:[%s192 + $0x190] sm:$0xff]
      %v309 = vld [vmem:[%s192 + $0x198] sm:$0xff]
      %v310 = vld [vmem:[%s192 + $0x1a0] sm:$0xff]
      %v311 = vld [vmem:[%s192 + $0x1a8] sm:$0xff]
      %v312 = vld [vmem:[%s192 + $0x1b0] sm:$0xff]
      %v313 = vld [vmem:[%s192 + $0x1b8] sm:$0xff]
      %v314 = vld [vmem:[%s192 + $0x1c0] sm:$0xff]
      %v315 = vld [vmem:[%s192 + $0x1c8] sm:$0xff]
      %v316 = vld [vmem:[%s192 + $0x1d0] sm:$0xff]
      %v317 = vld [vmem:[%s192 + $0x1d8] sm:$0xff]
      %v318 = vld [vmem:[%s1] sm:$0xff]
      %v319 = vld [vmem:[%s1 + $0x8] sm:$0xff]
      %v320 = vld [vmem:[%s1 + $0x10] sm:$0xff]
      %v321 = vld [vmem:[%s1 + $0x18] sm:$0xff]
      %v322 = vld [vmem:[%s1 + $0x20] sm:$0xff]
      %v323 = vld [vmem:[%s1 + $0x28] sm:$0xff]
      %v324 = vld [vmem:[%s1 + $0x30] sm:$0xff]
      %v325 = vld [vmem:[%s1 + $0x38] sm:$0xff]
      %v326 = vld [vmem:[%s1 + $0x40] sm:$0xff]
      %v327 = vld [vmem:[%s1 + $0x48] sm:$0xff]
      %v328 = vld [vmem:[%s1 + $0x50] sm:$0xff]
      %v329 = vld [vmem:[%s1 + $0x58] sm:$0xff]
      %v330 = vld [vmem:[%s1 + $0x60] sm:$0xff]
      %v331 = vld [vmem:[%s1 + $0x68] sm:$0xff]
      %v332 = vld [vmem:[%s1 + $0x70] sm:$0xff]
      %334 = vset.pattern.permute.xlu0 0
      %335 = vperm.xlu0 %334, %v318
      %v336 = vpop.permute.xlu0 %335
      %339 = vset.pattern.permute.xlu0 0
      %340 = vperm.xlu0 %339, %v319
      %v341 = vpop.permute.xlu0 %340
      %344 = vset.pattern.permute.xlu0 0
      %345 = vperm.xlu0 %344, %v320
      %v346 = vpop.permute.xlu0 %345
      %349 = vset.pattern.permute.xlu0 0
      %350 = vperm.xlu0 %349, %v321
      %v351 = vpop.permute.xlu0 %350
      %354 = vset.pattern.permute.xlu0 0
      %355 = vperm.xlu0 %354, %v322
      %v356 = vpop.permute.xlu0 %355
      %359 = vset.pattern.permute.xlu0 0
      %360 = vperm.xlu0 %359, %v323
      %v361 = vpop.permute.xlu0 %360
      %364 = vset.pattern.permute.xlu0 0
      %365 = vperm.xlu0 %364, %v324
      %v366 = vpop.permute.xlu0 %365
      %369 = vset.pattern.permute.xlu0 0
      %370 = vperm.xlu0 %369, %v325
      %v371 = vpop.permute.xlu0 %370
      %374 = vset.pattern.permute.xlu0 0
      %375 = vperm.xlu0 %374, %v326
      %v376 = vpop.permute.xlu0 %375
      %379 = vset.pattern.permute.xlu0 0
      %380 = vperm.xlu0 %379, %v327
      %v381 = vpop.permute.xlu0 %380
      %384 = vset.pattern.permute.xlu0 0
      %385 = vperm.xlu0 %384, %v328
      %v386 = vpop.permute.xlu0 %385
      %389 = vset.pattern.permute.xlu0 0
      %390 = vperm.xlu0 %389, %v329
      %v391 = vpop.permute.xlu0 %390
      %394 = vset.pattern.permute.xlu0 0
      %395 = vperm.xlu0 %394, %v330
      %v396 = vpop.permute.xlu0 %395
      %399 = vset.pattern.permute.xlu0 0
      %400 = vperm.xlu0 %399, %v331
      %v401 = vpop.permute.xlu0 %400
      %404 = vset.pattern.permute.xlu0 0
      %405 = vperm.xlu0 %404, %v332
      %v406 = vpop.permute.xlu0 %405
      %vm408 = vcmask 785408
      %v410 = vsel %vm408, %v201, 0
      %v413 = vsel %vm408, %v205, 0
      %v416 = vsel %vm408, %v209, 0
      %v419 = vsel %vm408, %v213, 0
      %v422 = vsel %vm408, %v217, 0
      %v425 = vsel %vm408, %v221, 0
      %v428 = vsel %vm408, %v225, 0
      %v431 = vsel %vm408, %v229, 0
      %v434 = vsel %vm408, %v233, 0
      %v437 = vsel %vm408, %v237, 0
      %v440 = vsel %vm408, %v241, 0
      %v443 = vsel %vm408, %v245, 0
      %v446 = vsel %vm408, %v249, 0
      %v449 = vsel %vm408, %v253, 0
      %v452 = vsel %vm408, %v257, 0
      %454 = vmatpush.msra.mxu0 %v273
      %455 = vmatpush.msra.mxu0 %v272
      %456 = vmatpush.msra.mxu0 %v271
      %457 = vmatpush.msra.mxu0 %v270
      %458 = vmatpush.msra.mxu0 %v269
      %459 = vmatpush.msra.mxu0 %v268
      %460 = vmatpush.msra.mxu0 %v267
      %461 = vmatpush.msra.mxu0 %v266
      %462 = vmatpush.msra.mxu0 %v265
      %463 = vmatpush.msra.mxu0 %v264
      %464 = vmatpush.msra.mxu0 %v263
      %465 = vmatpush.msra.mxu0 %v262
      %466 = vmatpush.msra.mxu0 %v261
      %467 = vmatpush.msra.mxu0 %v260
      %468 = vmatpush.msra.mxu0 %v259
      %469 = vmatpush.msra.mxu0 %v258
      %470 = vmatmul.f32.gmra.mxu0 %v198
      %v471 = vpop.f32.mrf.mxu0
      %v472 = vadd.f32 %v336, %v471
      %473 = vmatmul.f32.gmra.mxu0 %v202
      %v474 = vpop.f32.mrf.mxu0
      %v475 = vadd.f32 %v341, %v474
      %476 = vmatmul.f32.gmra.mxu0 %v206
      %v477 = vpop.f32.mrf.mxu0
      %v478 = vadd.f32 %v346, %v477
      %479 = vmatmul.f32.gmra.mxu0 %v210
      %v480 = vpop.f32.mrf.mxu0
      %v481 = vadd.f32 %v351, %v480
      %482 = vmatmul.f32.gmra.mxu0 %v214
      %v483 = vpop.f32.mrf.mxu0
      %v484 = vadd.f32 %v356, %v483
      %485 = vmatmul.f32.gmra.mxu0 %v218
      %v486 = vpop.f32.mrf.mxu0
      %v487 = vadd.f32 %v361, %v486
      %488 = vmatmul.f32.gmra.mxu0 %v222
      %v489 = vpop.f32.mrf.mxu0
      %v490 = vadd.f32 %v366, %v489
      %491 = vmatmul.f32.gmra.mxu0 %v226
      %v492 = vpop.f32.mrf.mxu0
      %v493 = vadd.f32 %v371, %v492
      %494 = vmatmul.f32.gmra.mxu0 %v230
      %v495 = vpop.f32.mrf.mxu0
      %v496 = vadd.f32 %v376, %v495
      %497 = vmatmul.f32.gmra.mxu0 %v234
      %v498 = vpop.f32.mrf.mxu0
      %v499 = vadd.f32 %v381, %v498
      %500 = vmatmul.f32.gmra.mxu0 %v238
      %v501 = vpop.f32.mrf.mxu0
      %v502 = vadd.f32 %v386, %v501
      %503 = vmatmul.f32.gmra.mxu0 %v242
      %v504 = vpop.f32.mrf.mxu0
      %v505 = vadd.f32 %v391, %v504
      %506 = vmatmul.f32.gmra.mxu0 %v246
      %v507 = vpop.f32.mrf.mxu0
      %v508 = vadd.f32 %v396, %v507
      %509 = vmatmul.f32.gmra.mxu0 %v250
      %v510 = vpop.f32.mrf.mxu0
      %v511 = vadd.f32 %v401, %v510
      %512 = vmatmul.f32.gmra.mxu0 %v254
      %v513 = vpop.f32.mrf.mxu0
      %v514 = vadd.f32 %v406, %v513
      %515 = vdwg.mxu0
      %516 = vmatpush.msra.mxu0 %v289
      %517 = vmatpush.msra.mxu0 %v288
      %518 = vmatpush.msra.mxu0 %v287
      %519 = vmatpush.msra.mxu0 %v286
      %520 = vmatpush.msra.mxu0 %v285
      %521 = vmatpush.msra.mxu0 %v284
      %522 = vmatpush.msra.mxu0 %v283
      %523 = vmatpush.msra.mxu0 %v282
      %524 = vmatpush.msra.mxu0 %v281
      %525 = vmatpush.msra.mxu0 %v280
      %526 = vmatpush.msra.mxu0 %v279
      %527 = vmatpush.msra.mxu0 %v278
      %528 = vmatpush.msra.mxu0 %v277
      %529 = vmatpush.msra.mxu0 %v276
      %530 = vmatpush.msra.mxu0 %v275
      %531 = vmatpush.msra.mxu0 %v274
      %532 = vmatmul.f32.gmra.mxu0 %v199
      %v533 = vpop.f32.mrf.mxu0
      %v534 = vadd.f32 %v472, %v533
      %535 = vmatmul.f32.gmra.mxu0 %v203
      %v536 = vpop.f32.mrf.mxu0
      %v537 = vadd.f32 %v475, %v536
      %538 = vmatmul.f32.gmra.mxu0 %v207
      %v539 = vpop.f32.mrf.mxu0
      %v540 = vadd.f32 %v478, %v539
      %541 = vmatmul.f32.gmra.mxu0 %v211
      %v542 = vpop.f32.mrf.mxu0
      %v543 = vadd.f32 %v481, %v542
      %544 = vmatmul.f32.gmra.mxu0 %v215
      %v545 = vpop.f32.mrf.mxu0
      %v546 = vadd.f32 %v484, %v545
      %547 = vmatmul.f32.gmra.mxu0 %v219
      %v548 = vpop.f32.mrf.mxu0
      %v549 = vadd.f32 %v487, %v548
      %550 = vmatmul.f32.gmra.mxu0 %v223
      %v551 = vpop.f32.mrf.mxu0
      %v552 = vadd.f32 %v490, %v551
      %553 = vmatmul.f32.gmra.mxu0 %v227
      %v554 = vpop.f32.mrf.mxu0
      %v555 = vadd.f32 %v493, %v554
      %556 = vmatmul.f32.gmra.mxu0 %v231
      %v557 = vpop.f32.mrf.mxu0
      %v558 = vadd.f32 %v496, %v557
      %559 = vmatmul.f32.gmra.mxu0 %v235
      %v560 = vpop.f32.mrf.mxu0
      %v561 = vadd.f32 %v499, %v560
      %562 = vmatmul.f32.gmra.mxu0 %v239
      %v563 = vpop.f32.mrf.mxu0
      %v564 = vadd.f32 %v502, %v563
      %565 = vmatmul.f32.gmra.mxu0 %v243
      %v566 = vpop.f32.mrf.mxu0
      %v567 = vadd.f32 %v505, %v566
      %568 = vmatmul.f32.gmra.mxu0 %v247
      %v569 = vpop.f32.mrf.mxu0
      %v570 = vadd.f32 %v508, %v569
      %571 = vmatmul.f32.gmra.mxu0 %v251
      %v572 = vpop.f32.mrf.mxu0
      %v573 = vadd.f32 %v511, %v572
      %574 = vmatmul.f32.gmra.mxu0 %v255
      %v575 = vpop.f32.mrf.mxu0
      %v576 = vadd.f32 %v514, %v575
      %577 = vdwg.mxu0
      %578 = vmatpush.msra.mxu0 %v305
      %579 = vmatpush.msra.mxu0 %v304
      %580 = vmatpush.msra.mxu0 %v303
      %581 = vmatpush.msra.mxu0 %v302
      %582 = vmatpush.msra.mxu0 %v301
      %583 = vmatpush.msra.mxu0 %v300
      %584 = vmatpush.msra.mxu0 %v299
      %585 = vmatpush.msra.mxu0 %v298
      %586 = vmatpush.msra.mxu0 %v297
      %587 = vmatpush.msra.mxu0 %v296
      %588 = vmatpush.msra.mxu0 %v295
      %589 = vmatpush.msra.mxu0 %v294
      %590 = vmatpush.msra.mxu0 %v293
      %591 = vmatpush.msra.mxu0 %v292
      %592 = vmatpush.msra.mxu0 %v291
      %593 = vmatpush.msra.mxu0 %v290
      %594 = vmatmul.f32.gmra.mxu0 %v200
      %v595 = vpop.f32.mrf.mxu0
      %v596 = vadd.f32 %v534, %v595
      %597 = vmatmul.f32.gmra.mxu0 %v204
      %v598 = vpop.f32.mrf.mxu0
      %v599 = vadd.f32 %v537, %v598
      %600 = vmatmul.f32.gmra.mxu0 %v208
      %v601 = vpop.f32.mrf.mxu0
      %v602 = vadd.f32 %v540, %v601
      %603 = vmatmul.f32.gmra.mxu0 %v212
      %v604 = vpop.f32.mrf.mxu0
      %v605 = vadd.f32 %v543, %v604
      %606 = vmatmul.f32.gmra.mxu0 %v216
      %v607 = vpop.f32.mrf.mxu0
      %v608 = vadd.f32 %v546, %v607
      %609 = vmatmul.f32.gmra.mxu0 %v220
      %v610 = vpop.f32.mrf.mxu0
      %v611 = vadd.f32 %v549, %v610
      %612 = vmatmul.f32.gmra.mxu0 %v224
      %v613 = vpop.f32.mrf.mxu0
      %v614 = vadd.f32 %v552, %v613
      %615 = vmatmul.f32.gmra.mxu0 %v228
      %v616 = vpop.f32.mrf.mxu0
      %v617 = vadd.f32 %v555, %v616
      %618 = vmatmul.f32.gmra.mxu0 %v232
      %v619 = vpop.f32.mrf.mxu0
      %v620 = vadd.f32 %v558, %v619
      %621 = vmatmul.f32.gmra.mxu0 %v236
      %v622 = vpop.f32.mrf.mxu0
      %v623 = vadd.f32 %v561, %v622
      %624 = vmatmul.f32.gmra.mxu0 %v240
      %v625 = vpop.f32.mrf.mxu0
      %v626 = vadd.f32 %v564, %v625
      %627 = vmatmul.f32.gmra.mxu0 %v244
      %v628 = vpop.f32.mrf.mxu0
      %v629 = vadd.f32 %v567, %v628
      %630 = vmatmul.f32.gmra.mxu0 %v248
      %v631 = vpop.f32.mrf.mxu0
      %v632 = vadd.f32 %v570, %v631
      %633 = vmatmul.f32.gmra.mxu0 %v252
      %v634 = vpop.f32.mrf.mxu0
      %v635 = vadd.f32 %v573, %v634
      %636 = vmatmul.f32.gmra.mxu0 %v256
      %v637 = vpop.f32.mrf.mxu0
      %v638 = vadd.f32 %v576, %v637
      %639 = vdwg.mxu0
      %640 = vmatpush.msra.mxu0 0.0
      %641 = vmatpush.msra.mxu0 0.0
      %642 = vmatpush.msra.mxu0 0.0
      %643 = vmatpush.msra.mxu0 0.0
      %644 = vmatpush.msra.mxu0 %v317
      %645 = vmatpush.msra.mxu0 %v316
      %646 = vmatpush.msra.mxu0 %v315
      %647 = vmatpush.msra.mxu0 %v314
      %648 = vmatpush.msra.mxu0 %v313
      %649 = vmatpush.msra.mxu0 %v312
      %650 = vmatpush.msra.mxu0 %v311
      %651 = vmatpush.msra.mxu0 %v310
      %652 = vmatpush.msra.mxu0 %v309
      %653 = vmatpush.msra.mxu0 %v308
      %654 = vmatpush.msra.mxu0 %v307
      %655 = vmatpush.msra.mxu0 %v306
      %656 = vmatmul.f32.gmra.mxu0 %v410
      %v657 = vpop.f32.mrf.mxu0
      %v658 = vadd.f32 %v596, %v657
      %659 = vmatmul.f32.gmra.mxu0 %v413
      %v660 = vpop.f32.mrf.mxu0
      %v661 = vadd.f32 %v599, %v660
      %662 = vmatmul.f32.gmra.mxu0 %v416
      %v663 = vpop.f32.mrf.mxu0
      %v664 = vadd.f32 %v602, %v663
      %665 = vmatmul.f32.gmra.mxu0 %v419
      %v666 = vpop.f32.mrf.mxu0
      %v667 = vadd.f32 %v605, %v666
      %668 = vmatmul.f32.gmra.mxu0 %v422
      %v669 = vpop.f32.mrf.mxu0
      %v670 = vadd.f32 %v608, %v669
      %671 = vmatmul.f32.gmra.mxu0 %v425
      %v672 = vpop.f32.mrf.mxu0
      %v673 = vadd.f32 %v611, %v672
      %674 = vmatmul.f32.gmra.mxu0 %v428
      %v675 = vpop.f32.mrf.mxu0
      %v676 = vadd.f32 %v614, %v675
      %677 = vmatmul.f32.gmra.mxu0 %v431
      %v678 = vpop.f32.mrf.mxu0
      %v679 = vadd.f32 %v617, %v678
      %680 = vmatmul.f32.gmra.mxu0 %v434
      %v681 = vpop.f32.mrf.mxu0
      %v682 = vadd.f32 %v620, %v681
      %683 = vmatmul.f32.gmra.mxu0 %v437
      %v684 = vpop.f32.mrf.mxu0
      %v685 = vadd.f32 %v623, %v684
      %686 = vmatmul.f32.gmra.mxu0 %v440
      %v687 = vpop.f32.mrf.mxu0
      %v688 = vadd.f32 %v626, %v687
      %689 = vmatmul.f32.gmra.mxu0 %v443
      %v690 = vpop.f32.mrf.mxu0
      %v691 = vadd.f32 %v629, %v690
      %692 = vmatmul.f32.gmra.mxu0 %v446
      %v693 = vpop.f32.mrf.mxu0
      %v694 = vadd.f32 %v632, %v693
      %695 = vmatmul.f32.gmra.mxu0 %v449
      %v696 = vpop.f32.mrf.mxu0
      %v697 = vadd.f32 %v635, %v696
      %698 = vmatmul.f32.gmra.mxu0 %v452
      %v699 = vpop.f32.mrf.mxu0
      %v700 = vadd.f32 %v638, %v699
      %701 = vdwg.mxu0
      %v702 = vmul.f32 %v658, %v658
      %v703 = vmul.f32 %v661, %v661
      %v704 = vmul.f32 %v664, %v664
      %v705 = vmul.f32 %v667, %v667
      %v706 = vmul.f32 %v670, %v670
      %v707 = vmul.f32 %v673, %v673
      %v708 = vmul.f32 %v676, %v676
      %v709 = vmul.f32 %v679, %v679
      %v710 = vmul.f32 %v682, %v682
      %v711 = vmul.f32 %v685, %v685
      %v712 = vmul.f32 %v688, %v688
      %v713 = vmul.f32 %v691, %v691
      %v714 = vmul.f32 %v694, %v694
      %v715 = vmul.f32 %v697, %v697
      %v716 = vmul.f32 %v700, %v700
      %v717 = vld [vmem:[%s3] sm:$0xff]
      %v718 = vld [vmem:[%s3 + $0x8] sm:$0xff]
      %v719 = vld [vmem:[%s3 + $0x10] sm:$0xff]
      %v720 = vld [vmem:[%s3 + $0x18] sm:$0xff]
      %v721 = vld [vmem:[%s3 + $0x20] sm:$0xff]
      %v722 = vld [vmem:[%s3 + $0x28] sm:$0xff]
      %v723 = vld [vmem:[%s3 + $0x30] sm:$0xff]
      %v724 = vld [vmem:[%s3 + $0x38] sm:$0xff]
      %v725 = vld [vmem:[%s3 + $0x40] sm:$0xff]
      %v726 = vld [vmem:[%s3 + $0x48] sm:$0xff]
      %v727 = vld [vmem:[%s3 + $0x50] sm:$0xff]
      %v728 = vld [vmem:[%s3 + $0x58] sm:$0xff]
      %v729 = vld [vmem:[%s3 + $0x60] sm:$0xff]
      %v730 = vld [vmem:[%s3 + $0x68] sm:$0xff]
      %v731 = vld [vmem:[%s3 + $0x70] sm:$0xff]
      %v732 = vld [vmem:[%s3 + $0x78] sm:$0xff]
      %733 = vmatpush.msra.mxu0 %v732
      %734 = vmatpush.msra.mxu0 %v731
      %735 = vmatpush.msra.mxu0 %v730
      %736 = vmatpush.msra.mxu0 %v729
      %737 = vmatpush.msra.mxu0 %v728
      %738 = vmatpush.msra.mxu0 %v727
      %739 = vmatpush.msra.mxu0 %v726
      %740 = vmatpush.msra.mxu0 %v725
      %741 = vmatpush.msra.mxu0 %v724
      %742 = vmatpush.msra.mxu0 %v723
      %743 = vmatpush.msra.mxu0 %v722
      %744 = vmatpush.msra.mxu0 %v721
      %745 = vmatpush.msra.mxu0 %v720
      %746 = vmatpush.msra.mxu0 %v719
      %747 = vmatpush.msra.mxu0 %v718
      %748 = vmatpush.msra.mxu0 %v717
      %749 = vmatmul.f32.gmra.mxu0 %v702
      %v750 = vpop.f32.mrf.mxu0
      %v751 = vadd.f32 0.0, %v750
      %752 = vmatmul.f32.gmra.mxu0 %v703
      %v753 = vpop.f32.mrf.mxu0
      %v754 = vadd.f32 0.0, %v753
      %755 = vmatmul.f32.gmra.mxu0 %v704
      %v756 = vpop.f32.mrf.mxu0
      %v757 = vadd.f32 0.0, %v756
      %758 = vmatmul.f32.gmra.mxu0 %v705
      %v759 = vpop.f32.mrf.mxu0
      %v760 = vadd.f32 0.0, %v759
      %761 = vmatmul.f32.gmra.mxu0 %v706
      %v762 = vpop.f32.mrf.mxu0
      %v763 = vadd.f32 0.0, %v762
      %764 = vmatmul.f32.gmra.mxu0 %v707
      %v765 = vpop.f32.mrf.mxu0
      %v766 = vadd.f32 0.0, %v765
      %767 = vmatmul.f32.gmra.mxu0 %v708
      %v768 = vpop.f32.mrf.mxu0
      %v769 = vadd.f32 0.0, %v768
      %770 = vmatmul.f32.gmra.mxu0 %v709
      %v771 = vpop.f32.mrf.mxu0
      %v772 = vadd.f32 0.0, %v771
      %773 = vmatmul.f32.gmra.mxu0 %v710
      %v774 = vpop.f32.mrf.mxu0
      %v775 = vadd.f32 0.0, %v774
      %776 = vmatmul.f32.gmra.mxu0 %v711
      %v777 = vpop.f32.mrf.mxu0
      %v778 = vadd.f32 0.0, %v777
      %779 = vmatmul.f32.gmra.mxu0 %v712
      %v780 = vpop.f32.mrf.mxu0
      %v781 = vadd.f32 0.0, %v780
      %782 = vmatmul.f32.gmra.mxu0 %v713
      %v783 = vpop.f32.mrf.mxu0
      %v784 = vadd.f32 0.0, %v783
      %785 = vmatmul.f32.gmra.mxu0 %v714
      %v786 = vpop.f32.mrf.mxu0
      %v787 = vadd.f32 0.0, %v786
      %788 = vmatmul.f32.gmra.mxu0 %v715
      %v789 = vpop.f32.mrf.mxu0
      %v790 = vadd.f32 0.0, %v789
      %791 = vmatmul.f32.gmra.mxu0 %v716
      %v792 = vpop.f32.mrf.mxu0
      %v793 = vadd.f32 0.0, %v792
      %794 = vdwg.mxu0
      %v795 = vmax.f32 %v751, 1e-06
      %v796 = vmax.f32 %v754, 1e-06
      %v797 = vmax.f32 %v757, 1e-06
      %v798 = vmax.f32 %v760, 1e-06
      %v799 = vmax.f32 %v763, 1e-06
      %v800 = vmax.f32 %v766, 1e-06
      %v801 = vmax.f32 %v769, 1e-06
      %v802 = vmax.f32 %v772, 1e-06
      %v803 = vmax.f32 %v775, 1e-06
      %v804 = vmax.f32 %v778, 1e-06
      %v805 = vmax.f32 %v781, 1e-06
      %v806 = vmax.f32 %v784, 1e-06
      %v807 = vmax.f32 %v787, 1e-06
      %v808 = vmax.f32 %v790, 1e-06
      %v809 = vmax.f32 %v793, 1e-06
      %v810 = vlog2.pop %v795
      %v811 = vmul.f32 %v810, 0.6931472
      %v812 = vlog2.pop %v796
      %v813 = vmul.f32 %v812, 0.6931472
      %v814 = vlog2.pop %v797
      %v815 = vmul.f32 %v814, 0.6931472
      %v816 = vlog2.pop %v798
      %v817 = vmul.f32 %v816, 0.6931472
      %v818 = vlog2.pop %v799
      %v819 = vmul.f32 %v818, 0.6931472
      %v820 = vlog2.pop %v800
      %v821 = vmul.f32 %v820, 0.6931472
      %v822 = vlog2.pop %v801
      %v823 = vmul.f32 %v822, 0.6931472
      %v824 = vlog2.pop %v802
      %v825 = vmul.f32 %v824, 0.6931472
      %v826 = vlog2.pop %v803
      %v827 = vmul.f32 %v826, 0.6931472
      %v828 = vlog2.pop %v804
      %v829 = vmul.f32 %v828, 0.6931472
      %v830 = vlog2.pop %v805
      %v831 = vmul.f32 %v830, 0.6931472
      %v832 = vlog2.pop %v806
      %v833 = vmul.f32 %v832, 0.6931472
      %v834 = vlog2.pop %v807
      %v835 = vmul.f32 %v834, 0.6931472
      %v836 = vlog2.pop %v808
      %v837 = vmul.f32 %v836, 0.6931472
      %v838 = vlog2.pop %v809
      %v839 = vmul.f32 %v838, 0.6931472
      %vm840 = vcmask 23552
      %841 = vst.msk [vmem:[%s197] sm:$0xff] %vm840, %v811
      %842 = vst.msk [vmem:[%s197 + $0x8] sm:$0xff] %vm840, %v813
      %843 = vst.msk [vmem:[%s197 + $0x10] sm:$0xff] %vm840, %v815
      %844 = vst.msk [vmem:[%s197 + $0x18] sm:$0xff] %vm840, %v817
      %845 = vst.msk [vmem:[%s197 + $0x20] sm:$0xff] %vm840, %v819
      %846 = vst.msk [vmem:[%s197 + $0x28] sm:$0xff] %vm840, %v821
      %847 = vst.msk [vmem:[%s197 + $0x30] sm:$0xff] %vm840, %v823
      %848 = vst.msk [vmem:[%s197 + $0x38] sm:$0xff] %vm840, %v825
      %849 = vst.msk [vmem:[%s197 + $0x40] sm:$0xff] %vm840, %v827
      %850 = vst.msk [vmem:[%s197 + $0x48] sm:$0xff] %vm840, %v829
      %851 = vst.msk [vmem:[%s197 + $0x50] sm:$0xff] %vm840, %v831
      %852 = vst.msk [vmem:[%s197 + $0x58] sm:$0xff] %vm840, %v833
      %853 = vst.msk [vmem:[%s197 + $0x60] sm:$0xff] %vm840, %v835
      %854 = vst.msk [vmem:[%s197 + $0x68] sm:$0xff] %vm840, %v837
      %855 = vst.msk [vmem:[%s197 + $0x70] sm:$0xff] %vm840, %v839
      %p856 = scmp.lt.s32.totalorder %s15, 1
      %s857 = scalar_select %p856, %s15, 1
      %s858 = smul.addr %s857, 15
      %s859 = smul.addr %s858, 8
      %s860 = scalar_lea.vmem %s4, %s859
      // Predicated region
      $region37: #{dmsanet_forward.15} parent=35 // pred_check
        %p861 = pneg %p122
      $region38: #{dmsanet_forward.15} parent=35 // pred_check_branch
        %863 = sbr.rel (%p861) target = $region40
      $region39: #{dmsanet_forward.15} parent=35 // pred_region
        _
      $region40: #{dmsanet_forward.15} parent=35 // pred_fallthru
        _
    $region36: #{dmsanet_forward.15} parent=5 // pred_fallthru
      _
    %p864 = scmp.le.s32.totalorder 2, %s10
    // Predicated region
    $region41: #{dmsanet_forward.15} parent=5 // pred_check
      %p865 = pneg %p864
    $region42: #{dmsanet_forward.15} parent=5 // pred_check_branch
      %867 = sbr.rel (%p865) target = $region44
    $region43: #{dmsanet_forward.15} parent=5 // pred_region
      %s868 = ssub.s32 %s10, 2
      // Predicated region
      $region45: #{dmsanet_forward.15} parent=43 // pred_check
        %p869 = pneg %p128
      $region46: #{dmsanet_forward.15} parent=43 // pred_check_branch
        %871 = sbr.rel (%p869) target = $region48
      $region47: #{dmsanet_forward.15} parent=43 // pred_region
        %p872 = scmp.lt.s32.totalorder %s16, 1
        %s873 = scalar_select %p872, %s16, 1
        %s874 = smul.addr %s873, 15
        %s875 = smul.addr %s874, 8
        %s876 = scalar_lea.vmem %s4, %s875
      $region48: #{dmsanet_forward.15} parent=43 // pred_fallthru
        _
    $region44: #{dmsanet_forward.15} parent=5 // pred_fallthru
      _
  $region6: #{dmsanet_forward.15} parent=0 // loop_footer
    %s14 = sadd.s32 1, %s10
  $region7: #{dmsanet_forward.15} parent=0 // loop_footer_branch
    %9 = sbr.rel target = $region3
  $region8: #{dmsanet_forward.15} parent=0 // loop_exit
    _

// kernel: dmsanet_forward.17
$region0: #{dmsanet_forward.17}
  #allocation0 [shape = 'u32[]', space=smem, size = 0x4, offset = 0x4, fixed_abs, tag = 'smem constant byte address 0x4 - core index']
  #allocation1 [shape = 'u32[72,128]{1,0:T(1,128)}', space=vmem, size = 0x9000, scoped, tag = 'internal scratch']
  %s0 = inlined_call_operand.vmem [shape: f32[2,360], index: 0, kind: input, shape index: {}]
  %s1 = inlined_call_operand.vmem [shape: f32[360,4], index: 1, kind: input, shape index: {}]
  %s2 = inlined_call_operand.vmem [shape: f32[1,4], index: 2, kind: input, shape index: {}]
  %s3 = inlined_call_operand.hbm [shape: f32[2,4], index: 3, kind: output, shape index: {}]
  %s4 = sld [smem:[#allocation0]]
  $region22: #{dmsanet_forward.17} parent=0
    _
  %s6 = ssub.s32 1, %s4
  %s7 = scalar_select 0, %s6, %s4
  $region1: #{dmsanet_forward.17} parent=0
    #allocation2 [shape = 'u8[1024]{0}', space=vmem, size = 0x400, scoped, tag = 'output window, operand 0, single buffered']
    #allocation3 [shape = 's32[1]{0}', space=sflag, size = 0x4, scoped, tag = 'scoped memory for dmsanet_forward.17']
    %8 = vsyncpa [#allocation3], 0
    // Predicated region
    $region2: #{dmsanet_forward.17} parent=1 // pred_check
      _
    $region3: #{dmsanet_forward.17} parent=1 // pred_check_branch
      %10 = sbr.rel (0) target = $region5
    $region4: #{dmsanet_forward.17} parent=1 // pred_region
      _
    $region5: #{dmsanet_forward.17} parent=1 // pred_fallthru
      _
    // Predicated region
    $region6: #{dmsanet_forward.17} parent=1 // pred_check
      _
    $region7: #{dmsanet_forward.17} parent=1 // pred_check_branch
      %12 = sbr.rel (0) target = $region9
    $region8: #{dmsanet_forward.17} parent=1 // pred_region
      _
    $region9: #{dmsanet_forward.17} parent=1 // pred_fallthru
      _
    // Predicated region
    $region10: #{dmsanet_forward.17} parent=1 // pred_check
      _
    $region11: #{dmsanet_forward.17} parent=1 // pred_check_branch
      %14 = sbr.rel (0) target = $region13
    $region12: #{dmsanet_forward.17} parent=1 // pred_region
      _
    $region13: #{dmsanet_forward.17} parent=1 // pred_fallthru
      _
    %v15 = vld [vmem:[%s0] sm:$0x3f]
    %v16 = vld [vmem:[%s1] sm:$0xff]
    %v17 = vld [vmem:[%s1 + $0x8] sm:$0xff]
    %v18 = vld [vmem:[%s1 + $0x10] sm:$0xff]
    %v19 = vld [vmem:[%s1 + $0x18] sm:$0xff]
    %v20 = vld [vmem:[%s1 + $0x20] sm:$0xff]
    %v21 = vld [vmem:[%s1 + $0x28] sm:$0xff]
    %v22 = vld [vmem:[%s1 + $0x30] sm:$0xff]
    %v23 = vld [vmem:[%s1 + $0x38] sm:$0xff]
    %v24 = vld [vmem:[%s1 + $0x40] sm:$0xff]
    %v25 = vld [vmem:[%s1 + $0x48] sm:$0xff]
    %v26 = vld [vmem:[%s1 + $0x50] sm:$0xff]
    %v27 = vld [vmem:[%s1 + $0x58] sm:$0xff]
    %v28 = vld [vmem:[%s1 + $0x60] sm:$0xff]
    %v29 = vld [vmem:[%s1 + $0x68] sm:$0xff]
    %v30 = vld [vmem:[%s1 + $0x70] sm:$0xff]
    %v31 = vld [vmem:[%s1 + $0x78] sm:$0xff]
    %v32 = vld [vmem:[%s1 + $0x80] sm:$0xff]
    %v33 = vld [vmem:[%s1 + $0x88] sm:$0xff]
    %v34 = vld [vmem:[%s1 + $0x90] sm:$0xff]
    %v35 = vld [vmem:[%s1 + $0x98] sm:$0xff]
    %v36 = vld [vmem:[%s1 + $0xa0] sm:$0xff]
    %v37 = vld [vmem:[%s1 + $0xa8] sm:$0xff]
    %v38 = vld [vmem:[%s1 + $0xb0] sm:$0xff]
    %v39 = vld [vmem:[%s1 + $0xb8] sm:$0xff]
    %v40 = vld [vmem:[%s1 + $0xc0] sm:$0xff]
    %v41 = vld [vmem:[%s1 + $0xc8] sm:$0xff]
    %v42 = vld [vmem:[%s1 + $0xd0] sm:$0xff]
    %v43 = vld [vmem:[%s1 + $0xd8] sm:$0xff]
    %v44 = vld [vmem:[%s1 + $0xe0] sm:$0xff]
    %v45 = vld [vmem:[%s1 + $0xe8] sm:$0xff]
    %v46 = vld [vmem:[%s1 + $0xf0] sm:$0xff]
    %v47 = vld [vmem:[%s1 + $0xf8] sm:$0xff]
    %v48 = vld [vmem:[%s1 + $0x100] sm:$0xff]
    %v49 = vld [vmem:[%s1 + $0x108] sm:$0xff]
    %v50 = vld [vmem:[%s1 + $0x110] sm:$0xff]
    %v51 = vld [vmem:[%s1 + $0x118] sm:$0xff]
    %v52 = vld [vmem:[%s1 + $0x120] sm:$0xff]
    %v53 = vld [vmem:[%s1 + $0x128] sm:$0xff]
    %v54 = vld [vmem:[%s1 + $0x130] sm:$0xff]
    %v55 = vld [vmem:[%s1 + $0x138] sm:$0xff]
    %v56 = vld [vmem:[%s1 + $0x140] sm:$0xff]
    %v57 = vld [vmem:[%s1 + $0x148] sm:$0xff]
    %v58 = vld [vmem:[%s1 + $0x150] sm:$0xff]
    %v59 = vld [vmem:[%s1 + $0x158] sm:$0xff]
    %v60 = vld [vmem:[%s1 + $0x160] sm:$0xff]
    %v61 = vld [vmem:[%s2] sm:$0x1]
    %v63 = vperm.slane %v61, 0
    %66 = vst [vmem:[#allocation1] ss:$4 sm:$0xff] %v15
    %v67 = vld.sshfl [vmem:[#allocation1] sm:$0xff pattern:$0x73625140]
    %v68 = vld.sshfl [vmem:[#allocation1 + $0x8] sm:$0xff pattern:$0x73625140]
    %v69 = vld.sshfl [vmem:[#allocation1 + $0x10] sm:$0xff pattern:$0x73625140]
    %vm72 = vcmask 850944
    %v73 = vsel %vm72, %v69, 0
    %75 = vmatpush.msra.mxu0 %v31
    %76 = vmatpush.msra.mxu0 %v30
    %77 = vmatpush.msra.mxu0 %v29
    %78 = vmatpush.msra.mxu0 %v28
    %79 = vmatpush.msra.mxu0 %v27
    %80 = vmatpush.msra.mxu0 %v26
    %81 = vmatpush.msra.mxu0 %v25
    %82 = vmatpush.msra.mxu0 %v24
    %83 = vmatpush.msra.mxu0 %v23
    %84 = vmatpush.msra.mxu0 %v22
    %85 = vmatpush.msra.mxu0 %v21
    %86 = vmatpush.msra.mxu0 %v20
    %87 = vmatpush.msra.mxu0 %v19
    %88 = vmatpush.msra.mxu0 %v18
    %89 = vmatpush.msra.mxu0 %v17
    %90 = vmatpush.msra.mxu0 %v16
    %91 = vmatmul.f32.gmra.mxu0 %v67
    %v92 = vpop.f32.mrf.mxu0
    %v93 = vadd.f32 %v63, %v92
    %94 = vdwg.mxu0
    %95 = vmatpush.msra.mxu0 %v47
    %96 = vmatpush.msra.mxu0 %v46
    %97 = vmatpush.msra.mxu0 %v45
    %98 = vmatpush.msra.mxu0 %v44
    %99 = vmatpush.msra.mxu0 %v43
    %100 = vmatpush.msra.mxu0 %v42
    %101 = vmatpush.msra.mxu0 %v41
    %102 = vmatpush.msra.mxu0 %v40
    %103 = vmatpush.msra.mxu0 %v39
    %104 = vmatpush.msra.mxu0 %v38
    %105 = vmatpush.msra.mxu0 %v37
    %106 = vmatpush.msra.mxu0 %v36
    %107 = vmatpush.msra.mxu0 %v35
    %108 = vmatpush.msra.mxu0 %v34
    %109 = vmatpush.msra.mxu0 %v33
    %110 = vmatpush.msra.mxu0 %v32
    %111 = vmatmul.f32.gmra.mxu0 %v68
    %v112 = vpop.f32.mrf.mxu0
    %v113 = vadd.f32 %v93, %v112
    %114 = vdwg.mxu0
    %115 = vmatpush.msra.mxu0 0.0
    %116 = vmatpush.msra.mxu0 0.0
    %117 = vmatpush.msra.mxu0 0.0
    %118 = vmatpush.msra.mxu0 %v60
    %119 = vmatpush.msra.mxu0 %v59
    %120 = vmatpush.msra.mxu0 %v58
    %121 = vmatpush.msra.mxu0 %v57
    %122 = vmatpush.msra.mxu0 %v56
    %123 = vmatpush.msra.mxu0 %v55
    %124 = vmatpush.msra.mxu0 %v54
    %125 = vmatpush.msra.mxu0 %v53
    %126 = vmatpush.msra.mxu0 %v52
    %127 = vmatpush.msra.mxu0 %v51
    %128 = vmatpush.msra.mxu0 %v50
    %129 = vmatpush.msra.mxu0 %v49
    %130 = vmatpush.msra.mxu0 %v48
    %131 = vmatmul.f32.gmra.mxu0 %v73
    %v132 = vpop.f32.mrf.mxu0
    %v133 = vadd.f32 %v113, %v132
    %134 = vdwg.mxu0
    %vm135 = vcmask 25600
    %v136 = vsel %vm135, %v133, -inf
    %137 = vmax.xlane.f32.xlu0 %v136
    %v138 = vpop.xlane.xlu0 %137
    %v139 = vsub.f32 %v133, %v138
    %v140 = vmul.f32 %v139, 1.442695
    %v141 = vpow.pop %v140
    %v142 = vsel %vm135, %v141, 0.0
    %143 = vadd.xlane.f32.xlu0 %v142
    %v144 = vpop.xlane.xlu0 %143
    %v145 = vlog2.pop %v144
    %v146 = vmul.f32 %v145, 0.6931472
    %v147 = vsub.f32 %v139, %v146
    %148 = vst.msk [vmem:[#allocation2] sm:$0x3] %vm135, %v147
    // Predicated region
    $region14: #{dmsanet_forward.17} parent=1 // pred_check
      _
    $region15: #{dmsanet_forward.17} parent=1 // pred_check_branch
      %150 = sbr.rel (0) target = $region17
    $region16: #{dmsanet_forward.17} parent=1 // pred_region
      %152 = vsyncadd [#allocation3], 0
      %s154 = sshll.u32 [#allocation2], 4
      %s155 = int_to_ptr.vmem [resolvable:$true] %s154
      %s156 = sshll.u32 %s3, 4
      %s157 = int_to_ptr.hbm [resolvable:$true] %s156
      %159 = dma.vmem_to_hbm [thread:$0]  %s155, 32, %s157, [#allocation3]
    $region17: #{dmsanet_forward.17} parent=1 // pred_fallthru
      _
    // Predicated region
    $region18: #{dmsanet_forward.17} parent=1 // pred_check
      _
    $region19: #{dmsanet_forward.17} parent=1 // pred_check_branch
      %161 = sbr.rel (0) target = $region21
    $region20: #{dmsanet_forward.17} parent=1 // pred_region
      %163 = dma.done [#allocation3], 32
    $region21: #{dmsanet_forward.17} parent=1 // pred_fallthru
      _
    %164 = vsyncpa [#allocation3], 1

</llo_original>
